<compile_context>
chip_gen: v5e
topology: v5e:2x2
jax: 0.10.0
libtpu: 0.0.40
codegen_flags: <defaults>
</compile_context>

<pallas_src>
import math
from functools import partial

import jax
import jax.numpy as jnp
from jax.experimental import pallas as pl
from jax.experimental.pallas import tpu as pltpu  # noqa: F401  (TPU backend)


# ----------------------------- model config ---------------------------------
VOCAB = 64        # vocabulary size
D_MODEL = 32      # hidden size
D_FF = 64         # FFN inner size
SEQ_LEN = 16      # encoder (question/context) length  == SEGMENT_LENGTH
ANS_LEN = 9       # raw answer length (decoder sees ANS_LEN-1 = 8 tokens)
NUM_ANS = 4       # number of multiple-choice candidates
BATCH = 2
NEG_INF = -1e30


# ----------------------------- in-kernel helpers ----------------------------
def _layernorm(x, eps=1e-5):
    mu = jnp.mean(x, axis=-1, keepdims=True)
    var = jnp.mean((x - mu) ** 2, axis=-1, keepdims=True)
    return (x - mu) * jax.lax.rsqrt(var + eps)


def _mm(x, w):
    # flat 2-D matmul, bf16 operands, f32 accumulation on the MXU
    return jnp.dot(x.astype(jnp.bfloat16), w, preferred_element_type=jnp.float32)


def _attention(q, k, v, bias=None):
    # q: [b, Tq, D], k/v: [b, Tk, D]  (f32 in, bf16 MXU operands, f32 out)
    scale = 1.0 / math.sqrt(q.shape[-1])
    s = jnp.einsum('bqd,bkd->bqk', q.astype(jnp.bfloat16), k.astype(jnp.bfloat16),
                   preferred_element_type=jnp.float32) * scale
    if bias is not None:
        s = s + bias
    m = jnp.max(s, axis=-1, keepdims=True)
    p = jnp.exp(s - m)
    denom = jnp.sum(p, axis=-1, keepdims=True)
    p = p * pl.reciprocal(denom, approx=True)
    return jnp.einsum('bqk,bkd->bqd', p.astype(jnp.bfloat16), v.astype(jnp.bfloat16),
                      preferred_element_type=jnp.float32)


# ------------------------------ fused kernel ---------------------------------
def mc_fused_kernel(enc_ids_ref, dec_ids_ref, labels_ref,
                    tok_emb_ref, pos_enc_ref, pos_dec_ref,
                    enc_wqkv_ref, enc_wo_ref, enc_w1_ref, enc_w2_ref,
                    dec_wqkv_ref, dec_wo_ref,
                    crs_wq_ref, crs_wkv_ref, crs_wo_ref,
                    dec_w1_ref, dec_w2_ref, lm_ref,
                    loss_ref):
    B, S = enc_ids_ref.shape
    NB, T = dec_ids_ref.shape           # NB = NUM_ANS * B (candidates folded)
    V, D = tok_emb_ref.shape
    NA = NB // B
    NE = B * S                          # encoder rows
    ND = NB * T                         # decoder rows

    tok_emb = tok_emb_ref[...]          # bf16 [V, D]

    # ---------------- fused token embedding (encoder + decoder) -------------
    # One-hot gather via a single MXU matmul for both streams at once.
    enc_ids = enc_ids_ref[...]                                       # [B, S]
    dec_ids = dec_ids_ref[...]                                       # [NB, T]
    oh_e = (enc_ids[:, :, None] ==
            jax.lax.broadcasted_iota(jnp.int32, (B, S, V), 2)
            ).astype(jnp.bfloat16).reshape(NE, V)
    oh_d = (dec_ids[:, :, None] ==
            jax.lax.broadcasted_iota(jnp.int32, (NB, T, V), 2)
            ).astype(jnp.bfloat16).reshape(ND, V)
    oh = jnp.concatenate([oh_e, oh_d], axis=0)                       # [NE+ND, V]
    emb = jnp.dot(oh, tok_emb, preferred_element_type=jnp.float32)   # [NE+ND, D]

    pe = pos_enc_ref[...]                                            # [S, D]
    pd = pos_dec_ref[...]                                            # [T, D]
    pos = jnp.concatenate([pe] * B + [pd] * NB, axis=0)              # [NE+ND, D]
    x_all = emb + pos

    x = x_all[:NE]                                                   # [B*S, D]
    xd = x_all[NE:]                                                  # [NB*T, D]

    # ----------------------------- encoder ----------------------------------
    # attention_mask = ones in the reference model -> full (unmasked) attention
    # TODO(synk): Longformer sliding-window + global attention
    # (global_attention_mask path) is not reproduced; full attention is used,
    # which is equivalent at these sequence lengths.
    qkv = _mm(x, enc_wqkv_ref[...])                                  # [B*S, 3D]
    q = qkv[:, :D].reshape(B, S, D)
    k = qkv[:, D:2 * D].reshape(B, S, D)
    v = qkv[:, 2 * D:].reshape(B, S, D)
    a = _attention(q, k, v).reshape(NE, D)
    x = _layernorm(x + _mm(a, enc_wo_ref[...]))
    h = jnp.maximum(_mm(x, enc_w1_ref[...]), 0.0)
    x = _layernorm(x + _mm(h, enc_w2_ref[...]))
    enc2d = x                                                        # [B*S, D]

    # -------------------- decoder (all candidates at once) ------------------
    labels = labels_ref[...]                                         # [NB, T]

    # causal self-attention
    qkv = _mm(xd, dec_wqkv_ref[...])                                 # [NB*T, 3D]
    q = qkv[:, :D].reshape(NB, T, D)
    k = qkv[:, D:2 * D].reshape(NB, T, D)
    v = qkv[:, 2 * D:].reshape(NB, T, D)
    row = jax.lax.broadcasted_iota(jnp.int32, (1, T, T), 1)
    col = jax.lax.broadcasted_iota(jnp.int32, (1, T, T), 2)
    causal_bias = jnp.where(col <= row, 0.0, NEG_INF).astype(jnp.float32)
    a = _attention(q, k, v, bias=causal_bias).reshape(ND, D)
    xd = _layernorm(xd + _mm(a, dec_wo_ref[...]))

    # cross-attention over encoder states (encoder batch replicated per cand.)
    q = _mm(xd, crs_wq_ref[...]).reshape(NB, T, D)
    kv = _mm(enc2d, crs_wkv_ref[...])                                # [B*S, 2D]
    k = kv[:, :D].reshape(B, S, D)
    v = kv[:, D:].reshape(B, S, D)
    k = jnp.concatenate([k] * NA, axis=0)                            # [NB, S, D]
    v = jnp.concatenate([v] * NA, axis=0)
    a = _attention(q, k, v).reshape(ND, D)
    xd = _layernorm(xd + _mm(a, crs_wo_ref[...]))

    # FFN
    h = jnp.maximum(_mm(xd, dec_w1_ref[...]), 0.0)
    xd = _layernorm(xd + _mm(h, dec_w2_ref[...]))

    # LM head + teacher-forced cross-entropy
    logits = _mm(xd, lm_ref[...]).reshape(NB, T, V)                  # [NB, T, V]
    lmax = jnp.max(logits, axis=-1, keepdims=True)
    lse = jnp.log(jnp.sum(jnp.exp(logits - lmax), axis=-1, keepdims=True)) + lmax
    logp = logits - lse
    onehot_l = (labels[:, :, None] ==
                jax.lax.broadcasted_iota(jnp.int32, (NB, T, V), 2))
    nll = -jnp.sum(jnp.where(onehot_l, logp, 0.0), axis=-1)          # [NB, T]

    # mean over tokens then over batch == global mean (equal lengths)
    cand = nll.reshape(NA, B, T)                                     # [NA, B, T]
    losses = jnp.mean(jnp.mean(cand, axis=-1), axis=-1)              # [NA]
    loss_ref[...] = losses.reshape(1, NA)


# ----------------------------- MCModel forward -------------------------------
def init_params(key):
    # q/k/v (and cross k/v) weights stored pre-fused for single-matmul use.
    names_shapes = {
        'tok_emb': (VOCAB, D_MODEL),
        'pos_emb': (max(SEQ_LEN, ANS_LEN), D_MODEL),
        'enc_wqkv': (D_MODEL, 3 * D_MODEL), 'enc_wo': (D_MODEL, D_MODEL),
        'enc_w1': (D_MODEL, D_FF), 'enc_w2': (D_FF, D_MODEL),
        'dec_wqkv': (D_MODEL, 3 * D_MODEL), 'dec_wo': (D_MODEL, D_MODEL),
        'crs_wq': (D_MODEL, D_MODEL), 'crs_wkv': (D_MODEL, 2 * D_MODEL),
        'crs_wo': (D_MODEL, D_MODEL),
        'dec_w1': (D_MODEL, D_FF), 'dec_w2': (D_FF, D_MODEL),
        'lm_head': (D_MODEL, VOCAB),
    }
    keys = jax.random.split(key, len(names_shapes))
    return {n: (0.02 * jax.random.normal(k, s, jnp.float32))
            for (n, s), k in zip(names_shapes.items(), keys)}


@partial(jax.jit, static_argnames=('training',))
def mc_model_forward(input_ids, global_attention_mask, answer_ids, label_ids,
                     params, training=False):
    """Mirrors MCModel.forward.

    input_ids:  [B, S] int32
    global_attention_mask: [B, S] int32 (accepted; see TODO in kernel)
    answer_ids: [NUM_ANS, B, ANS_LEN] int32
    label_ids:  scalar int32 (index of the correct answer)
    """
    del global_attention_mask  # attention_mask = ones; global attention TODO above
    NA, B, AL = answer_ids.shape
    S = input_ids.shape[1]
    T = AL - 1

    # teacher forcing: decoder sees answer[:-1], predicts answer[1:]
    ans_flat = answer_ids.reshape(NA * B, AL)
    dec_ids = ans_flat[:, :T]
    labels = ans_flat[:, 1:]

    bf = lambda w: w.astype(jnp.bfloat16)

    losses = pl.pallas_call(
        mc_fused_kernel,
        out_shape=jax.ShapeDtypeStruct((1, NA), jnp.float32),
    )(input_ids, dec_ids, labels,
      bf(params['tok_emb']), params['pos_emb'][:S], params['pos_emb'][:T],
      bf(params['enc_wqkv']), bf(params['enc_wo']),
      bf(params['enc_w1']), bf(params['enc_w2']),
      bf(params['dec_wqkv']), bf(params['dec_wo']),
      bf(params['crs_wq']), bf(params['crs_wkv']), bf(params['crs_wo']),
      bf(params['dec_w1']), bf(params['dec_w2']), bf(params['lm_head']))[0]

    if training:
        # training branch: loss of the correct candidate only
        return losses[label_ids]
    pred_index = jnp.argmin(losses)
    return jnp.where(pred_index == label_ids, 1, 0)


# ----------------------------------- main ------------------------------------
if __name__ == "__main__":
    key = jax.random.PRNGKey(0)
    k_param, k_inp, k_ans = jax.random.split(key, 3)

    params = init_params(k_param)

    input_ids = jax.random.randint(k_inp, (BATCH, SEQ_LEN), 0, VOCAB, jnp.int32)
    answer_ids = jax.random.randint(k_ans, (NUM_ANS, BATCH, ANS_LEN), 0, VOCAB,
                                    jnp.int32)
    label_ids = jnp.int32(1)
    global_attention_mask = jnp.zeros((BATCH, SEQ_LEN), jnp.int32).at[:, 0].set(1)

    # eval path (returns 0/1 correctness indicator, like the PyTorch module)
    acc = mc_model_forward(input_ids, global_attention_mask, answer_ids,
                           label_ids, params, training=False)
    # training path (returns loss of the labeled candidate)
    loss = mc_model_forward(input_ids, global_attention_mask, answer_ids,
                            label_ids, params, training=True)

    jax.block_until_ready((acc, loss))
    print("KERNEL_OK")
</pallas_src>

<mosaic_0001>
module attributes {stable_mosaic.version = 11 : i64} {
  func.func @mc_fused_kernel(%arg0: memref<2x16xi32, #tpu.memory_space<vmem>>, %arg1: memref<8x8xi32, #tpu.memory_space<vmem>>, %arg2: memref<8x8xi32, #tpu.memory_space<vmem>>, %arg3: memref<64x32xbf16, #tpu.memory_space<vmem>>, %arg4: memref<16x32xf32, #tpu.memory_space<vmem>>, %arg5: memref<8x32xf32, #tpu.memory_space<vmem>>, %arg6: memref<32x96xbf16, #tpu.memory_space<vmem>>, %arg7: memref<32x32xbf16, #tpu.memory_space<vmem>>, %arg8: memref<32x64xbf16, #tpu.memory_space<vmem>>, %arg9: memref<64x32xbf16, #tpu.memory_space<vmem>>, %arg10: memref<32x96xbf16, #tpu.memory_space<vmem>>, %arg11: memref<32x32xbf16, #tpu.memory_space<vmem>>, %arg12: memref<32x32xbf16, #tpu.memory_space<vmem>>, %arg13: memref<32x64xbf16, #tpu.memory_space<vmem>>, %arg14: memref<32x32xbf16, #tpu.memory_space<vmem>>, %arg15: memref<32x64xbf16, #tpu.memory_space<vmem>>, %arg16: memref<64x32xbf16, #tpu.memory_space<vmem>>, %arg17: memref<32x64xbf16, #tpu.memory_space<vmem>>, %arg18: memref<1x4xf32, #tpu.memory_space<vmem>>) attributes {dimension_semantics = [], scalar_prefetch = 0 : i64, scratch_operands = 0 : i64, tpu.core_type = #tpu.core_type<tc>} {
    %c0 = arith.constant 0 : index
    %c0_0 = arith.constant 0 : index
    %0 = vector.load %arg3[%c0, %c0_0] : memref<64x32xbf16, #tpu.memory_space<vmem>>, vector<64x32xbf16>
    %c0_1 = arith.constant 0 : index
    %c0_2 = arith.constant 0 : index
    %1 = vector.load %arg0[%c0_1, %c0_2] : memref<2x16xi32, #tpu.memory_space<vmem>>, vector<2x16xi32>
    %c0_3 = arith.constant 0 : index
    %c0_4 = arith.constant 0 : index
    %2 = vector.load %arg1[%c0_3, %c0_4] : memref<8x8xi32, #tpu.memory_space<vmem>>, vector<8x8xi32>
    %3 = vector.shape_cast %1 : vector<2x16xi32> to vector<2x16x1xi32>
    %4 = tpu.iota {dimensions = array<i32: 2>} : vector<2x16x64xi32>
    %5 = vector.broadcast %3 : vector<2x16x1xi32> to vector<2x16x64xi32>
    %6 = arith.cmpi eq, %5, %4 : vector<2x16x64xi32>
    %7 = arith.extui %6 : vector<2x16x64xi1> to vector<2x16x64xi32>
    %8 = arith.sitofp %7 : vector<2x16x64xi32> to vector<2x16x64xf32>
    %9 = arith.truncf %8 : vector<2x16x64xf32> to vector<2x16x64xbf16>
    %10 = vector.shape_cast %9 : vector<2x16x64xbf16> to vector<32x64xbf16>
    %11 = vector.shape_cast %2 : vector<8x8xi32> to vector<8x8x1xi32>
    %12 = tpu.iota {dimensions = array<i32: 2>} : vector<8x8x64xi32>
    %13 = vector.broadcast %11 : vector<8x8x1xi32> to vector<8x8x64xi32>
    %14 = arith.cmpi eq, %13, %12 : vector<8x8x64xi32>
    %15 = arith.extui %14 : vector<8x8x64xi1> to vector<8x8x64xi32>
    %16 = arith.sitofp %15 : vector<8x8x64xi32> to vector<8x8x64xf32>
    %17 = arith.truncf %16 : vector<8x8x64xf32> to vector<8x8x64xbf16>
    %18 = vector.shape_cast %17 : vector<8x8x64xbf16> to vector<64x64xbf16>
    %19 = tpu.concatenate %10, %18 in 0 : vector<32x64xbf16>, vector<64x64xbf16> -> vector<96x64xbf16>
    %cst = arith.constant dense<0.000000e+00> : vector<96x32xf32>
    %20 = tpu.matmul %19, %0, %cst {dimension_numbers = #tpu.dot_dimension_numbers<[1], [0], [0], [1], [0, 0, 1, 1], [], []>} : vector<96x64xbf16>, vector<64x32xbf16>, vector<96x32xf32> -> vector<96x32xf32>
    %c0_5 = arith.constant 0 : index
    %c0_6 = arith.constant 0 : index
    %21 = vector.load %arg4[%c0_5, %c0_6] : memref<16x32xf32, #tpu.memory_space<vmem>>, vector<16x32xf32>
    %c0_7 = arith.constant 0 : index
    %c0_8 = arith.constant 0 : index
    %22 = vector.load %arg5[%c0_7, %c0_8] : memref<8x32xf32, #tpu.memory_space<vmem>>, vector<8x32xf32>
    %23 = tpu.concatenate %21, %21, %22, %22, %22, %22, %22, %22, %22, %22 in 0 : vector<16x32xf32>, vector<16x32xf32>, vector<8x32xf32>, vector<8x32xf32>, vector<8x32xf32>, vector<8x32xf32>, vector<8x32xf32>, vector<8x32xf32>, vector<8x32xf32>, vector<8x32xf32> -> vector<96x32xf32>
    %24 = arith.addf %20, %23 : vector<96x32xf32>
    %25 = vector.extract_strided_slice %24 {offsets = [0, 0], sizes = [32, 32], strides = [1, 1]} : vector<96x32xf32> to vector<32x32xf32>
    %26 = vector.extract_strided_slice %24 {offsets = [32, 0], sizes = [64, 32], strides = [1, 1]} : vector<96x32xf32> to vector<64x32xf32>
    %c0_9 = arith.constant 0 : index
    %c0_10 = arith.constant 0 : index
    %27 = vector.load %arg6[%c0_9, %c0_10] : memref<32x96xbf16, #tpu.memory_space<vmem>>, vector<32x96xbf16>
    %28 = arith.truncf %25 : vector<32x32xf32> to vector<32x32xbf16>
    %cst_11 = arith.constant dense<0.000000e+00> : vector<32x96xf32>
    %29 = tpu.matmul %28, %27, %cst_11 {dimension_numbers = #tpu.dot_dimension_numbers<[1], [0], [0], [1], [0, 0, 1, 1], [], []>} : vector<32x32xbf16>, vector<32x96xbf16>, vector<32x96xf32> -> vector<32x96xf32>
    %30 = vector.extract_strided_slice %29 {offsets = [0, 0], sizes = [32, 32], strides = [1, 1]} : vector<32x96xf32> to vector<32x32xf32>
    %31 = vector.shape_cast %30 : vector<32x32xf32> to vector<2x16x32xf32>
    %32 = vector.extract_strided_slice %29 {offsets = [0, 32], sizes = [32, 32], strides = [1, 1]} : vector<32x96xf32> to vector<32x32xf32>
    %33 = vector.shape_cast %32 : vector<32x32xf32> to vector<2x16x32xf32>
    %34 = vector.extract_strided_slice %29 {offsets = [0, 64], sizes = [32, 32], strides = [1, 1]} : vector<32x96xf32> to vector<32x32xf32>
    %35 = vector.shape_cast %34 : vector<32x32xf32> to vector<2x16x32xf32>
    %36 = arith.truncf %31 : vector<2x16x32xf32> to vector<2x16x32xbf16>
    %37 = arith.truncf %33 : vector<2x16x32xf32> to vector<2x16x32xbf16>
    "tpu.trace_start"() <{level = 10 : i32, message = "bqd,bkd->bqk"}> : () -> ()
    %cst_12 = arith.constant dense<0.000000e+00> : vector<2x16x16xf32>
    %38 = tpu.matmul %36, %37, %cst_12 {dimension_numbers = #tpu.dot_dimension_numbers<[2], [2], [1], [1], [0, 0, 0, 1, 1, 1], [0], [0]>} : vector<2x16x32xbf16>, vector<2x16x32xbf16>, vector<2x16x16xf32> -> vector<2x16x16xf32>
    "tpu.trace_stop"() : () -> ()
    %cst_13 = arith.constant 0.176776692 : f32
    %39 = vector.broadcast %cst_13 : f32 to vector<2x16x16xf32>
    %40 = arith.mulf %38, %39 : vector<2x16x16xf32>
    %cst_14 = arith.constant dense<0xFF800000> : vector<2x16xf32>
    %41 = vector.multi_reduction <maximumf>, %40, %cst_14 [2] : vector<2x16x16xf32> to vector<2x16xf32>
    %42 = vector.shape_cast %41 : vector<2x16xf32> to vector<2x16x1xf32>
    %43 = vector.broadcast %42 : vector<2x16x1xf32> to vector<2x16x16xf32>
    %44 = arith.subf %40, %43 : vector<2x16x16xf32>
    %45 = math.exp %44 : vector<2x16x16xf32>
    %cst_15 = arith.constant dense<0.000000e+00> : vector<2x16xf32>
    %46 = vector.multi_reduction <add>, %45, %cst_15 [2] : vector<2x16x16xf32> to vector<2x16xf32>
    %47 = vector.shape_cast %46 : vector<2x16xf32> to vector<2x16x1xf32>
    %48 = tpu.reciprocal %47 {approx = true} : vector<2x16x1xf32> -> vector<2x16x1xf32>
    %49 = vector.broadcast %48 : vector<2x16x1xf32> to vector<2x16x16xf32>
    %50 = arith.mulf %45, %49 : vector<2x16x16xf32>
    %51 = arith.truncf %50 : vector<2x16x16xf32> to vector<2x16x16xbf16>
    %52 = arith.truncf %35 : vector<2x16x32xf32> to vector<2x16x32xbf16>
    "tpu.trace_start"() <{level = 10 : i32, message = "bqk,bkd->bqd"}> : () -> ()
    %cst_16 = arith.constant dense<0.000000e+00> : vector<2x16x32xf32>
    %53 = tpu.matmul %51, %52, %cst_16 {dimension_numbers = #tpu.dot_dimension_numbers<[2], [1], [1], [2], [0, 0, 0, 1, 1, 2], [0], [0]>} : vector<2x16x16xbf16>, vector<2x16x32xbf16>, vector<2x16x32xf32> -> vector<2x16x32xf32>
    "tpu.trace_stop"() : () -> ()
    %54 = vector.shape_cast %53 : vector<2x16x32xf32> to vector<32x32xf32>
    %c0_17 = arith.constant 0 : index
    %c0_18 = arith.constant 0 : index
    %55 = vector.load %arg7[%c0_17, %c0_18] : memref<32x32xbf16, #tpu.memory_space<vmem>>, vector<32x32xbf16>
    %56 = arith.truncf %54 : vector<32x32xf32> to vector<32x32xbf16>
    %cst_19 = arith.constant dense<0.000000e+00> : vector<32x32xf32>
    %57 = tpu.matmul %56, %55, %cst_19 {dimension_numbers = #tpu.dot_dimension_numbers<[1], [0], [0], [1], [0, 0, 1, 1], [], []>} : vector<32x32xbf16>, vector<32x32xbf16>, vector<32x32xf32> -> vector<32x32xf32>
    %58 = arith.addf %25, %57 : vector<32x32xf32>
    %cst_20 = arith.constant dense<0.000000e+00> : vector<32xf32>
    %59 = vector.multi_reduction <add>, %58, %cst_20 [1] : vector<32x32xf32> to vector<32xf32>
    %60 = vector.shape_cast %59 : vector<32xf32> to vector<32x1xf32>
    %cst_21 = arith.constant 3.200000e+01 : f32
    %61 = vector.broadcast %cst_21 : f32 to vector<32x1xf32>
    %62 = arith.divf %60, %61 : vector<32x1xf32>
    %63 = vector.broadcast %62 : vector<32x1xf32> to vector<32x32xf32>
    %64 = arith.subf %58, %63 : vector<32x32xf32>
    %65 = arith.mulf %64, %64 : vector<32x32xf32>
    %cst_22 = arith.constant dense<0.000000e+00> : vector<32xf32>
    %66 = vector.multi_reduction <add>, %65, %cst_22 [1] : vector<32x32xf32> to vector<32xf32>
    %67 = vector.shape_cast %66 : vector<32xf32> to vector<32x1xf32>
    %cst_23 = arith.constant 3.200000e+01 : f32
    %68 = vector.broadcast %cst_23 : f32 to vector<32x1xf32>
    %69 = arith.divf %67, %68 : vector<32x1xf32>
    %70 = vector.broadcast %62 : vector<32x1xf32> to vector<32x32xf32>
    %71 = arith.subf %58, %70 : vector<32x32xf32>
    %cst_24 = arith.constant 9.99999974E-6 : f32
    %72 = vector.broadcast %cst_24 : f32 to vector<32x1xf32>
    %73 = arith.addf %69, %72 : vector<32x1xf32>
    %74 = math.rsqrt %73 : vector<32x1xf32>
    %75 = vector.broadcast %74 : vector<32x1xf32> to vector<32x32xf32>
    %76 = arith.mulf %71, %75 : vector<32x32xf32>
    %c0_25 = arith.constant 0 : index
    %c0_26 = arith.constant 0 : index
    %77 = vector.load %arg8[%c0_25, %c0_26] : memref<32x64xbf16, #tpu.memory_space<vmem>>, vector<32x64xbf16>
    %78 = arith.truncf %76 : vector<32x32xf32> to vector<32x32xbf16>
    %cst_27 = arith.constant dense<0.000000e+00> : vector<32x64xf32>
    %79 = tpu.matmul %78, %77, %cst_27 {dimension_numbers = #tpu.dot_dimension_numbers<[1], [0], [0], [1], [0, 0, 1, 1], [], []>} : vector<32x32xbf16>, vector<32x64xbf16>, vector<32x64xf32> -> vector<32x64xf32>
    %cst_28 = arith.constant 0.000000e+00 : f32
    %80 = vector.broadcast %cst_28 : f32 to vector<32x64xf32>
    %81 = arith.maximumf %79, %80 : vector<32x64xf32>
    %c0_29 = arith.constant 0 : index
    %c0_30 = arith.constant 0 : index
    %82 = vector.load %arg9[%c0_29, %c0_30] : memref<64x32xbf16, #tpu.memory_space<vmem>>, vector<64x32xbf16>
    %83 = arith.truncf %81 : vector<32x64xf32> to vector<32x64xbf16>
    %cst_31 = arith.constant dense<0.000000e+00> : vector<32x32xf32>
    %84 = tpu.matmul %83, %82, %cst_31 {dimension_numbers = #tpu.dot_dimension_numbers<[1], [0], [0], [1], [0, 0, 1, 1], [], []>} : vector<32x64xbf16>, vector<64x32xbf16>, vector<32x32xf32> -> vector<32x32xf32>
    %85 = arith.addf %76, %84 : vector<32x32xf32>
    %cst_32 = arith.constant dense<0.000000e+00> : vector<32xf32>
    %86 = vector.multi_reduction <add>, %85, %cst_32 [1] : vector<32x32xf32> to vector<32xf32>
    %87 = vector.shape_cast %86 : vector<32xf32> to vector<32x1xf32>
    %cst_33 = arith.constant 3.200000e+01 : f32
    %88 = vector.broadcast %cst_33 : f32 to vector<32x1xf32>
    %89 = arith.divf %87, %88 : vector<32x1xf32>
    %90 = vector.broadcast %89 : vector<32x1xf32> to vector<32x32xf32>
    %91 = arith.subf %85, %90 : vector<32x32xf32>
    %92 = arith.mulf %91, %91 : vector<32x32xf32>
    %cst_34 = arith.constant dense<0.000000e+00> : vector<32xf32>
    %93 = vector.multi_reduction <add>, %92, %cst_34 [1] : vector<32x32xf32> to vector<32xf32>
    %94 = vector.shape_cast %93 : vector<32xf32> to vector<32x1xf32>
    %cst_35 = arith.constant 3.200000e+01 : f32
    %95 = vector.broadcast %cst_35 : f32 to vector<32x1xf32>
    %96 = arith.divf %94, %95 : vector<32x1xf32>
    %97 = vector.broadcast %89 : vector<32x1xf32> to vector<32x32xf32>
    %98 = arith.subf %85, %97 : vector<32x32xf32>
    %cst_36 = arith.constant 9.99999974E-6 : f32
    %99 = vector.broadcast %cst_36 : f32 to vector<32x1xf32>
    %100 = arith.addf %96, %99 : vector<32x1xf32>
    %101 = math.rsqrt %100 : vector<32x1xf32>
    %102 = vector.broadcast %101 : vector<32x1xf32> to vector<32x32xf32>
    %103 = arith.mulf %98, %102 : vector<32x32xf32>
    %c0_37 = arith.constant 0 : index
    %c0_38 = arith.constant 0 : index
    %104 = vector.load %arg2[%c0_37, %c0_38] : memref<8x8xi32, #tpu.memory_space<vmem>>, vector<8x8xi32>
    %c0_39 = arith.constant 0 : index
    %c0_40 = arith.constant 0 : index
    %105 = vector.load %arg10[%c0_39, %c0_40] : memref<32x96xbf16, #tpu.memory_space<vmem>>, vector<32x96xbf16>
    %106 = arith.truncf %26 : vector<64x32xf32> to vector<64x32xbf16>
    %cst_41 = arith.constant dense<0.000000e+00> : vector<64x96xf32>
    %107 = tpu.matmul %106, %105, %cst_41 {dimension_numbers = #tpu.dot_dimension_numbers<[1], [0], [0], [1], [0, 0, 1, 1], [], []>} : vector<64x32xbf16>, vector<32x96xbf16>, vector<64x96xf32> -> vector<64x96xf32>
    %108 = vector.extract_strided_slice %107 {offsets = [0, 0], sizes = [64, 32], strides = [1, 1]} : vector<64x96xf32> to vector<64x32xf32>
    %109 = vector.shape_cast %108 : vector<64x32xf32> to vector<8x8x32xf32>
    %110 = vector.extract_strided_slice %107 {offsets = [0, 32], sizes = [64, 32], strides = [1, 1]} : vector<64x96xf32> to vector<64x32xf32>
    %111 = vector.shape_cast %110 : vector<64x32xf32> to vector<8x8x32xf32>
    %112 = vector.extract_strided_slice %107 {offsets = [0, 64], sizes = [64, 32], strides = [1, 1]} : vector<64x96xf32> to vector<64x32xf32>
    %113 = vector.shape_cast %112 : vector<64x32xf32> to vector<8x8x32xf32>
    %114 = tpu.iota {dimensions = array<i32: 1>} : vector<1x8x8xi32>
    %115 = tpu.iota {dimensions = array<i32: 2>} : vector<1x8x8xi32>
    %116 = arith.cmpi sle, %115, %114 : vector<1x8x8xi32>
    %cst_42 = arith.constant 0.000000e+00 : f32
    %cst_43 = arith.constant -1.000000e+30 : f32
    %117 = vector.broadcast %cst_42 : f32 to vector<1x8x8xf32>
    %118 = vector.broadcast %cst_43 : f32 to vector<1x8x8xf32>
    %119 = arith.select %116, %117, %118 : vector<1x8x8xi1>, vector<1x8x8xf32>
    %120 = arith.truncf %109 : vector<8x8x32xf32> to vector<8x8x32xbf16>
    %121 = arith.truncf %111 : vector<8x8x32xf32> to vector<8x8x32xbf16>
    "tpu.trace_start"() <{level = 10 : i32, message = "bqd,bkd->bqk"}> : () -> ()
    %cst_44 = arith.constant dense<0.000000e+00> : vector<8x8x8xf32>
    %122 = tpu.matmul %120, %121, %cst_44 {dimension_numbers = #tpu.dot_dimension_numbers<[2], [2], [1], [1], [0, 0, 0, 1, 1, 1], [0], [0]>} : vector<8x8x32xbf16>, vector<8x8x32xbf16>, vector<8x8x8xf32> -> vector<8x8x8xf32>
    "tpu.trace_stop"() : () -> ()
    %cst_45 = arith.constant 0.176776692 : f32
    %123 = vector.broadcast %cst_45 : f32 to vector<8x8x8xf32>
    %124 = arith.mulf %122, %123 : vector<8x8x8xf32>
    %125 = vector.broadcast %119 : vector<1x8x8xf32> to vector<8x8x8xf32>
    %126 = arith.addf %124, %125 : vector<8x8x8xf32>
    %cst_46 = arith.constant dense<0xFF800000> : vector<8x8xf32>
    %127 = vector.multi_reduction <maximumf>, %126, %cst_46 [2] : vector<8x8x8xf32> to vector<8x8xf32>
    %128 = vector.shape_cast %127 : vector<8x8xf32> to vector<8x8x1xf32>
    %129 = vector.broadcast %128 : vector<8x8x1xf32> to vector<8x8x8xf32>
    %130 = arith.subf %126, %129 : vector<8x8x8xf32>
    %131 = math.exp %130 : vector<8x8x8xf32>
    %cst_47 = arith.constant dense<0.000000e+00> : vector<8x8xf32>
    %132 = vector.multi_reduction <add>, %131, %cst_47 [2] : vector<8x8x8xf32> to vector<8x8xf32>
    %133 = vector.shape_cast %132 : vector<8x8xf32> to vector<8x8x1xf32>
    %134 = tpu.reciprocal %133 {approx = true} : vector<8x8x1xf32> -> vector<8x8x1xf32>
    %135 = vector.broadcast %134 : vector<8x8x1xf32> to vector<8x8x8xf32>
    %136 = arith.mulf %131, %135 : vector<8x8x8xf32>
    %137 = arith.truncf %136 : vector<8x8x8xf32> to vector<8x8x8xbf16>
    %138 = arith.truncf %113 : vector<8x8x32xf32> to vector<8x8x32xbf16>
    "tpu.trace_start"() <{level = 10 : i32, message = "bqk,bkd->bqd"}> : () -> ()
    %cst_48 = arith.constant dense<0.000000e+00> : vector<8x8x32xf32>
    %139 = tpu.matmul %137, %138, %cst_48 {dimension_numbers = #tpu.dot_dimension_numbers<[2], [1], [1], [2], [0, 0, 0, 1, 1, 2], [0], [0]>} : vector<8x8x8xbf16>, vector<8x8x32xbf16>, vector<8x8x32xf32> -> vector<8x8x32xf32>
    "tpu.trace_stop"() : () -> ()
    %140 = vector.shape_cast %139 : vector<8x8x32xf32> to vector<64x32xf32>
    %c0_49 = arith.constant 0 : index
    %c0_50 = arith.constant 0 : index
    %141 = vector.load %arg11[%c0_49, %c0_50] : memref<32x32xbf16, #tpu.memory_space<vmem>>, vector<32x32xbf16>
    %142 = arith.truncf %140 : vector<64x32xf32> to vector<64x32xbf16>
    %cst_51 = arith.constant dense<0.000000e+00> : vector<64x32xf32>
    %143 = tpu.matmul %142, %141, %cst_51 {dimension_numbers = #tpu.dot_dimension_numbers<[1], [0], [0], [1], [0, 0, 1, 1], [], []>} : vector<64x32xbf16>, vector<32x32xbf16>, vector<64x32xf32> -> vector<64x32xf32>
    %144 = arith.addf %26, %143 : vector<64x32xf32>
    %cst_52 = arith.constant dense<0.000000e+00> : vector<64xf32>
    %145 = vector.multi_reduction <add>, %144, %cst_52 [1] : vector<64x32xf32> to vector<64xf32>
    %146 = vector.shape_cast %145 : vector<64xf32> to vector<64x1xf32>
    %cst_53 = arith.constant 3.200000e+01 : f32
    %147 = vector.broadcast %cst_53 : f32 to vector<64x1xf32>
    %148 = arith.divf %146, %147 : vector<64x1xf32>
    %149 = vector.broadcast %148 : vector<64x1xf32> to vector<64x32xf32>
    %150 = arith.subf %144, %149 : vector<64x32xf32>
    %151 = arith.mulf %150, %150 : vector<64x32xf32>
    %cst_54 = arith.constant dense<0.000000e+00> : vector<64xf32>
    %152 = vector.multi_reduction <add>, %151, %cst_54 [1] : vector<64x32xf32> to vector<64xf32>
    %153 = vector.shape_cast %152 : vector<64xf32> to vector<64x1xf32>
    %cst_55 = arith.constant 3.200000e+01 : f32
    %154 = vector.broadcast %cst_55 : f32 to vector<64x1xf32>
    %155 = arith.divf %153, %154 : vector<64x1xf32>
    %156 = vector.broadcast %148 : vector<64x1xf32> to vector<64x32xf32>
    %157 = arith.subf %144, %156 : vector<64x32xf32>
    %cst_56 = arith.constant 9.99999974E-6 : f32
    %158 = vector.broadcast %cst_56 : f32 to vector<64x1xf32>
    %159 = arith.addf %155, %158 : vector<64x1xf32>
    %160 = math.rsqrt %159 : vector<64x1xf32>
    %161 = vector.broadcast %160 : vector<64x1xf32> to vector<64x32xf32>
    %162 = arith.mulf %157, %161 : vector<64x32xf32>
    %c0_57 = arith.constant 0 : index
    %c0_58 = arith.constant 0 : index
    %163 = vector.load %arg12[%c0_57, %c0_58] : memref<32x32xbf16, #tpu.memory_space<vmem>>, vector<32x32xbf16>
    %164 = arith.truncf %162 : vector<64x32xf32> to vector<64x32xbf16>
    %cst_59 = arith.constant dense<0.000000e+00> : vector<64x32xf32>
    %165 = tpu.matmul %164, %163, %cst_59 {dimension_numbers = #tpu.dot_dimension_numbers<[1], [0], [0], [1], [0, 0, 1, 1], [], []>} : vector<64x32xbf16>, vector<32x32xbf16>, vector<64x32xf32> -> vector<64x32xf32>
    %166 = vector.shape_cast %165 : vector<64x32xf32> to vector<8x8x32xf32>
    %c0_60 = arith.constant 0 : index
    %c0_61 = arith.constant 0 : index
    %167 = vector.load %arg13[%c0_60, %c0_61] : memref<32x64xbf16, #tpu.memory_space<vmem>>, vector<32x64xbf16>
    %168 = arith.truncf %103 : vector<32x32xf32> to vector<32x32xbf16>
    %cst_62 = arith.constant dense<0.000000e+00> : vector<32x64xf32>
    %169 = tpu.matmul %168, %167, %cst_62 {dimension_numbers = #tpu.dot_dimension_numbers<[1], [0], [0], [1], [0, 0, 1, 1], [], []>} : vector<32x32xbf16>, vector<32x64xbf16>, vector<32x64xf32> -> vector<32x64xf32>
    %170 = vector.extract_strided_slice %169 {offsets = [0, 0], sizes = [32, 32], strides = [1, 1]} : vector<32x64xf32> to vector<32x32xf32>
    %171 = vector.shape_cast %170 : vector<32x32xf32> to vector<2x16x32xf32>
    %172 = vector.extract_strided_slice %169 {offsets = [0, 32], sizes = [32, 32], strides = [1, 1]} : vector<32x64xf32> to vector<32x32xf32>
    %173 = vector.shape_cast %172 : vector<32x32xf32> to vector<2x16x32xf32>
    %174 = tpu.concatenate %171, %171, %171, %171 in 0 : vector<2x16x32xf32>, vector<2x16x32xf32>, vector<2x16x32xf32>, vector<2x16x32xf32> -> vector<8x16x32xf32>
    %175 = tpu.concatenate %173, %173, %173, %173 in 0 : vector<2x16x32xf32>, vector<2x16x32xf32>, vector<2x16x32xf32>, vector<2x16x32xf32> -> vector<8x16x32xf32>
    %176 = arith.truncf %166 : vector<8x8x32xf32> to vector<8x8x32xbf16>
    %177 = arith.truncf %174 : vector<8x16x32xf32> to vector<8x16x32xbf16>
    "tpu.trace_start"() <{level = 10 : i32, message = "bqd,bkd->bqk"}> : () -> ()
    %cst_63 = arith.constant dense<0.000000e+00> : vector<8x8x16xf32>
    %178 = tpu.matmul %176, %177, %cst_63 {dimension_numbers = #tpu.dot_dimension_numbers<[2], [2], [1], [1], [0, 0, 0, 1, 1, 1], [0], [0]>} : vector<8x8x32xbf16>, vector<8x16x32xbf16>, vector<8x8x16xf32> -> vector<8x8x16xf32>
    "tpu.trace_stop"() : () -> ()
    %cst_64 = arith.constant 0.176776692 : f32
    %179 = vector.broadcast %cst_64 : f32 to vector<8x8x16xf32>
    %180 = arith.mulf %178, %179 : vector<8x8x16xf32>
    %cst_65 = arith.constant dense<0xFF800000> : vector<8x8xf32>
    %181 = vector.multi_reduction <maximumf>, %180, %cst_65 [2] : vector<8x8x16xf32> to vector<8x8xf32>
    %182 = vector.shape_cast %181 : vector<8x8xf32> to vector<8x8x1xf32>
    %183 = vector.broadcast %182 : vector<8x8x1xf32> to vector<8x8x16xf32>
    %184 = arith.subf %180, %183 : vector<8x8x16xf32>
    %185 = math.exp %184 : vector<8x8x16xf32>
    %cst_66 = arith.constant dense<0.000000e+00> : vector<8x8xf32>
    %186 = vector.multi_reduction <add>, %185, %cst_66 [2] : vector<8x8x16xf32> to vector<8x8xf32>
    %187 = vector.shape_cast %186 : vector<8x8xf32> to vector<8x8x1xf32>
    %188 = tpu.reciprocal %187 {approx = true} : vector<8x8x1xf32> -> vector<8x8x1xf32>
    %189 = vector.broadcast %188 : vector<8x8x1xf32> to vector<8x8x16xf32>
    %190 = arith.mulf %185, %189 : vector<8x8x16xf32>
    %191 = arith.truncf %190 : vector<8x8x16xf32> to vector<8x8x16xbf16>
    %192 = arith.truncf %175 : vector<8x16x32xf32> to vector<8x16x32xbf16>
    "tpu.trace_start"() <{level = 10 : i32, message = "bqk,bkd->bqd"}> : () -> ()
    %cst_67 = arith.constant dense<0.000000e+00> : vector<8x8x32xf32>
    %193 = tpu.matmul %191, %192, %cst_67 {dimension_numbers = #tpu.dot_dimension_numbers<[2], [1], [1], [2], [0, 0, 0, 1, 1, 2], [0], [0]>} : vector<8x8x16xbf16>, vector<8x16x32xbf16>, vector<8x8x32xf32> -> vector<8x8x32xf32>
    "tpu.trace_stop"() : () -> ()
    %194 = vector.shape_cast %193 : vector<8x8x32xf32> to vector<64x32xf32>
    %c0_68 = arith.constant 0 : index
    %c0_69 = arith.constant 0 : index
    %195 = vector.load %arg14[%c0_68, %c0_69] : memref<32x32xbf16, #tpu.memory_space<vmem>>, vector<32x32xbf16>
    %196 = arith.truncf %194 : vector<64x32xf32> to vector<64x32xbf16>
    %cst_70 = arith.constant dense<0.000000e+00> : vector<64x32xf32>
    %197 = tpu.matmul %196, %195, %cst_70 {dimension_numbers = #tpu.dot_dimension_numbers<[1], [0], [0], [1], [0, 0, 1, 1], [], []>} : vector<64x32xbf16>, vector<32x32xbf16>, vector<64x32xf32> -> vector<64x32xf32>
    %198 = arith.addf %162, %197 : vector<64x32xf32>
    %cst_71 = arith.constant dense<0.000000e+00> : vector<64xf32>
    %199 = vector.multi_reduction <add>, %198, %cst_71 [1] : vector<64x32xf32> to vector<64xf32>
    %200 = vector.shape_cast %199 : vector<64xf32> to vector<64x1xf32>
    %cst_72 = arith.constant 3.200000e+01 : f32
    %201 = vector.broadcast %cst_72 : f32 to vector<64x1xf32>
    %202 = arith.divf %200, %201 : vector<64x1xf32>
    %203 = vector.broadcast %202 : vector<64x1xf32> to vector<64x32xf32>
    %204 = arith.subf %198, %203 : vector<64x32xf32>
    %205 = arith.mulf %204, %204 : vector<64x32xf32>
    %cst_73 = arith.constant dense<0.000000e+00> : vector<64xf32>
    %206 = vector.multi_reduction <add>, %205, %cst_73 [1] : vector<64x32xf32> to vector<64xf32>
    %207 = vector.shape_cast %206 : vector<64xf32> to vector<64x1xf32>
    %cst_74 = arith.constant 3.200000e+01 : f32
    %208 = vector.broadcast %cst_74 : f32 to vector<64x1xf32>
    %209 = arith.divf %207, %208 : vector<64x1xf32>
    %210 = vector.broadcast %202 : vector<64x1xf32> to vector<64x32xf32>
    %211 = arith.subf %198, %210 : vector<64x32xf32>
    %cst_75 = arith.constant 9.99999974E-6 : f32
    %212 = vector.broadcast %cst_75 : f32 to vector<64x1xf32>
    %213 = arith.addf %209, %212 : vector<64x1xf32>
    %214 = math.rsqrt %213 : vector<64x1xf32>
    %215 = vector.broadcast %214 : vector<64x1xf32> to vector<64x32xf32>
    %216 = arith.mulf %211, %215 : vector<64x32xf32>
    %c0_76 = arith.constant 0 : index
    %c0_77 = arith.constant 0 : index
    %217 = vector.load %arg15[%c0_76, %c0_77] : memref<32x64xbf16, #tpu.memory_space<vmem>>, vector<32x64xbf16>
    %218 = arith.truncf %216 : vector<64x32xf32> to vector<64x32xbf16>
    %cst_78 = arith.constant dense<0.000000e+00> : vector<64x64xf32>
    %219 = tpu.matmul %218, %217, %cst_78 {dimension_numbers = #tpu.dot_dimension_numbers<[1], [0], [0], [1], [0, 0, 1, 1], [], []>} : vector<64x32xbf16>, vector<32x64xbf16>, vector<64x64xf32> -> vector<64x64xf32>
    %cst_79 = arith.constant 0.000000e+00 : f32
    %220 = vector.broadcast %cst_79 : f32 to vector<64x64xf32>
    %221 = arith.maximumf %219, %220 : vector<64x64xf32>
    %c0_80 = arith.constant 0 : index
    %c0_81 = arith.constant 0 : index
    %222 = vector.load %arg16[%c0_80, %c0_81] : memref<64x32xbf16, #tpu.memory_space<vmem>>, vector<64x32xbf16>
    %223 = arith.truncf %221 : vector<64x64xf32> to vector<64x64xbf16>
    %cst_82 = arith.constant dense<0.000000e+00> : vector<64x32xf32>
    %224 = tpu.matmul %223, %222, %cst_82 {dimension_numbers = #tpu.dot_dimension_numbers<[1], [0], [0], [1], [0, 0, 1, 1], [], []>} : vector<64x64xbf16>, vector<64x32xbf16>, vector<64x32xf32> -> vector<64x32xf32>
    %225 = arith.addf %216, %224 : vector<64x32xf32>
    %cst_83 = arith.constant dense<0.000000e+00> : vector<64xf32>
    %226 = vector.multi_reduction <add>, %225, %cst_83 [1] : vector<64x32xf32> to vector<64xf32>
    %227 = vector.shape_cast %226 : vector<64xf32> to vector<64x1xf32>
    %cst_84 = arith.constant 3.200000e+01 : f32
    %228 = vector.broadcast %cst_84 : f32 to vector<64x1xf32>
    %229 = arith.divf %227, %228 : vector<64x1xf32>
    %230 = vector.broadcast %229 : vector<64x1xf32> to vector<64x32xf32>
    %231 = arith.subf %225, %230 : vector<64x32xf32>
    %232 = arith.mulf %231, %231 : vector<64x32xf32>
    %cst_85 = arith.constant dense<0.000000e+00> : vector<64xf32>
    %233 = vector.multi_reduction <add>, %232, %cst_85 [1] : vector<64x32xf32> to vector<64xf32>
    %234 = vector.shape_cast %233 : vector<64xf32> to vector<64x1xf32>
    %cst_86 = arith.constant 3.200000e+01 : f32
    %235 = vector.broadcast %cst_86 : f32 to vector<64x1xf32>
    %236 = arith.divf %234, %235 : vector<64x1xf32>
    %237 = vector.broadcast %229 : vector<64x1xf32> to vector<64x32xf32>
    %238 = arith.subf %225, %237 : vector<64x32xf32>
    %cst_87 = arith.constant 9.99999974E-6 : f32
    %239 = vector.broadcast %cst_87 : f32 to vector<64x1xf32>
    %240 = arith.addf %236, %239 : vector<64x1xf32>
    %241 = math.rsqrt %240 : vector<64x1xf32>
    %242 = vector.broadcast %241 : vector<64x1xf32> to vector<64x32xf32>
    %243 = arith.mulf %238, %242 : vector<64x32xf32>
    %c0_88 = arith.constant 0 : index
    %c0_89 = arith.constant 0 : index
    %244 = vector.load %arg17[%c0_88, %c0_89] : memref<32x64xbf16, #tpu.memory_space<vmem>>, vector<32x64xbf16>
    %245 = arith.truncf %243 : vector<64x32xf32> to vector<64x32xbf16>
    %cst_90 = arith.constant dense<0.000000e+00> : vector<64x64xf32>
    %246 = tpu.matmul %245, %244, %cst_90 {dimension_numbers = #tpu.dot_dimension_numbers<[1], [0], [0], [1], [0, 0, 1, 1], [], []>} : vector<64x32xbf16>, vector<32x64xbf16>, vector<64x64xf32> -> vector<64x64xf32>
    %247 = vector.shape_cast %246 : vector<64x64xf32> to vector<8x8x64xf32>
    %cst_91 = arith.constant dense<0xFF800000> : vector<8x8xf32>
    %248 = vector.multi_reduction <maximumf>, %247, %cst_91 [2] : vector<8x8x64xf32> to vector<8x8xf32>
    %249 = vector.shape_cast %248 : vector<8x8xf32> to vector<8x8x1xf32>
    %250 = vector.broadcast %249 : vector<8x8x1xf32> to vector<8x8x64xf32>
    %251 = arith.subf %247, %250 : vector<8x8x64xf32>
    %252 = math.exp %251 : vector<8x8x64xf32>
    %cst_92 = arith.constant dense<0.000000e+00> : vector<8x8xf32>
    %253 = vector.multi_reduction <add>, %252, %cst_92 [2] : vector<8x8x64xf32> to vector<8x8xf32>
    %254 = vector.shape_cast %253 : vector<8x8xf32> to vector<8x8x1xf32>
    %255 = math.log %254 : vector<8x8x1xf32>
    %256 = arith.addf %255, %249 : vector<8x8x1xf32>
    %257 = vector.broadcast %256 : vector<8x8x1xf32> to vector<8x8x64xf32>
    %258 = arith.subf %247, %257 : vector<8x8x64xf32>
    %259 = vector.shape_cast %104 : vector<8x8xi32> to vector<8x8x1xi32>
    %260 = tpu.iota {dimensions = array<i32: 2>} : vector<8x8x64xi32>
    %261 = vector.broadcast %259 : vector<8x8x1xi32> to vector<8x8x64xi32>
    %262 = arith.cmpi eq, %261, %260 : vector<8x8x64xi32>
    %cst_93 = arith.constant 0.000000e+00 : f32
    %263 = vector.broadcast %cst_93 : f32 to vector<8x8x64xf32>
    %264 = arith.select %262, %258, %263 : vector<8x8x64xi1>, vector<8x8x64xf32>
    %cst_94 = arith.constant dense<0.000000e+00> : vector<8x8xf32>
    %265 = vector.multi_reduction <add>, %264, %cst_94 [2] : vector<8x8x64xf32> to vector<8x8xf32>
    %cst_95 = arith.constant 0.000000e+00 : f32
    %266 = vector.broadcast %cst_95 : f32 to vector<8x8xf32>
    %267 = arith.subf %266, %265 : vector<8x8xf32>
    %268 = vector.shape_cast %267 : vector<8x8xf32> to vector<4x2x8xf32>
    %cst_96 = arith.constant dense<0.000000e+00> : vector<4x2xf32>
    %269 = vector.multi_reduction <add>, %268, %cst_96 [2] : vector<4x2x8xf32> to vector<4x2xf32>
    %cst_97 = arith.constant 8.000000e+00 : f32
    %270 = vector.broadcast %cst_97 : f32 to vector<4x2xf32>
    %271 = arith.divf %269, %270 : vector<4x2xf32>
    %cst_98 = arith.constant dense<0.000000e+00> : vector<4xf32>
    %272 = vector.multi_reduction <add>, %271, %cst_98 [1] : vector<4x2xf32> to vector<4xf32>
    %cst_99 = arith.constant 2.000000e+00 : f32
    %273 = vector.broadcast %cst_99 : f32 to vector<4xf32>
    %274 = arith.divf %272, %273 : vector<4xf32>
    %275 = vector.shape_cast %274 : vector<4xf32> to vector<1x4xf32>
    %c0_100 = arith.constant 0 : index
    %c0_101 = arith.constant 0 : index
    %276 = vector.load %arg18[%c0_100, %c0_101] : memref<1x4xf32, #tpu.memory_space<vmem>>, vector<1x4xf32>
    tpu.vector_store %arg18[%c0_100, %c0_101], %275 {strides = array<i32>} : memref<1x4xf32, #tpu.memory_space<vmem>>, vector<1x4xf32>,
    return
  }
}

</mosaic_0001>

<llo_original>
// kernel: mc_model_forward.1
$region0: #{mc_model_forward.1}
  #allocation0 [shape = 'u32[]', space=smem, size = 0x4, offset = 0x4, fixed_abs, tag = 'smem constant byte address 0x4 - core index']
  #allocation1 [shape = 'u32[72,128]{1,0:T(1,128)}', space=vmem, size = 0x9000, scoped, tag = 'internal scratch']
  %s0 = inlined_call_operand.vmem [shape: s32[2,16], index: 0, kind: input, shape index: {}]
  %s1 = inlined_call_operand.vmem [shape: s32[8,8], index: 1, kind: input, shape index: {}]
  %s2 = inlined_call_operand.vmem [shape: s32[8,8], index: 2, kind: input, shape index: {}]
  %s3 = inlined_call_operand.vmem [shape: bf16[64,32], index: 3, kind: input, shape index: {}]
  %s4 = inlined_call_operand.vmem [shape: f32[16,32], index: 4, kind: input, shape index: {}]
  %s5 = inlined_call_operand.vmem [shape: f32[8,32], index: 5, kind: input, shape index: {}]
  %s6 = inlined_call_operand.vmem [shape: bf16[32,96], index: 6, kind: input, shape index: {}]
  %s7 = inlined_call_operand.vmem [shape: bf16[32,32], index: 7, kind: input, shape index: {}]
  %s8 = inlined_call_operand.vmem [shape: bf16[32,64], index: 8, kind: input, shape index: {}]
  %s9 = inlined_call_operand.vmem [shape: bf16[64,32], index: 9, kind: input, shape index: {}]
  %s10 = inlined_call_operand.vmem [shape: bf16[32,96], index: 10, kind: input, shape index: {}]
  %s11 = inlined_call_operand.vmem [shape: bf16[32,32], index: 11, kind: input, shape index: {}]
  %s12 = inlined_call_operand.vmem [shape: bf16[32,32], index: 12, kind: input, shape index: {}]
  %s13 = inlined_call_operand.vmem [shape: bf16[32,64], index: 13, kind: input, shape index: {}]
  %s14 = inlined_call_operand.vmem [shape: bf16[32,32], index: 14, kind: input, shape index: {}]
  %s15 = inlined_call_operand.vmem [shape: bf16[32,64], index: 15, kind: input, shape index: {}]
  %s16 = inlined_call_operand.vmem [shape: bf16[64,32], index: 16, kind: input, shape index: {}]
  %s17 = inlined_call_operand.vmem [shape: bf16[32,64], index: 17, kind: input, shape index: {}]
  %s18 = inlined_call_operand.vmem [shape: f32[1,4], index: 18, kind: output, shape index: {}]
  %s19 = sld [smem:[#allocation0]]
  $region82: #{mc_model_forward.1} parent=0
    _
  %s21 = ssub.s32 1, %s19
  %s22 = scalar_select 0, %s21, %s19
  // Predicated region
  $region2: #{mc_model_forward.1} parent=0 // pred_check
    _
  $region3: #{mc_model_forward.1} parent=0 // pred_check_branch
    %24 = sbr.rel (0) target = $region5
  $region4: #{mc_model_forward.1} parent=0 // pred_region
    _
  $region5: #{mc_model_forward.1} parent=0 // pred_fallthru
    _
  // Predicated region
  $region6: #{mc_model_forward.1} parent=0 // pred_check
    _
  $region7: #{mc_model_forward.1} parent=0 // pred_check_branch
    %26 = sbr.rel (0) target = $region9
  $region8: #{mc_model_forward.1} parent=0 // pred_region
    _
  $region9: #{mc_model_forward.1} parent=0 // pred_fallthru
    _
  // Predicated region
  $region10: #{mc_model_forward.1} parent=0 // pred_check
    _
  $region11: #{mc_model_forward.1} parent=0 // pred_check_branch
    %28 = sbr.rel (0) target = $region13
  $region12: #{mc_model_forward.1} parent=0 // pred_region
    _
  $region13: #{mc_model_forward.1} parent=0 // pred_fallthru
    _
  // Predicated region
  $region14: #{mc_model_forward.1} parent=0 // pred_check
    _
  $region15: #{mc_model_forward.1} parent=0 // pred_check_branch
    %30 = sbr.rel (0) target = $region17
  $region16: #{mc_model_forward.1} parent=0 // pred_region
    _
  $region17: #{mc_model_forward.1} parent=0 // pred_fallthru
    _
  // Predicated region
  $region18: #{mc_model_forward.1} parent=0 // pred_check
    _
  $region19: #{mc_model_forward.1} parent=0 // pred_check_branch
    %32 = sbr.rel (0) target = $region21
  $region20: #{mc_model_forward.1} parent=0 // pred_region
    _
  $region21: #{mc_model_forward.1} parent=0 // pred_fallthru
    _
  // Predicated region
  $region22: #{mc_model_forward.1} parent=0 // pred_check
    _
  $region23: #{mc_model_forward.1} parent=0 // pred_check_branch
    %34 = sbr.rel (0) target = $region25
  $region24: #{mc_model_forward.1} parent=0 // pred_region
    _
  $region25: #{mc_model_forward.1} parent=0 // pred_fallthru
    _
  // Predicated region
  $region26: #{mc_model_forward.1} parent=0 // pred_check
    _
  $region27: #{mc_model_forward.1} parent=0 // pred_check_branch
    %36 = sbr.rel (0) target = $region29
  $region28: #{mc_model_forward.1} parent=0 // pred_region
    _
  $region29: #{mc_model_forward.1} parent=0 // pred_fallthru
    _
  // Predicated region
  $region30: #{mc_model_forward.1} parent=0 // pred_check
    _
  $region31: #{mc_model_forward.1} parent=0 // pred_check_branch
    %38 = sbr.rel (0) target = $region33
  $region32: #{mc_model_forward.1} parent=0 // pred_region
    _
  $region33: #{mc_model_forward.1} parent=0 // pred_fallthru
    _
  // Predicated region
  $region34: #{mc_model_forward.1} parent=0 // pred_check
    _
  $region35: #{mc_model_forward.1} parent=0 // pred_check_branch
    %40 = sbr.rel (0) target = $region37
  $region36: #{mc_model_forward.1} parent=0 // pred_region
    _
  $region37: #{mc_model_forward.1} parent=0 // pred_fallthru
    _
  // Predicated region
  $region38: #{mc_model_forward.1} parent=0 // pred_check
    _
  $region39: #{mc_model_forward.1} parent=0 // pred_check_branch
    %42 = sbr.rel (0) target = $region41
  $region40: #{mc_model_forward.1} parent=0 // pred_region
    _
  $region41: #{mc_model_forward.1} parent=0 // pred_fallthru
    _
  // Predicated region
  $region42: #{mc_model_forward.1} parent=0 // pred_check
    _
  $region43: #{mc_model_forward.1} parent=0 // pred_check_branch
    %44 = sbr.rel (0) target = $region45
  $region44: #{mc_model_forward.1} parent=0 // pred_region
    _
  $region45: #{mc_model_forward.1} parent=0 // pred_fallthru
    _
  // Predicated region
  $region46: #{mc_model_forward.1} parent=0 // pred_check
    _
  $region47: #{mc_model_forward.1} parent=0 // pred_check_branch
    %46 = sbr.rel (0) target = $region49
  $region48: #{mc_model_forward.1} parent=0 // pred_region
    _
  $region49: #{mc_model_forward.1} parent=0 // pred_fallthru
    _
  // Predicated region
  $region50: #{mc_model_forward.1} parent=0 // pred_check
    _
  $region51: #{mc_model_forward.1} parent=0 // pred_check_branch
    %48 = sbr.rel (0) target = $region53
  $region52: #{mc_model_forward.1} parent=0 // pred_region
    _
  $region53: #{mc_model_forward.1} parent=0 // pred_fallthru
    _
  // Predicated region
  $region54: #{mc_model_forward.1} parent=0 // pred_check
    _
  $region55: #{mc_model_forward.1} parent=0 // pred_check_branch
    %50 = sbr.rel (0) target = $region57
  $region56: #{mc_model_forward.1} parent=0 // pred_region
    _
  $region57: #{mc_model_forward.1} parent=0 // pred_fallthru
    _
  // Predicated region
  $region58: #{mc_model_forward.1} parent=0 // pred_check
    _
  $region59: #{mc_model_forward.1} parent=0 // pred_check_branch
    %52 = sbr.rel (0) target = $region61
  $region60: #{mc_model_forward.1} parent=0 // pred_region
    _
  $region61: #{mc_model_forward.1} parent=0 // pred_fallthru
    _
  // Predicated region
  $region62: #{mc_model_forward.1} parent=0 // pred_check
    _
  $region63: #{mc_model_forward.1} parent=0 // pred_check_branch
    %54 = sbr.rel (0) target = $region65
  $region64: #{mc_model_forward.1} parent=0 // pred_region
    _
  $region65: #{mc_model_forward.1} parent=0 // pred_fallthru
    _
  // Predicated region
  $region66: #{mc_model_forward.1} parent=0 // pred_check
    _
  $region67: #{mc_model_forward.1} parent=0 // pred_check_branch
    %56 = sbr.rel (0) target = $region69
  $region68: #{mc_model_forward.1} parent=0 // pred_region
    _
  $region69: #{mc_model_forward.1} parent=0 // pred_fallthru
    _
  // Predicated region
  $region70: #{mc_model_forward.1} parent=0 // pred_check
    _
  $region71: #{mc_model_forward.1} parent=0 // pred_check_branch
    %58 = sbr.rel (0) target = $region73
  $region72: #{mc_model_forward.1} parent=0 // pred_region
    _
  $region73: #{mc_model_forward.1} parent=0 // pred_fallthru
    _
  %v60 = vld [vmem:[%s3] sm:$0xf]
  %v61 = vld [vmem:[%s3 + $0x4] sm:$0xf]
  %v62 = vld [vmem:[%s3 + $0x8] sm:$0xf]
  %v63 = vld [vmem:[%s3 + $0xc] sm:$0xf]
  %v64 = vld [vmem:[%s3 + $0x10] sm:$0xf]
  %v65 = vld [vmem:[%s3 + $0x14] sm:$0xf]
  %v66 = vld [vmem:[%s3 + $0x18] sm:$0xf]
  %v67 = vld [vmem:[%s3 + $0x1c] sm:$0xf]
  %v68 = vld [vmem:[%s0] sm:$0x3]
  %v69 = vld [vmem:[%s1] sm:$0xff]
  %v70 = vperm.slane %v68, 0
  %v71 = vlaneseq
  %v72 = vshrl.u32 %v71, 7
  %74 = vset.pattern.permute.xlu0 %v72
  %75 = vperm.xlu0 %74, %v70
  %v76 = vpop.permute.xlu0 %75
  %v77 = vlaneseq
  %v78 = vshrl.u32 %v77, 7
  %v79 = vadd.s32 %v78, 8
  %80 = vset.pattern.permute.xlu0 %v79
  %81 = vperm.xlu0 %80, %v70
  %v82 = vpop.permute.xlu0 %81
  %v83 = vperm.slane %v68, 1
  %v84 = vlaneseq
  %v85 = vshrl.u32 %v84, 7
  %87 = vset.pattern.permute.xlu0 %v85
  %88 = vperm.xlu0 %87, %v83
  %v89 = vpop.permute.xlu0 %88
  %v90 = vlaneseq
  %v91 = vshrl.u32 %v90, 7
  %v92 = vadd.s32 %v91, 8
  %93 = vset.pattern.permute.xlu0 %v92
  %94 = vperm.xlu0 %93, %v83
  %v95 = vpop.permute.xlu0 %94
  %v96 = vlaneseq
  %v97 = vand.u32 %v96, 127
  %vm98 = vcmp.eq.s32.totalorder %v76, %v97
  %vm99 = vcmp.eq.s32.totalorder %v82, %v97
  %vm100 = vcmp.eq.s32.totalorder %v89, %v97
  %vm101 = vcmp.eq.s32.totalorder %v95, %v97
  %v102 = vsel %vm98, 1, 0
  %v103 = vsel %vm99, 1, 0
  %v104 = vsel %vm100, 1, 0
  %v105 = vsel %vm101, 1, 0
  %v106 = vcvt.s32.f32 %v102
  %v107 = vcvt.s32.f32 %v103
  %v108 = vcvt.s32.f32 %v104
  %v109 = vcvt.s32.f32 %v105
  %v110 = vpack.c.bf16 %v106, %v106
  %v111 = vpack.c.bf16 %v107, %v107
  %v112 = vpack.c.bf16 %v108, %v108
  %v113 = vpack.c.bf16 %v109, %v109
  %v114 = vperm.slane %v69, 0
  %v115 = vlaneseq
  %v116 = vshrl.u32 %v115, 7
  %118 = vset.pattern.permute.xlu0 %v116
  %119 = vperm.xlu0 %118, %v114
  %v120 = vpop.permute.xlu0 %119
  %v121 = vperm.slane %v69, 1
  %v122 = vlaneseq
  %v123 = vshrl.u32 %v122, 7
  %125 = vset.pattern.permute.xlu0 %v123
  %126 = vperm.xlu0 %125, %v121
  %v127 = vpop.permute.xlu0 %126
  %v128 = vperm.slane %v69, 2
  %v129 = vlaneseq
  %v130 = vshrl.u32 %v129, 7
  %132 = vset.pattern.permute.xlu0 %v130
  %133 = vperm.xlu0 %132, %v128
  %v134 = vpop.permute.xlu0 %133
  %v135 = vperm.slane %v69, 3
  %v136 = vlaneseq
  %v137 = vshrl.u32 %v136, 7
  %139 = vset.pattern.permute.xlu0 %v137
  %140 = vperm.xlu0 %139, %v135
  %v141 = vpop.permute.xlu0 %140
  %v142 = vperm.slane %v69, 4
  %v143 = vlaneseq
  %v144 = vshrl.u32 %v143, 7
  %146 = vset.pattern.permute.xlu0 %v144
  %147 = vperm.xlu0 %146, %v142
  %v148 = vpop.permute.xlu0 %147
  %v149 = vperm.slane %v69, 5
  %v150 = vlaneseq
  %v151 = vshrl.u32 %v150, 7
  %153 = vset.pattern.permute.xlu0 %v151
  %154 = vperm.xlu0 %153, %v149
  %v155 = vpop.permute.xlu0 %154
  %v156 = vperm.slane %v69, 6
  %v157 = vlaneseq
  %v158 = vshrl.u32 %v157, 7
  %160 = vset.pattern.permute.xlu0 %v158
  %161 = vperm.xlu0 %160, %v156
  %v162 = vpop.permute.xlu0 %161
  %v163 = vperm.slane %v69, 7
  %v164 = vlaneseq
  %v165 = vshrl.u32 %v164, 7
  %167 = vset.pattern.permute.xlu0 %v165
  %168 = vperm.xlu0 %167, %v163
  %v169 = vpop.permute.xlu0 %168
  %vm170 = vcmp.eq.s32.totalorder %v120, %v97
  %vm171 = vcmp.eq.s32.totalorder %v127, %v97
  %vm172 = vcmp.eq.s32.totalorder %v134, %v97
  %vm173 = vcmp.eq.s32.totalorder %v141, %v97
  %vm174 = vcmp.eq.s32.totalorder %v148, %v97
  %vm175 = vcmp.eq.s32.totalorder %v155, %v97
  %vm176 = vcmp.eq.s32.totalorder %v162, %v97
  %vm177 = vcmp.eq.s32.totalorder %v169, %v97
  %v178 = vsel %vm170, 1, 0
  %v179 = vsel %vm171, 1, 0
  %v180 = vsel %vm172, 1, 0
  %v181 = vsel %vm173, 1, 0
  %v182 = vsel %vm174, 1, 0
  %v183 = vsel %vm175, 1, 0
  %v184 = vsel %vm176, 1, 0
  %v185 = vsel %vm177, 1, 0
  %v186 = vcvt.s32.f32 %v178
  %v187 = vcvt.s32.f32 %v179
  %v188 = vcvt.s32.f32 %v180
  %v189 = vcvt.s32.f32 %v181
  %v190 = vcvt.s32.f32 %v182
  %v191 = vcvt.s32.f32 %v183
  %v192 = vcvt.s32.f32 %v184
  %v193 = vcvt.s32.f32 %v185
  %v194 = vpack.c.bf16 %v186, %v186
  %v195 = vpack.c.bf16 %v187, %v187
  %v196 = vpack.c.bf16 %v188, %v188
  %v197 = vpack.c.bf16 %v189, %v189
  %v198 = vpack.c.bf16 %v190, %v190
  %v199 = vpack.c.bf16 %v191, %v191
  %v200 = vpack.c.bf16 %v192, %v192
  %v201 = vpack.c.bf16 %v193, %v193
  %v206 = vunpack.c.l.b16 %v110
  %v207 = vunpack.c.l.b16 %v111
  %v208 = vunpack.c.l.b16 %v112
  %v209 = vunpack.c.l.b16 %v113
  %v210 = vpack.c.b16 %v207, %v206
  %v211 = vpack.c.b16 %v209, %v208
  %v220 = vunpack.c.l.b16 %v194
  %v221 = vunpack.c.l.b16 %v195
  %v222 = vunpack.c.l.b16 %v196
  %v223 = vunpack.c.l.b16 %v197
  %v224 = vunpack.c.l.b16 %v198
  %v225 = vunpack.c.l.b16 %v199
  %v226 = vunpack.c.l.b16 %v200
  %v227 = vunpack.c.l.b16 %v201
  %v228 = vpack.c.b16 %v221, %v220
  %v229 = vpack.c.b16 %v223, %v222
  %v230 = vpack.c.b16 %v225, %v224
  %v231 = vpack.c.b16 %v227, %v226
  %v232 = vld [vmem:[%s4] sm:$0xff]
  %v233 = vld [vmem:[%s4 + $0x8] sm:$0xff]
  %v234 = vld [vmem:[%s5] sm:$0xff]
  %v243 = vunpack.c.l.b16 %v60
  %v244 = vunpack.c.l.b16 %v61
  %v245 = vunpack.c.l.b16 %v62
  %v246 = vunpack.c.l.b16 %v63
  %v247 = vunpack.c.l.b16 %v64
  %v248 = vunpack.c.l.b16 %v65
  %v249 = vunpack.c.l.b16 %v66
  %v250 = vunpack.c.l.b16 %v67
  %v251 = vpack.c.b16 %v244, %v243
  %v252 = vpack.c.b16 %v246, %v245
  %v253 = vpack.c.b16 %v248, %v247
  %v254 = vpack.c.b16 %v250, %v249
  %vm259 = vcmask 523264
  %v261 = vsel %vm259, %v210, 0
  %v264 = vsel %vm259, %v211, 0
  %v267 = vsel %vm259, %v228, 0
  %v270 = vsel %vm259, %v229, 0
  %v273 = vsel %vm259, %v230, 0
  %v276 = vsel %vm259, %v231, 0
  %278 = vmatpush.bf16.msra.mxu0 0
  %279 = vmatpush.bf16.msra.mxu0 0
  %280 = vmatpush.bf16.msra.mxu0 0
  %281 = vmatpush.bf16.msra.mxu0 0
  %282 = vmatpush.bf16.msra.mxu0 %v254
  %283 = vmatpush.bf16.msra.mxu0 %v253
  %284 = vmatpush.bf16.msra.mxu0 %v252
  %285 = vmatpush.bf16.msra.mxu0 %v251
  %286 = vmatmul.bf16.gmra.mxu0 %v261
  %v287 = vpop.f32.mrf.mxu0
  %v288 = vadd.f32 %v232, %v287
  %v289 = vpop.f32.mrf.mxu0
  %v290 = vadd.f32 %v233, %v289
  %291 = vmatmul.bf16.gmra.mxu0 %v264
  %v292 = vpop.f32.mrf.mxu0
  %v293 = vadd.f32 %v232, %v292
  %v294 = vpop.f32.mrf.mxu0
  %v295 = vadd.f32 %v233, %v294
  %296 = vmatmul.bf16.gmra.mxu0 %v267
  %v297 = vpop.f32.mrf.mxu0
  %v298 = vadd.f32 %v234, %v297
  %v299 = vpop.f32.mrf.mxu0
  %v300 = vadd.f32 %v234, %v299
  %301 = vmatmul.bf16.gmra.mxu0 %v270
  %v302 = vpop.f32.mrf.mxu0
  %v303 = vadd.f32 %v234, %v302
  %v304 = vpop.f32.mrf.mxu0
  %v305 = vadd.f32 %v234, %v304
  %306 = vmatmul.bf16.gmra.mxu0 %v273
  %v307 = vpop.f32.mrf.mxu0
  %v308 = vadd.f32 %v234, %v307
  %v309 = vpop.f32.mrf.mxu0
  %v310 = vadd.f32 %v234, %v309
  %311 = vmatmul.bf16.gmra.mxu0 %v276
  %v312 = vpop.f32.mrf.mxu0
  %v313 = vadd.f32 %v234, %v312
  %v314 = vpop.f32.mrf.mxu0
  %v315 = vadd.f32 %v234, %v314
  %316 = vdwg.mxu0
  %v317 = vld [vmem:[%s6] sm:$0xf]
  %v318 = vld [vmem:[%s6 + $0x4] sm:$0xf]
  %v319 = vld [vmem:[%s6 + $0x8] sm:$0xf]
  %v320 = vld [vmem:[%s6 + $0xc] sm:$0xf]
  %v321 = vpack.c.bf16 %v290, %v288
  %v322 = vpack.c.bf16 %v295, %v293
  %v327 = vunpack.c.l.b16 %v317
  %v328 = vunpack.c.l.b16 %v318
  %v329 = vunpack.c.l.b16 %v319
  %v330 = vunpack.c.l.b16 %v320
  %v331 = vpack.c.b16 %v328, %v327
  %v332 = vpack.c.b16 %v330, %v329
  %vm335 = vcmask 261120
  %v337 = vsel %vm335, %v321, 0
  %v340 = vsel %vm335, %v322, 0
  %342 = vmatpush.bf16.msra.mxu0 0
  %343 = vmatpush.bf16.msra.mxu0 0
  %344 = vmatpush.bf16.msra.mxu0 0
  %345 = vmatpush.bf16.msra.mxu0 0
  %346 = vmatpush.bf16.msra.mxu0 0
  %347 = vmatpush.bf16.msra.mxu0 0
  %348 = vmatpush.bf16.msra.mxu0 %v332
  %349 = vmatpush.bf16.msra.mxu0 %v331
  %350 = vmatmul.bf16.gmra.mxu0 %v337
  %v351 = vpop.f32.mrf.mxu0
  %v352 = vadd.f32 0.0, %v351
  %v353 = vpop.f32.mrf.mxu0
  %v354 = vadd.f32 0.0, %v353
  %355 = vmatmul.bf16.gmra.mxu0 %v340
  %v356 = vpop.f32.mrf.mxu0
  %v357 = vadd.f32 0.0, %v356
  %v358 = vpop.f32.mrf.mxu0
  %v359 = vadd.f32 0.0, %v358
  %360 = vdwg.mxu0
  %v361 = vpack.c.bf16 %v352, %v352
  %v362 = vpack.c.bf16 %v354, %v354
  %v363 = vpack.c.bf16 %v357, %v357
  %v364 = vpack.c.bf16 %v359, %v359
  %v367 = vunpack.c.l.b16 %v361
  %v368 = vunpack.c.l.b16 %v362
  %v369 = vpack.c.b16 %v368, %v367
  %370 = vrot.lane.b32.xlu0 %v369, 96
  %v371 = vpop.permute.xlu0 %370
  %v373 = vsel %vm335, %v369, 0
  %v376 = vsel %vm335, %v371, 0
  %378 = vmatpush.bf16.xpose.msra.mxu0 0
  %379 = vmatpush.bf16.xpose.msra.mxu0 0
  %380 = vmatpush.bf16.xpose.msra.mxu0 0
  %381 = vmatpush.bf16.xpose.msra.mxu0 0
  %382 = vmatpush.bf16.xpose.msra.mxu0 0
  %383 = vmatpush.bf16.xpose.msra.mxu0 0
  %384 = vmatpush.bf16.xpose.msra.mxu0 0
  %385 = vmatpush.bf16.xpose.msra.mxu0 %v376
  %386 = vmatmul.bf16.gmra.mxu0 %v373
  %v387 = vpop.f32.mrf.mxu0
  %v388 = vadd.f32 0.0, %v387
  %v389 = vpop.f32.mrf.mxu0
  %v390 = vadd.f32 0.0, %v389
  %391 = vdwg.mxu0
  %v394 = vunpack.c.l.b16 %v363
  %v395 = vunpack.c.l.b16 %v364
  %v396 = vpack.c.b16 %v395, %v394
  %397 = vrot.lane.b32.xlu0 %v396, 96
  %v398 = vpop.permute.xlu0 %397
  %v400 = vsel %vm335, %v396, 0
  %v403 = vsel %vm335, %v398, 0
  %405 = vmatpush.bf16.xpose.msra.mxu0 0
  %406 = vmatpush.bf16.xpose.msra.mxu0 0
  %407 = vmatpush.bf16.xpose.msra.mxu0 0
  %408 = vmatpush.bf16.xpose.msra.mxu0 0
  %409 = vmatpush.bf16.xpose.msra.mxu0 0
  %410 = vmatpush.bf16.xpose.msra.mxu0 0
  %411 = vmatpush.bf16.xpose.msra.mxu0 0
  %412 = vmatpush.bf16.xpose.msra.mxu0 %v403
  %413 = vmatmul.bf16.gmra.mxu0 %v400
  %v414 = vpop.f32.mrf.mxu0
  %v415 = vadd.f32 0.0, %v414
  %v416 = vpop.f32.mrf.mxu0
  %v417 = vadd.f32 0.0, %v416
  %418 = vdwg.mxu0
  %v419 = vmul.f32 %v388, 0.17677669
  %v420 = vmul.f32 %v390, 0.17677669
  %v421 = vmul.f32 %v415, 0.17677669
  %v422 = vmul.f32 %v417, 0.17677669
  %vm423 = vcmask 130048
  %v424 = vsel %vm423, %v419, -inf
  %425 = vmax.xlane.f32.xlu0 %v424
  %v426 = vpop.xlane.xlu0 %425
  %v427 = vsel %vm423, %v420, -inf
  %428 = vmax.xlane.f32.xlu0 %v427
  %v429 = vpop.xlane.xlu0 %428
  %v430 = vsel %vm423, %v421, -inf
  %431 = vmax.xlane.f32.xlu0 %v430
  %v432 = vpop.xlane.xlu0 %431
  %v433 = vsel %vm423, %v422, -inf
  %434 = vmax.xlane.f32.xlu0 %v433
  %v435 = vpop.xlane.xlu0 %434
  %v436 = vsub.f32 %v419, %v426
  %v437 = vsub.f32 %v420, %v429
  %v438 = vsub.f32 %v421, %v432
  %v439 = vsub.f32 %v422, %v435
  %v440 = vmul.f32 %v436, 1.442695
  %v441 = vpow.pop %v440
  %v442 = vmul.f32 %v437, 1.442695
  %v443 = vpow.pop %v442
  %v444 = vmul.f32 %v438, 1.442695
  %v445 = vpow.pop %v444
  %v446 = vmul.f32 %v439, 1.442695
  %v447 = vpow.pop %v446
  %v448 = vsel %vm423, %v441, 0.0
  %449 = vadd.xlane.f32.xlu0 %v448
  %v450 = vpop.xlane.xlu0 %449
  %v451 = vsel %vm423, %v443, 0.0
  %452 = vadd.xlane.f32.xlu0 %v451
  %v453 = vpop.xlane.xlu0 %452
  %v454 = vsel %vm423, %v445, 0.0
  %455 = vadd.xlane.f32.xlu0 %v454
  %v456 = vpop.xlane.xlu0 %455
  %v457 = vsel %vm423, %v447, 0.0
  %458 = vadd.xlane.f32.xlu0 %v457
  %v459 = vpop.xlane.xlu0 %458
  %v460 = vrcp.pop %v450
  %v461 = vrcp.pop %v453
  %v462 = vrcp.pop %v456
  %v463 = vrcp.pop %v459
  %v464 = vmul.f32 %v441, %v460
  %v465 = vmul.f32 %v443, %v461
  %v466 = vmul.f32 %v445, %v462
  %v467 = vmul.f32 %v447, %v463
  %v468 = vpack.c.bf16 %v464, %v464
  %v469 = vpack.c.bf16 %v465, %v465
  %v470 = vpack.c.bf16 %v466, %v466
  %v471 = vpack.c.bf16 %v467, %v467
  %v474 = vunpack.c.l.b16 %v468
  %v475 = vunpack.c.l.b16 %v469
  %v476 = vpack.c.b16 %v475, %v474
  %477 = vrot.lane.b32.xlu0 %v369, 64
  %v478 = vpop.permute.xlu0 %477
  %v481 = vsel %vm423, %v476, 0
  %483 = vmatpush.bf16.msra.mxu0 0
  %484 = vmatpush.bf16.msra.mxu0 0
  %485 = vmatpush.bf16.msra.mxu0 0
  %486 = vmatpush.bf16.msra.mxu0 0
  %487 = vmatpush.bf16.msra.mxu0 0
  %488 = vmatpush.bf16.msra.mxu0 0
  %489 = vmatpush.bf16.msra.mxu0 0
  %490 = vmatpush.bf16.msra.mxu0 %v478
  %491 = vmatmul.bf16.gmra.mxu0 %v481
  %v492 = vpop.f32.mrf.mxu0
  %v493 = vadd.f32 0.0, %v492
  %v494 = vpop.f32.mrf.mxu0
  %v495 = vadd.f32 0.0, %v494
  %496 = vdwg.mxu0
  %v499 = vunpack.c.l.b16 %v470
  %v500 = vunpack.c.l.b16 %v471
  %v501 = vpack.c.b16 %v500, %v499
  %502 = vrot.lane.b32.xlu0 %v396, 64
  %v503 = vpop.permute.xlu0 %502
  %v506 = vsel %vm423, %v501, 0
  %508 = vmatpush.bf16.msra.mxu0 0
  %509 = vmatpush.bf16.msra.mxu0 0
  %510 = vmatpush.bf16.msra.mxu0 0
  %511 = vmatpush.bf16.msra.mxu0 0
  %512 = vmatpush.bf16.msra.mxu0 0
  %513 = vmatpush.bf16.msra.mxu0 0
  %514 = vmatpush.bf16.msra.mxu0 0
  %515 = vmatpush.bf16.msra.mxu0 %v503
  %516 = vmatmul.bf16.gmra.mxu0 %v506
  %v517 = vpop.f32.mrf.mxu0
  %v518 = vadd.f32 0.0, %v517
  %v519 = vpop.f32.mrf.mxu0
  %v520 = vadd.f32 0.0, %v519
  %521 = vdwg.mxu0
  %v522 = vld [vmem:[%s7] sm:$0xf]
  %v523 = vld [vmem:[%s7 + $0x4] sm:$0xf]
  %v524 = vld [vmem:[%s7 + $0x8] sm:$0xf]
  %v525 = vld [vmem:[%s7 + $0xc] sm:$0xf]
  %v526 = vpack.c.bf16 %v495, %v493
  %v527 = vpack.c.bf16 %v520, %v518
  %v532 = vunpack.c.l.b16 %v522
  %v533 = vunpack.c.l.b16 %v523
  %v534 = vunpack.c.l.b16 %v524
  %v535 = vunpack.c.l.b16 %v525
  %v536 = vpack.c.b16 %v533, %v532
  %v537 = vpack.c.b16 %v535, %v534
  %v541 = vsel %vm335, %v526, 0
  %v544 = vsel %vm335, %v527, 0
  %546 = vmatpush.bf16.msra.mxu0 0
  %547 = vmatpush.bf16.msra.mxu0 0
  %548 = vmatpush.bf16.msra.mxu0 0
  %549 = vmatpush.bf16.msra.mxu0 0
  %550 = vmatpush.bf16.msra.mxu0 0
  %551 = vmatpush.bf16.msra.mxu0 0
  %552 = vmatpush.bf16.msra.mxu0 %v537
  %553 = vmatpush.bf16.msra.mxu0 %v536
  %554 = vmatmul.bf16.gmra.mxu0 %v541
  %v555 = vpop.f32.mrf.mxu0
  %v556 = vadd.f32 0.0, %v555
  %v557 = vpop.f32.mrf.mxu0
  %v558 = vadd.f32 0.0, %v557
  %559 = vmatmul.bf16.gmra.mxu0 %v544
  %v560 = vpop.f32.mrf.mxu0
  %v561 = vadd.f32 0.0, %v560
  %v562 = vpop.f32.mrf.mxu0
  %v563 = vadd.f32 0.0, %v562
  %564 = vdwg.mxu0
  %v565 = vadd.f32 %v288, %v556
  %v566 = vadd.f32 %v290, %v558
  %v567 = vadd.f32 %v293, %v561
  %v568 = vadd.f32 %v295, %v563
  %v569 = vsel %vm335, %v565, 0.0
  %570 = vadd.xlane.f32.xlu0 %v569
  %v571 = vpop.xlane.xlu0 %570
  %v572 = vsel %vm335, %v566, 0.0
  %573 = vadd.xlane.f32.xlu0 %v572
  %v574 = vpop.xlane.xlu0 %573
  %v575 = vsel %vm335, %v567, 0.0
  %576 = vadd.xlane.f32.xlu0 %v575
  %v577 = vpop.xlane.xlu0 %576
  %v578 = vsel %vm335, %v568, 0.0
  %579 = vadd.xlane.f32.xlu0 %v578
  %v580 = vpop.xlane.xlu0 %579
  %v581 = vrcp.pop 32.0
  %v582 = vmul.f32 32.0, %v581
  %v583 = vsub.f32 1.0, %v582
  %v584 = vmul.f32 %v581, %v583
  %v585 = vadd.f32 %v581, %v584
  %vm586 = vweird.f32 %v581
  %v587 = vsel %vm586, %v581, %v585
  %v588 = vmul.f32 %v571, %v587
  %v589 = vmul.f32 %v574, %v587
  %v590 = vmul.f32 %v577, %v587
  %v591 = vmul.f32 %v580, %v587
  %v592 = vsub.f32 %v565, %v588
  %v593 = vsub.f32 %v566, %v589
  %v594 = vsub.f32 %v567, %v590
  %v595 = vsub.f32 %v568, %v591
  %v596 = vmul.f32 %v592, %v592
  %v597 = vmul.f32 %v593, %v593
  %v598 = vmul.f32 %v594, %v594
  %v599 = vmul.f32 %v595, %v595
  %v600 = vsel %vm335, %v596, 0.0
  %601 = vadd.xlane.f32.xlu0 %v600
  %v602 = vpop.xlane.xlu0 %601
  %v603 = vsel %vm335, %v597, 0.0
  %604 = vadd.xlane.f32.xlu0 %v603
  %v605 = vpop.xlane.xlu0 %604
  %v606 = vsel %vm335, %v598, 0.0
  %607 = vadd.xlane.f32.xlu0 %v606
  %v608 = vpop.xlane.xlu0 %607
  %v609 = vsel %vm335, %v599, 0.0
  %610 = vadd.xlane.f32.xlu0 %v609
  %v611 = vpop.xlane.xlu0 %610
  %v612 = vmul.f32 %v602, %v587
  %v613 = vmul.f32 %v605, %v587
  %v614 = vmul.f32 %v608, %v587
  %v615 = vmul.f32 %v611, %v587
  %v616 = vadd.f32 %v612, 1e-05
  %v617 = vadd.f32 %v613, 1e-05
  %v618 = vadd.f32 %v614, 1e-05
  %v619 = vadd.f32 %v615, 1e-05
  %v620 = vrsqrt.pop %v616
  %v621 = vmul.f32 %v620, %v616
  %v622 = vmul.f32 %v621, %v620
  %v623 = vmul.f32 0.5, %v622
  %v624 = vsub.f32 1.5, %v623
  %v625 = vmul.f32 %v620, %v624
  %vm626 = vweird.f32 %v616
  %vm627 = vweird.f32 %v620
  %vm628 = vmor %vm626, %vm627
  %v629 = vsel %vm628, %v620, %v625
  %v630 = vrsqrt.pop %v617
  %v631 = vmul.f32 %v630, %v617
  %v632 = vmul.f32 %v631, %v630
  %v633 = vmul.f32 0.5, %v632
  %v634 = vsub.f32 1.5, %v633
  %v635 = vmul.f32 %v630, %v634
  %vm636 = vweird.f32 %v617
  %vm637 = vweird.f32 %v630
  %vm638 = vmor %vm636, %vm637
  %v639 = vsel %vm638, %v630, %v635
  %v640 = vrsqrt.pop %v618
  %v641 = vmul.f32 %v640, %v618
  %v642 = vmul.f32 %v641, %v640
  %v643 = vmul.f32 0.5, %v642
  %v644 = vsub.f32 1.5, %v643
  %v645 = vmul.f32 %v640, %v644
  %vm646 = vweird.f32 %v618
  %vm647 = vweird.f32 %v640
  %vm648 = vmor %vm646, %vm647
  %v649 = vsel %vm648, %v640, %v645
  %v650 = vrsqrt.pop %v619
  %v651 = vmul.f32 %v650, %v619
  %v652 = vmul.f32 %v651, %v650
  %v653 = vmul.f32 0.5, %v652
  %v654 = vsub.f32 1.5, %v653
  %v655 = vmul.f32 %v650, %v654
  %vm656 = vweird.f32 %v619
  %vm657 = vweird.f32 %v650
  %vm658 = vmor %vm656, %vm657
  %v659 = vsel %vm658, %v650, %v655
  %v660 = vmul.f32 %v592, %v629
  %v661 = vmul.f32 %v593, %v639
  %v662 = vmul.f32 %v594, %v649
  %v663 = vmul.f32 %v595, %v659
  %v664 = vld [vmem:[%s8] sm:$0xf]
  %v665 = vld [vmem:[%s8 + $0x4] sm:$0xf]
  %v666 = vld [vmem:[%s8 + $0x8] sm:$0xf]
  %v667 = vld [vmem:[%s8 + $0xc] sm:$0xf]
  %v668 = vpack.c.bf16 %v661, %v660
  %v669 = vpack.c.bf16 %v663, %v662
  %v674 = vunpack.c.l.b16 %v664
  %v675 = vunpack.c.l.b16 %v665
  %v676 = vunpack.c.l.b16 %v666
  %v677 = vunpack.c.l.b16 %v667
  %v678 = vpack.c.b16 %v675, %v674
  %v679 = vpack.c.b16 %v677, %v676
  %v683 = vsel %vm335, %v668, 0
  %v686 = vsel %vm335, %v669, 0
  %688 = vmatpush.bf16.msra.mxu0 0
  %689 = vmatpush.bf16.msra.mxu0 0
  %690 = vmatpush.bf16.msra.mxu0 0
  %691 = vmatpush.bf16.msra.mxu0 0
  %692 = vmatpush.bf16.msra.mxu0 0
  %693 = vmatpush.bf16.msra.mxu0 0
  %694 = vmatpush.bf16.msra.mxu0 %v679
  %695 = vmatpush.bf16.msra.mxu0 %v678
  %696 = vmatmul.bf16.gmra.mxu0 %v683
  %v697 = vpop.f32.mrf.mxu0
  %v698 = vadd.f32 0.0, %v697
  %v699 = vpop.f32.mrf.mxu0
  %v700 = vadd.f32 0.0, %v699
  %701 = vmatmul.bf16.gmra.mxu0 %v686
  %v702 = vpop.f32.mrf.mxu0
  %v703 = vadd.f32 0.0, %v702
  %v704 = vpop.f32.mrf.mxu0
  %v705 = vadd.f32 0.0, %v704
  %706 = vdwg.mxu0
  %v707 = vmax.f32 %v698, 0.0
  %v708 = vmax.f32 %v700, 0.0
  %v709 = vmax.f32 %v703, 0.0
  %v710 = vmax.f32 %v705, 0.0
  %v711 = vld [vmem:[%s9] sm:$0xf]
  %v712 = vld [vmem:[%s9 + $0x4] sm:$0xf]
  %v713 = vld [vmem:[%s9 + $0x8] sm:$0xf]
  %v714 = vld [vmem:[%s9 + $0xc] sm:$0xf]
  %v715 = vld [vmem:[%s9 + $0x10] sm:$0xf]
  %v716 = vld [vmem:[%s9 + $0x14] sm:$0xf]
  %v717 = vld [vmem:[%s9 + $0x18] sm:$0xf]
  %v718 = vld [vmem:[%s9 + $0x1c] sm:$0xf]
  %v719 = vpack.c.bf16 %v708, %v707
  %v720 = vpack.c.bf16 %v710, %v709
  %v729 = vunpack.c.l.b16 %v711
  %v730 = vunpack.c.l.b16 %v712
  %v731 = vunpack.c.l.b16 %v713
  %v732 = vunpack.c.l.b16 %v714
  %v733 = vunpack.c.l.b16 %v715
  %v734 = vunpack.c.l.b16 %v716
  %v735 = vunpack.c.l.b16 %v717
  %v736 = vunpack.c.l.b16 %v718
  %v737 = vpack.c.b16 %v730, %v729
  %v738 = vpack.c.b16 %v732, %v731
  %v739 = vpack.c.b16 %v734, %v733
  %v740 = vpack.c.b16 %v736, %v735
  %v746 = vsel %vm259, %v719, 0
  %v749 = vsel %vm259, %v720, 0
  %751 = vmatpush.bf16.msra.mxu0 0
  %752 = vmatpush.bf16.msra.mxu0 0
  %753 = vmatpush.bf16.msra.mxu0 0
  %754 = vmatpush.bf16.msra.mxu0 0
  %755 = vmatpush.bf16.msra.mxu0 %v740
  %756 = vmatpush.bf16.msra.mxu0 %v739
  %757 = vmatpush.bf16.msra.mxu0 %v738
  %758 = vmatpush.bf16.msra.mxu0 %v737
  %759 = vmatmul.bf16.gmra.mxu0 %v746
  %v760 = vpop.f32.mrf.mxu0
  %v761 = vadd.f32 0.0, %v760
  %v762 = vpop.f32.mrf.mxu0
  %v763 = vadd.f32 0.0, %v762
  %764 = vmatmul.bf16.gmra.mxu0 %v749
  %v765 = vpop.f32.mrf.mxu0
  %v766 = vadd.f32 0.0, %v765
  %v767 = vpop.f32.mrf.mxu0
  %v768 = vadd.f32 0.0, %v767
  %769 = vdwg.mxu0
  %v770 = vadd.f32 %v660, %v761
  %v771 = vadd.f32 %v661, %v763
  %v772 = vadd.f32 %v662, %v766
  %v773 = vadd.f32 %v663, %v768
  %v774 = vsel %vm335, %v770, 0.0
  %775 = vadd.xlane.f32.xlu0 %v774
  %v776 = vpop.xlane.xlu0 %775
  %v777 = vsel %vm335, %v771, 0.0
  %778 = vadd.xlane.f32.xlu0 %v777
  %v779 = vpop.xlane.xlu0 %778
  %v780 = vsel %vm335, %v772, 0.0
  %781 = vadd.xlane.f32.xlu0 %v780
  %v782 = vpop.xlane.xlu0 %781
  %v783 = vsel %vm335, %v773, 0.0
  %784 = vadd.xlane.f32.xlu0 %v783
  %v785 = vpop.xlane.xlu0 %784
  %v786 = vmul.f32 %v776, %v587
  %v787 = vmul.f32 %v779, %v587
  %v788 = vmul.f32 %v782, %v587
  %v789 = vmul.f32 %v785, %v587
  %v790 = vsub.f32 %v770, %v786
  %v791 = vsub.f32 %v771, %v787
  %v792 = vsub.f32 %v772, %v788
  %v793 = vsub.f32 %v773, %v789
  %v794 = vmul.f32 %v790, %v790
  %v795 = vmul.f32 %v791, %v791
  %v796 = vmul.f32 %v792, %v792
  %v797 = vmul.f32 %v793, %v793
  %v798 = vsel %vm335, %v794, 0.0
  %799 = vadd.xlane.f32.xlu0 %v798
  %v800 = vpop.xlane.xlu0 %799
  %v801 = vsel %vm335, %v795, 0.0
  %802 = vadd.xlane.f32.xlu0 %v801
  %v803 = vpop.xlane.xlu0 %802
  %v804 = vsel %vm335, %v796, 0.0
  %805 = vadd.xlane.f32.xlu0 %v804
  %v806 = vpop.xlane.xlu0 %805
  %v807 = vsel %vm335, %v797, 0.0
  %808 = vadd.xlane.f32.xlu0 %v807
  %v809 = vpop.xlane.xlu0 %808
  %v810 = vmul.f32 %v800, %v587
  %v811 = vmul.f32 %v803, %v587
  %v812 = vmul.f32 %v806, %v587
  %v813 = vmul.f32 %v809, %v587
  %v814 = vadd.f32 %v810, 1e-05
  %v815 = vadd.f32 %v811, 1e-05
  %v816 = vadd.f32 %v812, 1e-05
  %v817 = vadd.f32 %v813, 1e-05
  %v818 = vrsqrt.pop %v814
  %v819 = vmul.f32 %v818, %v814
  %v820 = vmul.f32 %v819, %v818
  %v821 = vmul.f32 0.5, %v820
  %v822 = vsub.f32 1.5, %v821
  %v823 = vmul.f32 %v818, %v822
  %vm824 = vweird.f32 %v814
  %vm825 = vweird.f32 %v818
  %vm826 = vmor %vm824, %vm825
  %v827 = vsel %vm826, %v818, %v823
  %v828 = vrsqrt.pop %v815
  %v829 = vmul.f32 %v828, %v815
  %v830 = vmul.f32 %v829, %v828
  %v831 = vmul.f32 0.5, %v830
  %v832 = vsub.f32 1.5, %v831
  %v833 = vmul.f32 %v828, %v832
  %vm834 = vweird.f32 %v815
  %vm835 = vweird.f32 %v828
  %vm836 = vmor %vm834, %vm835
  %v837 = vsel %vm836, %v828, %v833
  %v838 = vrsqrt.pop %v816
  %v839 = vmul.f32 %v838, %v816
  %v840 = vmul.f32 %v839, %v838
  %v841 = vmul.f32 0.5, %v840
  %v842 = vsub.f32 1.5, %v841
  %v843 = vmul.f32 %v838, %v842
  %vm844 = vweird.f32 %v816
  %vm845 = vweird.f32 %v838
  %vm846 = vmor %vm844, %vm845
  %v847 = vsel %vm846, %v838, %v843
  %v848 = vrsqrt.pop %v817
  %v849 = vmul.f32 %v848, %v817
  %v850 = vmul.f32 %v849, %v848
  %v851 = vmul.f32 0.5, %v850
  %v852 = vsub.f32 1.5, %v851
  %v853 = vmul.f32 %v848, %v852
  %vm854 = vweird.f32 %v817
  %vm855 = vweird.f32 %v848
  %vm856 = vmor %vm854, %vm855
  %v857 = vsel %vm856, %v848, %v853
  %v858 = vmul.f32 %v790, %v827
  %v859 = vmul.f32 %v791, %v837
  %v860 = vmul.f32 %v792, %v847
  %v861 = vmul.f32 %v793, %v857
  %v862 = vld [vmem:[%s2] sm:$0xff]
  %v863 = vld [vmem:[%s10] sm:$0xf]
  %v864 = vld [vmem:[%s10 + $0x4] sm:$0xf]
  %v865 = vld [vmem:[%s10 + $0x8] sm:$0xf]
  %v866 = vld [vmem:[%s10 + $0xc] sm:$0xf]
  %v867 = vpack.c.bf16 %v300, %v298
  %v868 = vpack.c.bf16 %v305, %v303
  %v869 = vpack.c.bf16 %v310, %v308
  %v870 = vpack.c.bf16 %v315, %v313
  %v875 = vunpack.c.l.b16 %v863
  %v876 = vunpack.c.l.b16 %v864
  %v877 = vunpack.c.l.b16 %v865
  %v878 = vunpack.c.l.b16 %v866
  %v879 = vpack.c.b16 %v876, %v875
  %v880 = vpack.c.b16 %v878, %v877
  %v884 = vsel %vm335, %v867, 0
  %v887 = vsel %vm335, %v868, 0
  %v890 = vsel %vm335, %v869, 0
  %v893 = vsel %vm335, %v870, 0
  %895 = vmatpush.bf16.msra.mxu0 0
  %896 = vmatpush.bf16.msra.mxu0 0
  %897 = vmatpush.bf16.msra.mxu0 0
  %898 = vmatpush.bf16.msra.mxu0 0
  %899 = vmatpush.bf16.msra.mxu0 0
  %900 = vmatpush.bf16.msra.mxu0 0
  %901 = vmatpush.bf16.msra.mxu0 %v880
  %902 = vmatpush.bf16.msra.mxu0 %v879
  %903 = vmatmul.bf16.gmra.mxu0 %v884
  %v904 = vpop.f32.mrf.mxu0
  %v905 = vadd.f32 0.0, %v904
  %v906 = vpop.f32.mrf.mxu0
  %v907 = vadd.f32 0.0, %v906
  %908 = vmatmul.bf16.gmra.mxu0 %v887
  %v909 = vpop.f32.mrf.mxu0
  %v910 = vadd.f32 0.0, %v909
  %v911 = vpop.f32.mrf.mxu0
  %v912 = vadd.f32 0.0, %v911
  %913 = vmatmul.bf16.gmra.mxu0 %v890
  %v914 = vpop.f32.mrf.mxu0
  %v915 = vadd.f32 0.0, %v914
  %v916 = vpop.f32.mrf.mxu0
  %v917 = vadd.f32 0.0, %v916
  %918 = vmatmul.bf16.gmra.mxu0 %v893
  %v919 = vpop.f32.mrf.mxu0
  %v920 = vadd.f32 0.0, %v919
  %v921 = vpop.f32.mrf.mxu0
  %v922 = vadd.f32 0.0, %v921
  %923 = vdwg.mxu0
  %v924 = vlaneseq
  %v925 = vshrl.u32 %v924, 7
  %vm926 = vcmp.le.s32.totalorder %v97, %v925
  %v927 = vsel %vm926, 0.0, -1e+30
  %v928 = vpack.c.bf16 %v905, %v905
  %v929 = vpack.c.bf16 %v907, %v907
  %v930 = vpack.c.bf16 %v910, %v910
  %v931 = vpack.c.bf16 %v912, %v912
  %v932 = vpack.c.bf16 %v915, %v915
  %v933 = vpack.c.bf16 %v917, %v917
  %v934 = vpack.c.bf16 %v920, %v920
  %v935 = vpack.c.bf16 %v922, %v922
  %v937 = vunpack.c.l.b16 %v928
  %v938 = vpack.c.b16 %v937, %v937
  %939 = vrot.lane.b32.xlu0 %v938, 96
  %v940 = vpop.permute.xlu0 %939
  %v942 = vsel %vm335, %v928, 0
  %v945 = vsel %vm335, %v940, 0
  %947 = vmatpush.bf16.xpose.msra.mxu0 0
  %948 = vmatpush.bf16.xpose.msra.mxu0 0
  %949 = vmatpush.bf16.xpose.msra.mxu0 0
  %950 = vmatpush.bf16.xpose.msra.mxu0 0
  %951 = vmatpush.bf16.xpose.msra.mxu0 0
  %952 = vmatpush.bf16.xpose.msra.mxu0 0
  %953 = vmatpush.bf16.xpose.msra.mxu0 0
  %954 = vmatpush.bf16.xpose.msra.mxu0 %v945
  %955 = vmatmul.bf16.gmra.mxu0 %v942
  %v956 = vpop.f32.mrf.mxu0
  %v957 = vadd.f32 0.0, %v956
  %v958 = vpop.f32.mrf.mxu0
  %959 = vdwg.mxu0
  %v961 = vunpack.c.l.b16 %v929
  %v962 = vpack.c.b16 %v961, %v961
  %963 = vrot.lane.b32.xlu0 %v962, 96
  %v964 = vpop.permute.xlu0 %963
  %v966 = vsel %vm335, %v929, 0
  %v969 = vsel %vm335, %v964, 0
  %971 = vmatpush.bf16.xpose.msra.mxu0 0
  %972 = vmatpush.bf16.xpose.msra.mxu0 0
  %973 = vmatpush.bf16.xpose.msra.mxu0 0
  %974 = vmatpush.bf16.xpose.msra.mxu0 0
  %975 = vmatpush.bf16.xpose.msra.mxu0 0
  %976 = vmatpush.bf16.xpose.msra.mxu0 0
  %977 = vmatpush.bf16.xpose.msra.mxu0 0
  %978 = vmatpush.bf16.xpose.msra.mxu0 %v969
  %979 = vmatmul.bf16.gmra.mxu0 %v966
  %v980 = vpop.f32.mrf.mxu0
  %v981 = vadd.f32 0.0, %v980
  %v982 = vpop.f32.mrf.mxu0
  %983 = vdwg.mxu0
  %v985 = vunpack.c.l.b16 %v930
  %v986 = vpack.c.b16 %v985, %v985
  %987 = vrot.lane.b32.xlu0 %v986, 96
  %v988 = vpop.permute.xlu0 %987
  %v990 = vsel %vm335, %v930, 0
  %v993 = vsel %vm335, %v988, 0
  %995 = vmatpush.bf16.xpose.msra.mxu0 0
  %996 = vmatpush.bf16.xpose.msra.mxu0 0
  %997 = vmatpush.bf16.xpose.msra.mxu0 0
  %998 = vmatpush.bf16.xpose.msra.mxu0 0
  %999 = vmatpush.bf16.xpose.msra.mxu0 0
  %1000 = vmatpush.bf16.xpose.msra.mxu0 0
  %1001 = vmatpush.bf16.xpose.msra.mxu0 0
  %1002 = vmatpush.bf16.xpose.msra.mxu0 %v993
  %1003 = vmatmul.bf16.gmra.mxu0 %v990
  %v1004 = vpop.f32.mrf.mxu0
  %v1005 = vadd.f32 0.0, %v1004
  %v1006 = vpop.f32.mrf.mxu0
  %1007 = vdwg.mxu0
  %v1009 = vunpack.c.l.b16 %v931
  %v1010 = vpack.c.b16 %v1009, %v1009
  %1011 = vrot.lane.b32.xlu0 %v1010, 96
  %v1012 = vpop.permute.xlu0 %1011
  %v1014 = vsel %vm335, %v931, 0
  %v1017 = vsel %vm335, %v1012, 0
  %1019 = vmatpush.bf16.xpose.msra.mxu0 0
  %1020 = vmatpush.bf16.xpose.msra.mxu0 0
  %1021 = vmatpush.bf16.xpose.msra.mxu0 0
  %1022 = vmatpush.bf16.xpose.msra.mxu0 0
  %1023 = vmatpush.bf16.xpose.msra.mxu0 0
  %1024 = vmatpush.bf16.xpose.msra.mxu0 0
  %1025 = vmatpush.bf16.xpose.msra.mxu0 0
  %1026 = vmatpush.bf16.xpose.msra.mxu0 %v1017
  %1027 = vmatmul.bf16.gmra.mxu0 %v1014
  %v1028 = vpop.f32.mrf.mxu0
  %v1029 = vadd.f32 0.0, %v1028
  %v1030 = vpop.f32.mrf.mxu0
  %1031 = vdwg.mxu0
  %v1033 = vunpack.c.l.b16 %v932
  %v1034 = vpack.c.b16 %v1033, %v1033
  %1035 = vrot.lane.b32.xlu0 %v1034, 96
  %v1036 = vpop.permute.xlu0 %1035
  %v1038 = vsel %vm335, %v932, 0
  %v1041 = vsel %vm335, %v1036, 0
  %1043 = vmatpush.bf16.xpose.msra.mxu0 0
  %1044 = vmatpush.bf16.xpose.msra.mxu0 0
  %1045 = vmatpush.bf16.xpose.msra.mxu0 0
  %1046 = vmatpush.bf16.xpose.msra.mxu0 0
  %1047 = vmatpush.bf16.xpose.msra.mxu0 0
  %1048 = vmatpush.bf16.xpose.msra.mxu0 0
  %1049 = vmatpush.bf16.xpose.msra.mxu0 0
  %1050 = vmatpush.bf16.xpose.msra.mxu0 %v1041
  %1051 = vmatmul.bf16.gmra.mxu0 %v1038
  %v1052 = vpop.f32.mrf.mxu0
  %v1053 = vadd.f32 0.0, %v1052
  %v1054 = vpop.f32.mrf.mxu0
  %1055 = vdwg.mxu0
  %v1057 = vunpack.c.l.b16 %v933
  %v1058 = vpack.c.b16 %v1057, %v1057
  %1059 = vrot.lane.b32.xlu0 %v1058, 96
  %v1060 = vpop.permute.xlu0 %1059
  %v1062 = vsel %vm335, %v933, 0
  %v1065 = vsel %vm335, %v1060, 0
  %1067 = vmatpush.bf16.xpose.msra.mxu0 0
  %1068 = vmatpush.bf16.xpose.msra.mxu0 0
  %1069 = vmatpush.bf16.xpose.msra.mxu0 0
  %1070 = vmatpush.bf16.xpose.msra.mxu0 0
  %1071 = vmatpush.bf16.xpose.msra.mxu0 0
  %1072 = vmatpush.bf16.xpose.msra.mxu0 0
  %1073 = vmatpush.bf16.xpose.msra.mxu0 0
  %1074 = vmatpush.bf16.xpose.msra.mxu0 %v1065
  %1075 = vmatmul.bf16.gmra.mxu0 %v1062
  %v1076 = vpop.f32.mrf.mxu0
  %v1077 = vadd.f32 0.0, %v1076
  %v1078 = vpop.f32.mrf.mxu0
  %1079 = vdwg.mxu0
  %v1081 = vunpack.c.l.b16 %v934
  %v1082 = vpack.c.b16 %v1081, %v1081
  %1083 = vrot.lane.b32.xlu0 %v1082, 96
  %v1084 = vpop.permute.xlu0 %1083
  %v1086 = vsel %vm335, %v934, 0
  %v1089 = vsel %vm335, %v1084, 0
  %1091 = vmatpush.bf16.xpose.msra.mxu0 0
  %1092 = vmatpush.bf16.xpose.msra.mxu0 0
  %1093 = vmatpush.bf16.xpose.msra.mxu0 0
  %1094 = vmatpush.bf16.xpose.msra.mxu0 0
  %1095 = vmatpush.bf16.xpose.msra.mxu0 0
  %1096 = vmatpush.bf16.xpose.msra.mxu0 0
  %1097 = vmatpush.bf16.xpose.msra.mxu0 0
  %1098 = vmatpush.bf16.xpose.msra.mxu0 %v1089
  %1099 = vmatmul.bf16.gmra.mxu0 %v1086
  %v1100 = vpop.f32.mrf.mxu0
  %v1101 = vadd.f32 0.0, %v1100
  %v1102 = vpop.f32.mrf.mxu0
  %1103 = vdwg.mxu0
  %v1105 = vunpack.c.l.b16 %v935
  %v1106 = vpack.c.b16 %v1105, %v1105
  %1107 = vrot.lane.b32.xlu0 %v1106, 96
  %v1108 = vpop.permute.xlu0 %1107
  %v1110 = vsel %vm335, %v935, 0
  %v1113 = vsel %vm335, %v1108, 0
  %1115 = vmatpush.bf16.xpose.msra.mxu0 0
  %1116 = vmatpush.bf16.xpose.msra.mxu0 0
  %1117 = vmatpush.bf16.xpose.msra.mxu0 0
  %1118 = vmatpush.bf16.xpose.msra.mxu0 0
  %1119 = vmatpush.bf16.xpose.msra.mxu0 0
  %1120 = vmatpush.bf16.xpose.msra.mxu0 0
  %1121 = vmatpush.bf16.xpose.msra.mxu0 0
  %1122 = vmatpush.bf16.xpose.msra.mxu0 %v1113
  %1123 = vmatmul.bf16.gmra.mxu0 %v1110
  %v1124 = vpop.f32.mrf.mxu0
  %v1125 = vadd.f32 0.0, %v1124
  %v1126 = vpop.f32.mrf.mxu0
  %1127 = vdwg.mxu0
  %v1128 = vmul.f32 %v957, 0.17677669
  %v1129 = vmul.f32 %v981, 0.17677669
  %v1130 = vmul.f32 %v1005, 0.17677669
  %v1131 = vmul.f32 %v1029, 0.17677669
  %v1132 = vmul.f32 %v1053, 0.17677669
  %v1133 = vmul.f32 %v1077, 0.17677669
  %v1134 = vmul.f32 %v1101, 0.17677669
  %v1135 = vmul.f32 %v1125, 0.17677669
  %v1136 = vadd.f32 %v1128, %v927
  %v1137 = vadd.f32 %v1129, %v927
  %v1138 = vadd.f32 %v1130, %v927
  %v1139 = vadd.f32 %v1131, %v927
  %v1140 = vadd.f32 %v1132, %v927
  %v1141 = vadd.f32 %v1133, %v927
  %v1142 = vadd.f32 %v1134, %v927
  %v1143 = vadd.f32 %v1135, %v927
  %vm1144 = vcmask 64512
  %v1145 = vsel %vm1144, %v1136, -inf
  %1146 = vmax.xlane.f32.xlu0 %v1145
  %v1147 = vpop.xlane.xlu0 %1146
  %v1148 = vsel %vm1144, %v1137, -inf
  %1149 = vmax.xlane.f32.xlu0 %v1148
  %v1150 = vpop.xlane.xlu0 %1149
  %v1151 = vsel %vm1144, %v1138, -inf
  %1152 = vmax.xlane.f32.xlu0 %v1151
  %v1153 = vpop.xlane.xlu0 %1152
  %v1154 = vsel %vm1144, %v1139, -inf
  %1155 = vmax.xlane.f32.xlu0 %v1154
  %v1156 = vpop.xlane.xlu0 %1155
  %v1157 = vsel %vm1144, %v1140, -inf
  %1158 = vmax.xlane.f32.xlu0 %v1157
  %v1159 = vpop.xlane.xlu0 %1158
  %v1160 = vsel %vm1144, %v1141, -inf
  %1161 = vmax.xlane.f32.xlu0 %v1160
  %v1162 = vpop.xlane.xlu0 %1161
  %v1163 = vsel %vm1144, %v1142, -inf
  %1164 = vmax.xlane.f32.xlu0 %v1163
  %v1165 = vpop.xlane.xlu0 %1164
  %v1166 = vsel %vm1144, %v1143, -inf
  %1167 = vmax.xlane.f32.xlu0 %v1166
  %v1168 = vpop.xlane.xlu0 %1167
  %v1169 = vsub.f32 %v1136, %v1147
  %v1170 = vsub.f32 %v1137, %v1150
  %v1171 = vsub.f32 %v1138, %v1153
  %v1172 = vsub.f32 %v1139, %v1156
  %v1173 = vsub.f32 %v1140, %v1159
  %v1174 = vsub.f32 %v1141, %v1162
  %v1175 = vsub.f32 %v1142, %v1165
  %v1176 = vsub.f32 %v1143, %v1168
  %v1177 = vmul.f32 %v1169, 1.442695
  %v1178 = vpow.pop %v1177
  %v1179 = vmul.f32 %v1170, 1.442695
  %v1180 = vpow.pop %v1179
  %v1181 = vmul.f32 %v1171, 1.442695
  %v1182 = vpow.pop %v1181
  %v1183 = vmul.f32 %v1172, 1.442695
  %v1184 = vpow.pop %v1183
  %v1185 = vmul.f32 %v1173, 1.442695
  %v1186 = vpow.pop %v1185
  %v1187 = vmul.f32 %v1174, 1.442695
  %v1188 = vpow.pop %v1187
  %v1189 = vmul.f32 %v1175, 1.442695
  %v1190 = vpow.pop %v1189
  %v1191 = vmul.f32 %v1176, 1.442695
  %v1192 = vpow.pop %v1191
  %v1193 = vsel %vm1144, %v1178, 0.0
  %1194 = vadd.xlane.f32.xlu0 %v1193
  %v1195 = vpop.xlane.xlu0 %1194
  %v1196 = vsel %vm1144, %v1180, 0.0
  %1197 = vadd.xlane.f32.xlu0 %v1196
  %v1198 = vpop.xlane.xlu0 %1197
  %v1199 = vsel %vm1144, %v1182, 0.0
  %1200 = vadd.xlane.f32.xlu0 %v1199
  %v1201 = vpop.xlane.xlu0 %1200
  %v1202 = vsel %vm1144, %v1184, 0.0
  %1203 = vadd.xlane.f32.xlu0 %v1202
  %v1204 = vpop.xlane.xlu0 %1203
  %v1205 = vsel %vm1144, %v1186, 0.0
  %1206 = vadd.xlane.f32.xlu0 %v1205
  %v1207 = vpop.xlane.xlu0 %1206
  %v1208 = vsel %vm1144, %v1188, 0.0
  %1209 = vadd.xlane.f32.xlu0 %v1208
  %v1210 = vpop.xlane.xlu0 %1209
  %v1211 = vsel %vm1144, %v1190, 0.0
  %1212 = vadd.xlane.f32.xlu0 %v1211
  %v1213 = vpop.xlane.xlu0 %1212
  %v1214 = vsel %vm1144, %v1192, 0.0
  %1215 = vadd.xlane.f32.xlu0 %v1214
  %v1216 = vpop.xlane.xlu0 %1215
  %v1217 = vrcp.pop %v1195
  %v1218 = vrcp.pop %v1198
  %v1219 = vrcp.pop %v1201
  %v1220 = vrcp.pop %v1204
  %v1221 = vrcp.pop %v1207
  %v1222 = vrcp.pop %v1210
  %v1223 = vrcp.pop %v1213
  %v1224 = vrcp.pop %v1216
  %v1225 = vmul.f32 %v1178, %v1217
  %v1226 = vmul.f32 %v1180, %v1218
  %v1227 = vmul.f32 %v1182, %v1219
  %v1228 = vmul.f32 %v1184, %v1220
  %v1229 = vmul.f32 %v1186, %v1221
  %v1230 = vmul.f32 %v1188, %v1222
  %v1231 = vmul.f32 %v1190, %v1223
  %v1232 = vmul.f32 %v1192, %v1224
  %v1233 = vpack.c.bf16 %v1225, %v1225
  %v1234 = vpack.c.bf16 %v1226, %v1226
  %v1235 = vpack.c.bf16 %v1227, %v1227
  %v1236 = vpack.c.bf16 %v1228, %v1228
  %v1237 = vpack.c.bf16 %v1229, %v1229
  %v1238 = vpack.c.bf16 %v1230, %v1230
  %v1239 = vpack.c.bf16 %v1231, %v1231
  %v1240 = vpack.c.bf16 %v1232, %v1232
  %1241 = vrot.lane.b32.xlu0 %v938, 64
  %v1242 = vpop.permute.xlu0 %1241
  %v1244 = vsel %vm1144, %v1233, 0
  %vm1246 = vcmask 1043456
  %v1248 = vsel %vm1246, %v1242, 0
  %1250 = vmatpush.bf16.msra.mxu0 0
  %1251 = vmatpush.bf16.msra.mxu0 0
  %1252 = vmatpush.bf16.msra.mxu0 0
  %1253 = vmatpush.bf16.msra.mxu0 0
  %1254 = vmatpush.bf16.msra.mxu0 0
  %1255 = vmatpush.bf16.msra.mxu0 0
  %1256 = vmatpush.bf16.msra.mxu0 0
  %1257 = vmatpush.bf16.msra.mxu0 %v1248
  %1258 = vmatmul.bf16.gmra.mxu0 %v1244
  %v1259 = vpop.f32.mrf.mxu0
  %v1260 = vadd.f32 0.0, %v1259
  %v1261 = vpop.f32.mrf.mxu0
  %1262 = vdwg.mxu0
  %1263 = vrot.lane.b32.xlu0 %v962, 64
  %v1264 = vpop.permute.xlu0 %1263
  %v1266 = vsel %vm1144, %v1234, 0
  %v1269 = vsel %vm1246, %v1264, 0
  %1271 = vmatpush.bf16.msra.mxu0 0
  %1272 = vmatpush.bf16.msra.mxu0 0
  %1273 = vmatpush.bf16.msra.mxu0 0
  %1274 = vmatpush.bf16.msra.mxu0 0
  %1275 = vmatpush.bf16.msra.mxu0 0
  %1276 = vmatpush.bf16.msra.mxu0 0
  %1277 = vmatpush.bf16.msra.mxu0 0
  %1278 = vmatpush.bf16.msra.mxu0 %v1269
  %1279 = vmatmul.bf16.gmra.mxu0 %v1266
  %v1280 = vpop.f32.mrf.mxu0
  %v1281 = vadd.f32 0.0, %v1280
  %v1282 = vpop.f32.mrf.mxu0
  %1283 = vdwg.mxu0
  %1284 = vrot.lane.b32.xlu0 %v986, 64
  %v1285 = vpop.permute.xlu0 %1284
  %v1287 = vsel %vm1144, %v1235, 0
  %v1290 = vsel %vm1246, %v1285, 0
  %1292 = vmatpush.bf16.msra.mxu0 0
  %1293 = vmatpush.bf16.msra.mxu0 0
  %1294 = vmatpush.bf16.msra.mxu0 0
  %1295 = vmatpush.bf16.msra.mxu0 0
  %1296 = vmatpush.bf16.msra.mxu0 0
  %1297 = vmatpush.bf16.msra.mxu0 0
  %1298 = vmatpush.bf16.msra.mxu0 0
  %1299 = vmatpush.bf16.msra.mxu0 %v1290
  %1300 = vmatmul.bf16.gmra.mxu0 %v1287
  %v1301 = vpop.f32.mrf.mxu0
  %v1302 = vadd.f32 0.0, %v1301
  %v1303 = vpop.f32.mrf.mxu0
  %1304 = vdwg.mxu0
  %1305 = vrot.lane.b32.xlu0 %v1010, 64
  %v1306 = vpop.permute.xlu0 %1305
  %v1308 = vsel %vm1144, %v1236, 0
  %v1311 = vsel %vm1246, %v1306, 0
  %1313 = vmatpush.bf16.msra.mxu0 0
  %1314 = vmatpush.bf16.msra.mxu0 0
  %1315 = vmatpush.bf16.msra.mxu0 0
  %1316 = vmatpush.bf16.msra.mxu0 0
  %1317 = vmatpush.bf16.msra.mxu0 0
  %1318 = vmatpush.bf16.msra.mxu0 0
  %1319 = vmatpush.bf16.msra.mxu0 0
  %1320 = vmatpush.bf16.msra.mxu0 %v1311
  %1321 = vmatmul.bf16.gmra.mxu0 %v1308
  %v1322 = vpop.f32.mrf.mxu0
  %v1323 = vadd.f32 0.0, %v1322
  %v1324 = vpop.f32.mrf.mxu0
  %1325 = vdwg.mxu0
  %1326 = vrot.lane.b32.xlu0 %v1034, 64
  %v1327 = vpop.permute.xlu0 %1326
  %v1329 = vsel %vm1144, %v1237, 0
  %v1332 = vsel %vm1246, %v1327, 0
  %1334 = vmatpush.bf16.msra.mxu0 0
  %1335 = vmatpush.bf16.msra.mxu0 0
  %1336 = vmatpush.bf16.msra.mxu0 0
  %1337 = vmatpush.bf16.msra.mxu0 0
  %1338 = vmatpush.bf16.msra.mxu0 0
  %1339 = vmatpush.bf16.msra.mxu0 0
  %1340 = vmatpush.bf16.msra.mxu0 0
  %1341 = vmatpush.bf16.msra.mxu0 %v1332
  %1342 = vmatmul.bf16.gmra.mxu0 %v1329
  %v1343 = vpop.f32.mrf.mxu0
  %v1344 = vadd.f32 0.0, %v1343
  %v1345 = vpop.f32.mrf.mxu0
  %1346 = vdwg.mxu0
  %1347 = vrot.lane.b32.xlu0 %v1058, 64
  %v1348 = vpop.permute.xlu0 %1347
  %v1350 = vsel %vm1144, %v1238, 0
  %v1353 = vsel %vm1246, %v1348, 0
  %1355 = vmatpush.bf16.msra.mxu0 0
  %1356 = vmatpush.bf16.msra.mxu0 0
  %1357 = vmatpush.bf16.msra.mxu0 0
  %1358 = vmatpush.bf16.msra.mxu0 0
  %1359 = vmatpush.bf16.msra.mxu0 0
  %1360 = vmatpush.bf16.msra.mxu0 0
  %1361 = vmatpush.bf16.msra.mxu0 0
  %1362 = vmatpush.bf16.msra.mxu0 %v1353
  %1363 = vmatmul.bf16.gmra.mxu0 %v1350
  %v1364 = vpop.f32.mrf.mxu0
  %v1365 = vadd.f32 0.0, %v1364
  %v1366 = vpop.f32.mrf.mxu0
  %1367 = vdwg.mxu0
  %1368 = vrot.lane.b32.xlu0 %v1082, 64
  %v1369 = vpop.permute.xlu0 %1368
  %v1371 = vsel %vm1144, %v1239, 0
  %v1374 = vsel %vm1246, %v1369, 0
  %1376 = vmatpush.bf16.msra.mxu0 0
  %1377 = vmatpush.bf16.msra.mxu0 0
  %1378 = vmatpush.bf16.msra.mxu0 0
  %1379 = vmatpush.bf16.msra.mxu0 0
  %1380 = vmatpush.bf16.msra.mxu0 0
  %1381 = vmatpush.bf16.msra.mxu0 0
  %1382 = vmatpush.bf16.msra.mxu0 0
  %1383 = vmatpush.bf16.msra.mxu0 %v1374
  %1384 = vmatmul.bf16.gmra.mxu0 %v1371
  %v1385 = vpop.f32.mrf.mxu0
  %v1386 = vadd.f32 0.0, %v1385
  %v1387 = vpop.f32.mrf.mxu0
  %1388 = vdwg.mxu0
  %1389 = vrot.lane.b32.xlu0 %v1106, 64
  %v1390 = vpop.permute.xlu0 %1389
  %v1392 = vsel %vm1144, %v1240, 0
  %v1395 = vsel %vm1246, %v1390, 0
  %1397 = vmatpush.bf16.msra.mxu0 0
  %1398 = vmatpush.bf16.msra.mxu0 0
  %1399 = vmatpush.bf16.msra.mxu0 0
  %1400 = vmatpush.bf16.msra.mxu0 0
  %1401 = vmatpush.bf16.msra.mxu0 0
  %1402 = vmatpush.bf16.msra.mxu0 0
  %1403 = vmatpush.bf16.msra.mxu0 0
  %1404 = vmatpush.bf16.msra.mxu0 %v1395
  %1405 = vmatmul.bf16.gmra.mxu0 %v1392
  %v1406 = vpop.f32.mrf.mxu0
  %v1407 = vadd.f32 0.0, %v1406
  %v1408 = vpop.f32.mrf.mxu0
  %1409 = vdwg.mxu0
  %v1410 = vld [vmem:[%s11] sm:$0xf]
  %v1411 = vld [vmem:[%s11 + $0x4] sm:$0xf]
  %v1412 = vld [vmem:[%s11 + $0x8] sm:$0xf]
  %v1413 = vld [vmem:[%s11 + $0xc] sm:$0xf]
  %v1414 = vpack.c.bf16 %v1281, %v1260
  %v1415 = vpack.c.bf16 %v1323, %v1302
  %v1416 = vpack.c.bf16 %v1365, %v1344
  %v1417 = vpack.c.bf16 %v1407, %v1386
  %v1422 = vunpack.c.l.b16 %v1410
  %v1423 = vunpack.c.l.b16 %v1411
  %v1424 = vunpack.c.l.b16 %v1412
  %v1425 = vunpack.c.l.b16 %v1413
  %v1426 = vpack.c.b16 %v1423, %v1422
  %v1427 = vpack.c.b16 %v1425, %v1424
  %v1431 = vsel %vm335, %v1414, 0
  %v1434 = vsel %vm335, %v1415, 0
  %v1437 = vsel %vm335, %v1416, 0
  %v1440 = vsel %vm335, %v1417, 0
  %1442 = vmatpush.bf16.msra.mxu0 0
  %1443 = vmatpush.bf16.msra.mxu0 0
  %1444 = vmatpush.bf16.msra.mxu0 0
  %1445 = vmatpush.bf16.msra.mxu0 0
  %1446 = vmatpush.bf16.msra.mxu0 0
  %1447 = vmatpush.bf16.msra.mxu0 0
  %1448 = vmatpush.bf16.msra.mxu0 %v1427
  %1449 = vmatpush.bf16.msra.mxu0 %v1426
  %1450 = vmatmul.bf16.gmra.mxu0 %v1431
  %v1451 = vpop.f32.mrf.mxu0
  %v1452 = vadd.f32 0.0, %v1451
  %v1453 = vpop.f32.mrf.mxu0
  %v1454 = vadd.f32 0.0, %v1453
  %1455 = vmatmul.bf16.gmra.mxu0 %v1434
  %v1456 = vpop.f32.mrf.mxu0
  %v1457 = vadd.f32 0.0, %v1456
  %v1458 = vpop.f32.mrf.mxu0
  %v1459 = vadd.f32 0.0, %v1458
  %1460 = vmatmul.bf16.gmra.mxu0 %v1437
  %v1461 = vpop.f32.mrf.mxu0
  %v1462 = vadd.f32 0.0, %v1461
  %v1463 = vpop.f32.mrf.mxu0
  %v1464 = vadd.f32 0.0, %v1463
  %1465 = vmatmul.bf16.gmra.mxu0 %v1440
  %v1466 = vpop.f32.mrf.mxu0
  %v1467 = vadd.f32 0.0, %v1466
  %v1468 = vpop.f32.mrf.mxu0
  %v1469 = vadd.f32 0.0, %v1468
  %1470 = vdwg.mxu0
  %v1471 = vadd.f32 %v298, %v1452
  %v1472 = vadd.f32 %v300, %v1454
  %v1473 = vadd.f32 %v303, %v1457
  %v1474 = vadd.f32 %v305, %v1459
  %v1475 = vadd.f32 %v308, %v1462
  %v1476 = vadd.f32 %v310, %v1464
  %v1477 = vadd.f32 %v313, %v1467
  %v1478 = vadd.f32 %v315, %v1469
  %v1479 = vsel %vm335, %v1471, 0.0
  %1480 = vadd.xlane.f32.xlu0 %v1479
  %v1481 = vpop.xlane.xlu0 %1480
  %v1482 = vsel %vm335, %v1472, 0.0
  %1483 = vadd.xlane.f32.xlu0 %v1482
  %v1484 = vpop.xlane.xlu0 %1483
  %v1485 = vsel %vm335, %v1473, 0.0
  %1486 = vadd.xlane.f32.xlu0 %v1485
  %v1487 = vpop.xlane.xlu0 %1486
  %v1488 = vsel %vm335, %v1474, 0.0
  %1489 = vadd.xlane.f32.xlu0 %v1488
  %v1490 = vpop.xlane.xlu0 %1489
  %v1491 = vsel %vm335, %v1475, 0.0
  %1492 = vadd.xlane.f32.xlu0 %v1491
  %v1493 = vpop.xlane.xlu0 %1492
  %v1494 = vsel %vm335, %v1476, 0.0
  %1495 = vadd.xlane.f32.xlu0 %v1494
  %v1496 = vpop.xlane.xlu0 %1495
  %v1497 = vsel %vm335, %v1477, 0.0
  %1498 = vadd.xlane.f32.xlu0 %v1497
  %v1499 = vpop.xlane.xlu0 %1498
  %v1500 = vsel %vm335, %v1478, 0.0
  %1501 = vadd.xlane.f32.xlu0 %v1500
  %v1502 = vpop.xlane.xlu0 %1501
  %v1503 = vmul.f32 %v1481, %v587
  %v1504 = vmul.f32 %v1484, %v587
  %v1505 = vmul.f32 %v1487, %v587
  %v1506 = vmul.f32 %v1490, %v587
  %v1507 = vmul.f32 %v1493, %v587
  %v1508 = vmul.f32 %v1496, %v587
  %v1509 = vmul.f32 %v1499, %v587
  %v1510 = vmul.f32 %v1502, %v587
  %v1511 = vsub.f32 %v1471, %v1503
  %v1512 = vsub.f32 %v1472, %v1504
  %v1513 = vsub.f32 %v1473, %v1505
  %v1514 = vsub.f32 %v1474, %v1506
  %v1515 = vsub.f32 %v1475, %v1507
  %v1516 = vsub.f32 %v1476, %v1508
  %v1517 = vsub.f32 %v1477, %v1509
  %v1518 = vsub.f32 %v1478, %v1510
  %v1519 = vmul.f32 %v1511, %v1511
  %v1520 = vmul.f32 %v1512, %v1512
  %v1521 = vmul.f32 %v1513, %v1513
  %v1522 = vmul.f32 %v1514, %v1514
  %v1523 = vmul.f32 %v1515, %v1515
  %v1524 = vmul.f32 %v1516, %v1516
  %v1525 = vmul.f32 %v1517, %v1517
  %v1526 = vmul.f32 %v1518, %v1518
  %v1527 = vsel %vm335, %v1519, 0.0
  %1528 = vadd.xlane.f32.xlu0 %v1527
  %v1529 = vpop.xlane.xlu0 %1528
  %v1530 = vsel %vm335, %v1520, 0.0
  %1531 = vadd.xlane.f32.xlu0 %v1530
  %v1532 = vpop.xlane.xlu0 %1531
  %v1533 = vsel %vm335, %v1521, 0.0
  %1534 = vadd.xlane.f32.xlu0 %v1533
  %v1535 = vpop.xlane.xlu0 %1534
  %v1536 = vsel %vm335, %v1522, 0.0
  %1537 = vadd.xlane.f32.xlu0 %v1536
  %v1538 = vpop.xlane.xlu0 %1537
  %v1539 = vsel %vm335, %v1523, 0.0
  %1540 = vadd.xlane.f32.xlu0 %v1539
  %v1541 = vpop.xlane.xlu0 %1540
  %v1542 = vsel %vm335, %v1524, 0.0
  %1543 = vadd.xlane.f32.xlu0 %v1542
  %v1544 = vpop.xlane.xlu0 %1543
  %v1545 = vsel %vm335, %v1525, 0.0
  %1546 = vadd.xlane.f32.xlu0 %v1545
  %v1547 = vpop.xlane.xlu0 %1546
  %v1548 = vsel %vm335, %v1526, 0.0
  %1549 = vadd.xlane.f32.xlu0 %v1548
  %v1550 = vpop.xlane.xlu0 %1549
  %v1551 = vmul.f32 %v1529, %v587
  %v1552 = vmul.f32 %v1532, %v587
  %v1553 = vmul.f32 %v1535, %v587
  %v1554 = vmul.f32 %v1538, %v587
  %v1555 = vmul.f32 %v1541, %v587
  %v1556 = vmul.f32 %v1544, %v587
  %v1557 = vmul.f32 %v1547, %v587
  %v1558 = vmul.f32 %v1550, %v587
  %v1559 = vadd.f32 %v1551, 1e-05
  %v1560 = vadd.f32 %v1552, 1e-05
  %v1561 = vadd.f32 %v1553, 1e-05
  %v1562 = vadd.f32 %v1554, 1e-05
  %v1563 = vadd.f32 %v1555, 1e-05
  %v1564 = vadd.f32 %v1556, 1e-05
  %v1565 = vadd.f32 %v1557, 1e-05
  %v1566 = vadd.f32 %v1558, 1e-05
  %v1567 = vrsqrt.pop %v1559
  %v1568 = vmul.f32 %v1567, %v1559
  %v1569 = vmul.f32 %v1568, %v1567
  %v1570 = vmul.f32 0.5, %v1569
  %v1571 = vsub.f32 1.5, %v1570
  %v1572 = vmul.f32 %v1567, %v1571
  %vm1573 = vweird.f32 %v1559
  %vm1574 = vweird.f32 %v1567
  %vm1575 = vmor %vm1573, %vm1574
  %v1576 = vsel %vm1575, %v1567, %v1572
  %v1577 = vrsqrt.pop %v1560
  %v1578 = vmul.f32 %v1577, %v1560
  %v1579 = vmul.f32 %v1578, %v1577
  %v1580 = vmul.f32 0.5, %v1579
  %v1581 = vsub.f32 1.5, %v1580
  %v1582 = vmul.f32 %v1577, %v1581
  %vm1583 = vweird.f32 %v1560
  %vm1584 = vweird.f32 %v1577
  %vm1585 = vmor %vm1583, %vm1584
  %v1586 = vsel %vm1585, %v1577, %v1582
  %v1587 = vrsqrt.pop %v1561
  %v1588 = vmul.f32 %v1587, %v1561
  %v1589 = vmul.f32 %v1588, %v1587
  %v1590 = vmul.f32 0.5, %v1589
  %v1591 = vsub.f32 1.5, %v1590
  %v1592 = vmul.f32 %v1587, %v1591
  %vm1593 = vweird.f32 %v1561
  %vm1594 = vweird.f32 %v1587
  %vm1595 = vmor %vm1593, %vm1594
  %v1596 = vsel %vm1595, %v1587, %v1592
  %v1597 = vrsqrt.pop %v1562
  %v1598 = vmul.f32 %v1597, %v1562
  %v1599 = vmul.f32 %v1598, %v1597
  %v1600 = vmul.f32 0.5, %v1599
  %v1601 = vsub.f32 1.5, %v1600
  %v1602 = vmul.f32 %v1597, %v1601
  %vm1603 = vweird.f32 %v1562
  %vm1604 = vweird.f32 %v1597
  %vm1605 = vmor %vm1603, %vm1604
  %v1606 = vsel %vm1605, %v1597, %v1602
  %v1607 = vrsqrt.pop %v1563
  %v1608 = vmul.f32 %v1607, %v1563
  %v1609 = vmul.f32 %v1608, %v1607
  %v1610 = vmul.f32 0.5, %v1609
  %v1611 = vsub.f32 1.5, %v1610
  %v1612 = vmul.f32 %v1607, %v1611
  %vm1613 = vweird.f32 %v1563
  %vm1614 = vweird.f32 %v1607
  %vm1615 = vmor %vm1613, %vm1614
  %v1616 = vsel %vm1615, %v1607, %v1612
  %v1617 = vrsqrt.pop %v1564
  %v1618 = vmul.f32 %v1617, %v1564
  %v1619 = vmul.f32 %v1618, %v1617
  %v1620 = vmul.f32 0.5, %v1619
  %v1621 = vsub.f32 1.5, %v1620
  %v1622 = vmul.f32 %v1617, %v1621
  %vm1623 = vweird.f32 %v1564
  %vm1624 = vweird.f32 %v1617
  %vm1625 = vmor %vm1623, %vm1624
  %v1626 = vsel %vm1625, %v1617, %v1622
  %v1627 = vrsqrt.pop %v1565
  %v1628 = vmul.f32 %v1627, %v1565
  %v1629 = vmul.f32 %v1628, %v1627
  %v1630 = vmul.f32 0.5, %v1629
  %v1631 = vsub.f32 1.5, %v1630
  %v1632 = vmul.f32 %v1627, %v1631
  %vm1633 = vweird.f32 %v1565
  %vm1634 = vweird.f32 %v1627
  %vm1635 = vmor %vm1633, %vm1634
  %v1636 = vsel %vm1635, %v1627, %v1632
  %v1637 = vrsqrt.pop %v1566
  %v1638 = vmul.f32 %v1637, %v1566
  %v1639 = vmul.f32 %v1638, %v1637
  %v1640 = vmul.f32 0.5, %v1639
  %v1641 = vsub.f32 1.5, %v1640
  %v1642 = vmul.f32 %v1637, %v1641
  %vm1643 = vweird.f32 %v1566
  %vm1644 = vweird.f32 %v1637
  %vm1645 = vmor %vm1643, %vm1644
  %v1646 = vsel %vm1645, %v1637, %v1642
  %v1647 = vmul.f32 %v1511, %v1576
  %v1648 = vmul.f32 %v1512, %v1586
  %v1649 = vmul.f32 %v1513, %v1596
  %v1650 = vmul.f32 %v1514, %v1606
  %v1651 = vmul.f32 %v1515, %v1616
  %v1652 = vmul.f32 %v1516, %v1626
  %v1653 = vmul.f32 %v1517, %v1636
  %v1654 = vmul.f32 %v1518, %v1646
  %v1655 = vld [vmem:[%s12] sm:$0xf]
  %v1656 = vld [vmem:[%s12 + $0x4] sm:$0xf]
  %v1657 = vld [vmem:[%s12 + $0x8] sm:$0xf]
  %v1658 = vld [vmem:[%s12 + $0xc] sm:$0xf]
  %v1659 = vpack.c.bf16 %v1648, %v1647
  %v1660 = vpack.c.bf16 %v1650, %v1649
  %v1661 = vpack.c.bf16 %v1652, %v1651
  %v1662 = vpack.c.bf16 %v1654, %v1653
  %v1667 = vunpack.c.l.b16 %v1655
  %v1668 = vunpack.c.l.b16 %v1656
  %v1669 = vunpack.c.l.b16 %v1657
  %v1670 = vunpack.c.l.b16 %v1658
  %v1671 = vpack.c.b16 %v1668, %v1667
  %v1672 = vpack.c.b16 %v1670, %v1669
  %v1676 = vsel %vm335, %v1659, 0
  %v1679 = vsel %vm335, %v1660, 0
  %v1682 = vsel %vm335, %v1661, 0
  %v1685 = vsel %vm335, %v1662, 0
  %1687 = vmatpush.bf16.msra.mxu0 0
  %1688 = vmatpush.bf16.msra.mxu0 0
  %1689 = vmatpush.bf16.msra.mxu0 0
  %1690 = vmatpush.bf16.msra.mxu0 0
  %1691 = vmatpush.bf16.msra.mxu0 0
  %1692 = vmatpush.bf16.msra.mxu0 0
  %1693 = vmatpush.bf16.msra.mxu0 %v1672
  %1694 = vmatpush.bf16.msra.mxu0 %v1671
  %1695 = vmatmul.bf16.gmra.mxu0 %v1676
  %v1696 = vpop.f32.mrf.mxu0
  %v1697 = vadd.f32 0.0, %v1696
  %v1698 = vpop.f32.mrf.mxu0
  %v1699 = vadd.f32 0.0, %v1698
  %1700 = vmatmul.bf16.gmra.mxu0 %v1679
  %v1701 = vpop.f32.mrf.mxu0
  %v1702 = vadd.f32 0.0, %v1701
  %v1703 = vpop.f32.mrf.mxu0
  %v1704 = vadd.f32 0.0, %v1703
  %1705 = vmatmul.bf16.gmra.mxu0 %v1682
  %v1706 = vpop.f32.mrf.mxu0
  %v1707 = vadd.f32 0.0, %v1706
  %v1708 = vpop.f32.mrf.mxu0
  %v1709 = vadd.f32 0.0, %v1708
  %1710 = vmatmul.bf16.gmra.mxu0 %v1685
  %v1711 = vpop.f32.mrf.mxu0
  %v1712 = vadd.f32 0.0, %v1711
  %v1713 = vpop.f32.mrf.mxu0
  %v1714 = vadd.f32 0.0, %v1713
  %1715 = vdwg.mxu0
  %v1716 = vld [vmem:[%s13] sm:$0xf]
  %v1717 = vld [vmem:[%s13 + $0x4] sm:$0xf]
  %v1718 = vld [vmem:[%s13 + $0x8] sm:$0xf]
  %v1719 = vld [vmem:[%s13 + $0xc] sm:$0xf]
  %v1720 = vpack.c.bf16 %v859, %v858
  %v1721 = vpack.c.bf16 %v861, %v860
  %v1726 = vunpack.c.l.b16 %v1716
  %v1727 = vunpack.c.l.b16 %v1717
  %v1728 = vunpack.c.l.b16 %v1718
  %v1729 = vunpack.c.l.b16 %v1719
  %v1730 = vpack.c.b16 %v1727, %v1726
  %v1731 = vpack.c.b16 %v1729, %v1728
  %v1735 = vsel %vm335, %v1720, 0
  %v1738 = vsel %vm335, %v1721, 0
  %1740 = vmatpush.bf16.msra.mxu0 0
  %1741 = vmatpush.bf16.msra.mxu0 0
  %1742 = vmatpush.bf16.msra.mxu0 0
  %1743 = vmatpush.bf16.msra.mxu0 0
  %1744 = vmatpush.bf16.msra.mxu0 0
  %1745 = vmatpush.bf16.msra.mxu0 0
  %1746 = vmatpush.bf16.msra.mxu0 %v1731
  %1747 = vmatpush.bf16.msra.mxu0 %v1730
  %1748 = vmatmul.bf16.gmra.mxu0 %v1735
  %v1749 = vpop.f32.mrf.mxu0
  %v1750 = vadd.f32 0.0, %v1749
  %v1751 = vpop.f32.mrf.mxu0
  %v1752 = vadd.f32 0.0, %v1751
  %1753 = vmatmul.bf16.gmra.mxu0 %v1738
  %v1754 = vpop.f32.mrf.mxu0
  %v1755 = vadd.f32 0.0, %v1754
  %v1756 = vpop.f32.mrf.mxu0
  %v1757 = vadd.f32 0.0, %v1756
  %1758 = vdwg.mxu0
  %v1759 = vpack.c.bf16 %v1697, %v1697
  %v1760 = vpack.c.bf16 %v1699, %v1699
  %v1761 = vpack.c.bf16 %v1702, %v1702
  %v1762 = vpack.c.bf16 %v1704, %v1704
  %v1763 = vpack.c.bf16 %v1707, %v1707
  %v1764 = vpack.c.bf16 %v1709, %v1709
  %v1765 = vpack.c.bf16 %v1712, %v1712
  %v1766 = vpack.c.bf16 %v1714, %v1714
  %v1767 = vpack.c.bf16 %v1750, %v1750
  %v1768 = vpack.c.bf16 %v1752, %v1752
  %v1769 = vpack.c.bf16 %v1755, %v1755
  %v1770 = vpack.c.bf16 %v1757, %v1757
  %v1773 = vunpack.c.l.b16 %v1767
  %v1774 = vunpack.c.l.b16 %v1768
  %v1775 = vpack.c.b16 %v1774, %v1773
  %v1777 = vsel %vm335, %v1759, 0
  %v1780 = vsel %vm335, %v1775, 0
  %1782 = vmatpush.bf16.xpose.msra.mxu0 0
  %1783 = vmatpush.bf16.xpose.msra.mxu0 0
  %1784 = vmatpush.bf16.xpose.msra.mxu0 0
  %1785 = vmatpush.bf16.xpose.msra.mxu0 0
  %1786 = vmatpush.bf16.xpose.msra.mxu0 0
  %1787 = vmatpush.bf16.xpose.msra.mxu0 0
  %1788 = vmatpush.bf16.xpose.msra.mxu0 0
  %1789 = vmatpush.bf16.xpose.msra.mxu0 %v1780
  %1790 = vmatmul.bf16.gmra.mxu0 %v1777
  %v1791 = vpop.f32.mrf.mxu0
  %v1792 = vadd.f32 0.0, %v1791
  %v1793 = vpop.f32.mrf.mxu0
  %1794 = vdwg.mxu0
  %v1797 = vunpack.c.l.b16 %v1769
  %v1798 = vunpack.c.l.b16 %v1770
  %v1799 = vpack.c.b16 %v1798, %v1797
  %v1801 = vsel %vm335, %v1760, 0
  %v1804 = vsel %vm335, %v1799, 0
  %1806 = vmatpush.bf16.xpose.msra.mxu0 0
  %1807 = vmatpush.bf16.xpose.msra.mxu0 0
  %1808 = vmatpush.bf16.xpose.msra.mxu0 0
  %1809 = vmatpush.bf16.xpose.msra.mxu0 0
  %1810 = vmatpush.bf16.xpose.msra.mxu0 0
  %1811 = vmatpush.bf16.xpose.msra.mxu0 0
  %1812 = vmatpush.bf16.xpose.msra.mxu0 0
  %1813 = vmatpush.bf16.xpose.msra.mxu0 %v1804
  %1814 = vmatmul.bf16.gmra.mxu0 %v1801
  %v1815 = vpop.f32.mrf.mxu0
  %v1816 = vadd.f32 0.0, %v1815
  %v1817 = vpop.f32.mrf.mxu0
  %1818 = vdwg.mxu0
  %v1820 = vsel %vm335, %v1761, 0
  %1822 = vmatpush.bf16.xpose.msra.mxu0 0
  %1823 = vmatpush.bf16.xpose.msra.mxu0 0
  %1824 = vmatpush.bf16.xpose.msra.mxu0 0
  %1825 = vmatpush.bf16.xpose.msra.mxu0 0
  %1826 = vmatpush.bf16.xpose.msra.mxu0 0
  %1827 = vmatpush.bf16.xpose.msra.mxu0 0
  %1828 = vmatpush.bf16.xpose.msra.mxu0 0
  %1829 = vmatpush.bf16.xpose.msra.mxu0 %v1780
  %1830 = vmatmul.bf16.gmra.mxu0 %v1820
  %v1831 = vpop.f32.mrf.mxu0
  %v1832 = vadd.f32 0.0, %v1831
  %v1833 = vpop.f32.mrf.mxu0
  %1834 = vdwg.mxu0
  %v1836 = vsel %vm335, %v1762, 0
  %1838 = vmatpush.bf16.xpose.msra.mxu0 0
  %1839 = vmatpush.bf16.xpose.msra.mxu0 0
  %1840 = vmatpush.bf16.xpose.msra.mxu0 0
  %1841 = vmatpush.bf16.xpose.msra.mxu0 0
  %1842 = vmatpush.bf16.xpose.msra.mxu0 0
  %1843 = vmatpush.bf16.xpose.msra.mxu0 0
  %1844 = vmatpush.bf16.xpose.msra.mxu0 0
  %1845 = vmatpush.bf16.xpose.msra.mxu0 %v1804
  %1846 = vmatmul.bf16.gmra.mxu0 %v1836
  %v1847 = vpop.f32.mrf.mxu0
  %v1848 = vadd.f32 0.0, %v1847
  %v1849 = vpop.f32.mrf.mxu0
  %1850 = vdwg.mxu0
  %v1852 = vsel %vm335, %v1763, 0
  %1854 = vmatpush.bf16.xpose.msra.mxu0 0
  %1855 = vmatpush.bf16.xpose.msra.mxu0 0
  %1856 = vmatpush.bf16.xpose.msra.mxu0 0
  %1857 = vmatpush.bf16.xpose.msra.mxu0 0
  %1858 = vmatpush.bf16.xpose.msra.mxu0 0
  %1859 = vmatpush.bf16.xpose.msra.mxu0 0
  %1860 = vmatpush.bf16.xpose.msra.mxu0 0
  %1861 = vmatpush.bf16.xpose.msra.mxu0 %v1780
  %1862 = vmatmul.bf16.gmra.mxu0 %v1852
  %v1863 = vpop.f32.mrf.mxu0
  %v1864 = vadd.f32 0.0, %v1863
  %v1865 = vpop.f32.mrf.mxu0
  %1866 = vdwg.mxu0
  %v1868 = vsel %vm335, %v1764, 0
  %1870 = vmatpush.bf16.xpose.msra.mxu0 0
  %1871 = vmatpush.bf16.xpose.msra.mxu0 0
  %1872 = vmatpush.bf16.xpose.msra.mxu0 0
  %1873 = vmatpush.bf16.xpose.msra.mxu0 0
  %1874 = vmatpush.bf16.xpose.msra.mxu0 0
  %1875 = vmatpush.bf16.xpose.msra.mxu0 0
  %1876 = vmatpush.bf16.xpose.msra.mxu0 0
  %1877 = vmatpush.bf16.xpose.msra.mxu0 %v1804
  %1878 = vmatmul.bf16.gmra.mxu0 %v1868
  %v1879 = vpop.f32.mrf.mxu0
  %v1880 = vadd.f32 0.0, %v1879
  %v1881 = vpop.f32.mrf.mxu0
  %1882 = vdwg.mxu0
  %v1884 = vsel %vm335, %v1765, 0
  %1886 = vmatpush.bf16.xpose.msra.mxu0 0
  %1887 = vmatpush.bf16.xpose.msra.mxu0 0
  %1888 = vmatpush.bf16.xpose.msra.mxu0 0
  %1889 = vmatpush.bf16.xpose.msra.mxu0 0
  %1890 = vmatpush.bf16.xpose.msra.mxu0 0
  %1891 = vmatpush.bf16.xpose.msra.mxu0 0
  %1892 = vmatpush.bf16.xpose.msra.mxu0 0
  %1893 = vmatpush.bf16.xpose.msra.mxu0 %v1780
  %1894 = vmatmul.bf16.gmra.mxu0 %v1884
  %v1895 = vpop.f32.mrf.mxu0
  %v1896 = vadd.f32 0.0, %v1895
  %v1897 = vpop.f32.mrf.mxu0
  %1898 = vdwg.mxu0
  %v1900 = vsel %vm335, %v1766, 0
  %1902 = vmatpush.bf16.xpose.msra.mxu0 0
  %1903 = vmatpush.bf16.xpose.msra.mxu0 0
  %1904 = vmatpush.bf16.xpose.msra.mxu0 0
  %1905 = vmatpush.bf16.xpose.msra.mxu0 0
  %1906 = vmatpush.bf16.xpose.msra.mxu0 0
  %1907 = vmatpush.bf16.xpose.msra.mxu0 0
  %1908 = vmatpush.bf16.xpose.msra.mxu0 0
  %1909 = vmatpush.bf16.xpose.msra.mxu0 %v1804
  %1910 = vmatmul.bf16.gmra.mxu0 %v1900
  %v1911 = vpop.f32.mrf.mxu0
  %v1912 = vadd.f32 0.0, %v1911
  %v1913 = vpop.f32.mrf.mxu0
  %1914 = vdwg.mxu0
  %v1915 = vmul.f32 %v1792, 0.17677669
  %v1916 = vmul.f32 %v1816, 0.17677669
  %v1917 = vmul.f32 %v1832, 0.17677669
  %v1918 = vmul.f32 %v1848, 0.17677669
  %v1919 = vmul.f32 %v1864, 0.17677669
  %v1920 = vmul.f32 %v1880, 0.17677669
  %v1921 = vmul.f32 %v1896, 0.17677669
  %v1922 = vmul.f32 %v1912, 0.17677669
  %v1923 = vsel %vm423, %v1915, -inf
  %1924 = vmax.xlane.f32.xlu0 %v1923
  %v1925 = vpop.xlane.xlu0 %1924
  %v1926 = vsel %vm423, %v1916, -inf
  %1927 = vmax.xlane.f32.xlu0 %v1926
  %v1928 = vpop.xlane.xlu0 %1927
  %v1929 = vsel %vm423, %v1917, -inf
  %1930 = vmax.xlane.f32.xlu0 %v1929
  %v1931 = vpop.xlane.xlu0 %1930
  %v1932 = vsel %vm423, %v1918, -inf
  %1933 = vmax.xlane.f32.xlu0 %v1932
  %v1934 = vpop.xlane.xlu0 %1933
  %v1935 = vsel %vm423, %v1919, -inf
  %1936 = vmax.xlane.f32.xlu0 %v1935
  %v1937 = vpop.xlane.xlu0 %1936
  %v1938 = vsel %vm423, %v1920, -inf
  %1939 = vmax.xlane.f32.xlu0 %v1938
  %v1940 = vpop.xlane.xlu0 %1939
  %v1941 = vsel %vm423, %v1921, -inf
  %1942 = vmax.xlane.f32.xlu0 %v1941
  %v1943 = vpop.xlane.xlu0 %1942
  %v1944 = vsel %vm423, %v1922, -inf
  %1945 = vmax.xlane.f32.xlu0 %v1944
  %v1946 = vpop.xlane.xlu0 %1945
  %v1947 = vsub.f32 %v1915, %v1925
  %v1948 = vsub.f32 %v1916, %v1928
  %v1949 = vsub.f32 %v1917, %v1931
  %v1950 = vsub.f32 %v1918, %v1934
  %v1951 = vsub.f32 %v1919, %v1937
  %v1952 = vsub.f32 %v1920, %v1940
  %v1953 = vsub.f32 %v1921, %v1943
  %v1954 = vsub.f32 %v1922, %v1946
  %v1955 = vmul.f32 %v1947, 1.442695
  %v1956 = vpow.pop %v1955
  %v1957 = vmul.f32 %v1948, 1.442695
  %v1958 = vpow.pop %v1957
  %v1959 = vmul.f32 %v1949, 1.442695
  %v1960 = vpow.pop %v1959
  %v1961 = vmul.f32 %v1950, 1.442695
  %v1962 = vpow.pop %v1961
  %v1963 = vmul.f32 %v1951, 1.442695
  %v1964 = vpow.pop %v1963
  %v1965 = vmul.f32 %v1952, 1.442695
  %v1966 = vpow.pop %v1965
  %v1967 = vmul.f32 %v1953, 1.442695
  %v1968 = vpow.pop %v1967
  %v1969 = vmul.f32 %v1954, 1.442695
  %v1970 = vpow.pop %v1969
  %v1971 = vsel %vm423, %v1956, 0.0
  %1972 = vadd.xlane.f32.xlu0 %v1971
  %v1973 = vpop.xlane.xlu0 %1972
  %v1974 = vsel %vm423, %v1958, 0.0
  %1975 = vadd.xlane.f32.xlu0 %v1974
  %v1976 = vpop.xlane.xlu0 %1975
  %v1977 = vsel %vm423, %v1960, 0.0
  %1978 = vadd.xlane.f32.xlu0 %v1977
  %v1979 = vpop.xlane.xlu0 %1978
  %v1980 = vsel %vm423, %v1962, 0.0
  %1981 = vadd.xlane.f32.xlu0 %v1980
  %v1982 = vpop.xlane.xlu0 %1981
  %v1983 = vsel %vm423, %v1964, 0.0
  %1984 = vadd.xlane.f32.xlu0 %v1983
  %v1985 = vpop.xlane.xlu0 %1984
  %v1986 = vsel %vm423, %v1966, 0.0
  %1987 = vadd.xlane.f32.xlu0 %v1986
  %v1988 = vpop.xlane.xlu0 %1987
  %v1989 = vsel %vm423, %v1968, 0.0
  %1990 = vadd.xlane.f32.xlu0 %v1989
  %v1991 = vpop.xlane.xlu0 %1990
  %v1992 = vsel %vm423, %v1970, 0.0
  %1993 = vadd.xlane.f32.xlu0 %v1992
  %v1994 = vpop.xlane.xlu0 %1993
  %v1995 = vrcp.pop %v1973
  %v1996 = vrcp.pop %v1976
  %v1997 = vrcp.pop %v1979
  %v1998 = vrcp.pop %v1982
  %v1999 = vrcp.pop %v1985
  %v2000 = vrcp.pop %v1988
  %v2001 = vrcp.pop %v1991
  %v2002 = vrcp.pop %v1994
  %v2003 = vmul.f32 %v1956, %v1995
  %v2004 = vmul.f32 %v1958, %v1996
  %v2005 = vmul.f32 %v1960, %v1997
  %v2006 = vmul.f32 %v1962, %v1998
  %v2007 = vmul.f32 %v1964, %v1999
  %v2008 = vmul.f32 %v1966, %v2000
  %v2009 = vmul.f32 %v1968, %v2001
  %v2010 = vmul.f32 %v1970, %v2002
  %v2011 = vpack.c.bf16 %v2003, %v2003
  %v2012 = vpack.c.bf16 %v2004, %v2004
  %v2013 = vpack.c.bf16 %v2005, %v2005
  %v2014 = vpack.c.bf16 %v2006, %v2006
  %v2015 = vpack.c.bf16 %v2007, %v2007
  %v2016 = vpack.c.bf16 %v2008, %v2008
  %v2017 = vpack.c.bf16 %v2009, %v2009
  %v2018 = vpack.c.bf16 %v2010, %v2010
  %2019 = vrot.lane.b32.xlu0 %v1775, 96
  %v2020 = vpop.permute.xlu0 %2019
  %v2023 = vsel %vm423, %v2011, 0
  %2025 = vmatpush.bf16.msra.mxu0 0
  %2026 = vmatpush.bf16.msra.mxu0 0
  %2027 = vmatpush.bf16.msra.mxu0 0
  %2028 = vmatpush.bf16.msra.mxu0 0
  %2029 = vmatpush.bf16.msra.mxu0 0
  %2030 = vmatpush.bf16.msra.mxu0 0
  %2031 = vmatpush.bf16.msra.mxu0 0
  %2032 = vmatpush.bf16.msra.mxu0 %v2020
  %2033 = vmatmul.bf16.gmra.mxu0 %v2023
  %v2034 = vpop.f32.mrf.mxu0
  %v2035 = vadd.f32 0.0, %v2034
  %v2036 = vpop.f32.mrf.mxu0
  %2037 = vdwg.mxu0
  %2038 = vrot.lane.b32.xlu0 %v1799, 96
  %v2039 = vpop.permute.xlu0 %2038
  %v2042 = vsel %vm423, %v2012, 0
  %2044 = vmatpush.bf16.msra.mxu0 0
  %2045 = vmatpush.bf16.msra.mxu0 0
  %2046 = vmatpush.bf16.msra.mxu0 0
  %2047 = vmatpush.bf16.msra.mxu0 0
  %2048 = vmatpush.bf16.msra.mxu0 0
  %2049 = vmatpush.bf16.msra.mxu0 0
  %2050 = vmatpush.bf16.msra.mxu0 0
  %2051 = vmatpush.bf16.msra.mxu0 %v2039
  %2052 = vmatmul.bf16.gmra.mxu0 %v2042
  %v2053 = vpop.f32.mrf.mxu0
  %v2054 = vadd.f32 0.0, %v2053
  %v2055 = vpop.f32.mrf.mxu0
  %2056 = vdwg.mxu0
  %v2058 = vsel %vm423, %v2013, 0
  %2060 = vmatpush.bf16.msra.mxu0 0
  %2061 = vmatpush.bf16.msra.mxu0 0
  %2062 = vmatpush.bf16.msra.mxu0 0
  %2063 = vmatpush.bf16.msra.mxu0 0
  %2064 = vmatpush.bf16.msra.mxu0 0
  %2065 = vmatpush.bf16.msra.mxu0 0
  %2066 = vmatpush.bf16.msra.mxu0 0
  %2067 = vmatpush.bf16.msra.mxu0 %v2020
  %2068 = vmatmul.bf16.gmra.mxu0 %v2058
  %v2069 = vpop.f32.mrf.mxu0
  %v2070 = vadd.f32 0.0, %v2069
  %v2071 = vpop.f32.mrf.mxu0
  %2072 = vdwg.mxu0
  %v2074 = vsel %vm423, %v2014, 0
  %2076 = vmatpush.bf16.msra.mxu0 0
  %2077 = vmatpush.bf16.msra.mxu0 0
  %2078 = vmatpush.bf16.msra.mxu0 0
  %2079 = vmatpush.bf16.msra.mxu0 0
  %2080 = vmatpush.bf16.msra.mxu0 0
  %2081 = vmatpush.bf16.msra.mxu0 0
  %2082 = vmatpush.bf16.msra.mxu0 0
  %2083 = vmatpush.bf16.msra.mxu0 %v2039
  %2084 = vmatmul.bf16.gmra.mxu0 %v2074
  %v2085 = vpop.f32.mrf.mxu0
  %v2086 = vadd.f32 0.0, %v2085
  %v2087 = vpop.f32.mrf.mxu0
  %2088 = vdwg.mxu0
  %v2090 = vsel %vm423, %v2015, 0
  %2092 = vmatpush.bf16.msra.mxu0 0
  %2093 = vmatpush.bf16.msra.mxu0 0
  %2094 = vmatpush.bf16.msra.mxu0 0
  %2095 = vmatpush.bf16.msra.mxu0 0
  %2096 = vmatpush.bf16.msra.mxu0 0
  %2097 = vmatpush.bf16.msra.mxu0 0
  %2098 = vmatpush.bf16.msra.mxu0 0
  %2099 = vmatpush.bf16.msra.mxu0 %v2020
  %2100 = vmatmul.bf16.gmra.mxu0 %v2090
  %v2101 = vpop.f32.mrf.mxu0
  %v2102 = vadd.f32 0.0, %v2101
  %v2103 = vpop.f32.mrf.mxu0
  %2104 = vdwg.mxu0
  %v2106 = vsel %vm423, %v2016, 0
  %2108 = vmatpush.bf16.msra.mxu0 0
  %2109 = vmatpush.bf16.msra.mxu0 0
  %2110 = vmatpush.bf16.msra.mxu0 0
  %2111 = vmatpush.bf16.msra.mxu0 0
  %2112 = vmatpush.bf16.msra.mxu0 0
  %2113 = vmatpush.bf16.msra.mxu0 0
  %2114 = vmatpush.bf16.msra.mxu0 0
  %2115 = vmatpush.bf16.msra.mxu0 %v2039
  %2116 = vmatmul.bf16.gmra.mxu0 %v2106
  %v2117 = vpop.f32.mrf.mxu0
  %v2118 = vadd.f32 0.0, %v2117
  %v2119 = vpop.f32.mrf.mxu0
  %2120 = vdwg.mxu0
  %v2122 = vsel %vm423, %v2017, 0
  %2124 = vmatpush.bf16.msra.mxu0 0
  %2125 = vmatpush.bf16.msra.mxu0 0
  %2126 = vmatpush.bf16.msra.mxu0 0
  %2127 = vmatpush.bf16.msra.mxu0 0
  %2128 = vmatpush.bf16.msra.mxu0 0
  %2129 = vmatpush.bf16.msra.mxu0 0
  %2130 = vmatpush.bf16.msra.mxu0 0
  %2131 = vmatpush.bf16.msra.mxu0 %v2020
  %2132 = vmatmul.bf16.gmra.mxu0 %v2122
  %v2133 = vpop.f32.mrf.mxu0
  %v2134 = vadd.f32 0.0, %v2133
  %v2135 = vpop.f32.mrf.mxu0
  %2136 = vdwg.mxu0
  %v2138 = vsel %vm423, %v2018, 0
  %2140 = vmatpush.bf16.msra.mxu0 0
  %2141 = vmatpush.bf16.msra.mxu0 0
  %2142 = vmatpush.bf16.msra.mxu0 0
  %2143 = vmatpush.bf16.msra.mxu0 0
  %2144 = vmatpush.bf16.msra.mxu0 0
  %2145 = vmatpush.bf16.msra.mxu0 0
  %2146 = vmatpush.bf16.msra.mxu0 0
  %2147 = vmatpush.bf16.msra.mxu0 %v2039
  %2148 = vmatmul.bf16.gmra.mxu0 %v2138
  %v2149 = vpop.f32.mrf.mxu0
  %v2150 = vadd.f32 0.0, %v2149
  %v2151 = vpop.f32.mrf.mxu0
  %2152 = vdwg.mxu0
  %v2153 = vld [vmem:[%s14] sm:$0xf]
  %v2154 = vld [vmem:[%s14 + $0x4] sm:$0xf]
  %v2155 = vld [vmem:[%s14 + $0x8] sm:$0xf]
  %v2156 = vld [vmem:[%s14 + $0xc] sm:$0xf]
  %v2157 = vpack.c.bf16 %v2054, %v2035
  %v2158 = vpack.c.bf16 %v2086, %v2070
  %v2159 = vpack.c.bf16 %v2118, %v2102
  %v2160 = vpack.c.bf16 %v2150, %v2134
  %v2165 = vunpack.c.l.b16 %v2153
  %v2166 = vunpack.c.l.b16 %v2154
  %v2167 = vunpack.c.l.b16 %v2155
  %v2168 = vunpack.c.l.b16 %v2156
  %v2169 = vpack.c.b16 %v2166, %v2165
  %v2170 = vpack.c.b16 %v2168, %v2167
  %v2174 = vsel %vm335, %v2157, 0
  %v2177 = vsel %vm335, %v2158, 0
  %v2180 = vsel %vm335, %v2159, 0
  %v2183 = vsel %vm335, %v2160, 0
  %2185 = vmatpush.bf16.msra.mxu0 0
  %2186 = vmatpush.bf16.msra.mxu0 0
  %2187 = vmatpush.bf16.msra.mxu0 0
  %2188 = vmatpush.bf16.msra.mxu0 0
  %2189 = vmatpush.bf16.msra.mxu0 0
  %2190 = vmatpush.bf16.msra.mxu0 0
  %2191 = vmatpush.bf16.msra.mxu0 %v2170
  %2192 = vmatpush.bf16.msra.mxu0 %v2169
  %2193 = vmatmul.bf16.gmra.mxu0 %v2174
  %v2194 = vpop.f32.mrf.mxu0
  %v2195 = vadd.f32 0.0, %v2194
  %v2196 = vpop.f32.mrf.mxu0
  %v2197 = vadd.f32 0.0, %v2196
  %2198 = vmatmul.bf16.gmra.mxu0 %v2177
  %v2199 = vpop.f32.mrf.mxu0
  %v2200 = vadd.f32 0.0, %v2199
  %v2201 = vpop.f32.mrf.mxu0
  %v2202 = vadd.f32 0.0, %v2201
  %2203 = vmatmul.bf16.gmra.mxu0 %v2180
  %v2204 = vpop.f32.mrf.mxu0
  %v2205 = vadd.f32 0.0, %v2204
  %v2206 = vpop.f32.mrf.mxu0
  %v2207 = vadd.f32 0.0, %v2206
  %2208 = vmatmul.bf16.gmra.mxu0 %v2183
  %v2209 = vpop.f32.mrf.mxu0
  %v2210 = vadd.f32 0.0, %v2209
  %v2211 = vpop.f32.mrf.mxu0
  %v2212 = vadd.f32 0.0, %v2211
  %2213 = vdwg.mxu0
  %v2214 = vadd.f32 %v1647, %v2195
  %v2215 = vadd.f32 %v1648, %v2197
  %v2216 = vadd.f32 %v1649, %v2200
  %v2217 = vadd.f32 %v1650, %v2202
  %v2218 = vadd.f32 %v1651, %v2205
  %v2219 = vadd.f32 %v1652, %v2207
  %v2220 = vadd.f32 %v1653, %v2210
  %v2221 = vadd.f32 %v1654, %v2212
  %v2222 = vsel %vm335, %v2214, 0.0
  %2223 = vadd.xlane.f32.xlu0 %v2222
  %v2224 = vpop.xlane.xlu0 %2223
  %v2225 = vsel %vm335, %v2215, 0.0
  %2226 = vadd.xlane.f32.xlu0 %v2225
  %v2227 = vpop.xlane.xlu0 %2226
  %v2228 = vsel %vm335, %v2216, 0.0
  %2229 = vadd.xlane.f32.xlu0 %v2228
  %v2230 = vpop.xlane.xlu0 %2229
  %v2231 = vsel %vm335, %v2217, 0.0
  %2232 = vadd.xlane.f32.xlu0 %v2231
  %v2233 = vpop.xlane.xlu0 %2232
  %v2234 = vsel %vm335, %v2218, 0.0
  %2235 = vadd.xlane.f32.xlu0 %v2234
  %v2236 = vpop.xlane.xlu0 %2235
  %v2237 = vsel %vm335, %v2219, 0.0
  %2238 = vadd.xlane.f32.xlu0 %v2237
  %v2239 = vpop.xlane.xlu0 %2238
  %v2240 = vsel %vm335, %v2220, 0.0
  %2241 = vadd.xlane.f32.xlu0 %v2240
  %v2242 = vpop.xlane.xlu0 %2241
  %v2243 = vsel %vm335, %v2221, 0.0
  %2244 = vadd.xlane.f32.xlu0 %v2243
  %v2245 = vpop.xlane.xlu0 %2244
  %v2246 = vmul.f32 %v2224, %v587
  %v2247 = vmul.f32 %v2227, %v587
  %v2248 = vmul.f32 %v2230, %v587
  %v2249 = vmul.f32 %v2233, %v587
  %v2250 = vmul.f32 %v2236, %v587
  %v2251 = vmul.f32 %v2239, %v587
  %v2252 = vmul.f32 %v2242, %v587
  %v2253 = vmul.f32 %v2245, %v587
  %v2254 = vsub.f32 %v2214, %v2246
  %v2255 = vsub.f32 %v2215, %v2247
  %v2256 = vsub.f32 %v2216, %v2248
  %v2257 = vsub.f32 %v2217, %v2249
  %v2258 = vsub.f32 %v2218, %v2250
  %v2259 = vsub.f32 %v2219, %v2251
  %v2260 = vsub.f32 %v2220, %v2252
  %v2261 = vsub.f32 %v2221, %v2253
  %v2262 = vmul.f32 %v2254, %v2254
  %v2263 = vmul.f32 %v2255, %v2255
  %v2264 = vmul.f32 %v2256, %v2256
  %v2265 = vmul.f32 %v2257, %v2257
  %v2266 = vmul.f32 %v2258, %v2258
  %v2267 = vmul.f32 %v2259, %v2259
  %v2268 = vmul.f32 %v2260, %v2260
  %v2269 = vmul.f32 %v2261, %v2261
  %v2270 = vsel %vm335, %v2262, 0.0
  %2271 = vadd.xlane.f32.xlu0 %v2270
  %v2272 = vpop.xlane.xlu0 %2271
  %v2273 = vsel %vm335, %v2263, 0.0
  %2274 = vadd.xlane.f32.xlu0 %v2273
  %v2275 = vpop.xlane.xlu0 %2274
  %v2276 = vsel %vm335, %v2264, 0.0
  %2277 = vadd.xlane.f32.xlu0 %v2276
  %v2278 = vpop.xlane.xlu0 %2277
  %v2279 = vsel %vm335, %v2265, 0.0
  %2280 = vadd.xlane.f32.xlu0 %v2279
  %v2281 = vpop.xlane.xlu0 %2280
  %v2282 = vsel %vm335, %v2266, 0.0
  %2283 = vadd.xlane.f32.xlu0 %v2282
  %v2284 = vpop.xlane.xlu0 %2283
  %v2285 = vsel %vm335, %v2267, 0.0
  %2286 = vadd.xlane.f32.xlu0 %v2285
  %v2287 = vpop.xlane.xlu0 %2286
  %v2288 = vsel %vm335, %v2268, 0.0
  %2289 = vadd.xlane.f32.xlu0 %v2288
  %v2290 = vpop.xlane.xlu0 %2289
  %v2291 = vsel %vm335, %v2269, 0.0
  %2292 = vadd.xlane.f32.xlu0 %v2291
  %v2293 = vpop.xlane.xlu0 %2292
  %v2294 = vmul.f32 %v2272, %v587
  %v2295 = vmul.f32 %v2275, %v587
  %v2296 = vmul.f32 %v2278, %v587
  %v2297 = vmul.f32 %v2281, %v587
  %v2298 = vmul.f32 %v2284, %v587
  %v2299 = vmul.f32 %v2287, %v587
  %v2300 = vmul.f32 %v2290, %v587
  %v2301 = vmul.f32 %v2293, %v587
  %v2302 = vadd.f32 %v2294, 1e-05
  %v2303 = vadd.f32 %v2295, 1e-05
  %v2304 = vadd.f32 %v2296, 1e-05
  %v2305 = vadd.f32 %v2297, 1e-05
  %v2306 = vadd.f32 %v2298, 1e-05
  %v2307 = vadd.f32 %v2299, 1e-05
  %v2308 = vadd.f32 %v2300, 1e-05
  %v2309 = vadd.f32 %v2301, 1e-05
  %v2310 = vrsqrt.pop %v2302
  %v2311 = vmul.f32 %v2310, %v2302
  %v2312 = vmul.f32 %v2311, %v2310
  %v2313 = vmul.f32 0.5, %v2312
  %v2314 = vsub.f32 1.5, %v2313
  %v2315 = vmul.f32 %v2310, %v2314
  %vm2316 = vweird.f32 %v2302
  %vm2317 = vweird.f32 %v2310
  %vm2318 = vmor %vm2316, %vm2317
  %v2319 = vsel %vm2318, %v2310, %v2315
  %v2320 = vrsqrt.pop %v2303
  %v2321 = vmul.f32 %v2320, %v2303
  %v2322 = vmul.f32 %v2321, %v2320
  %v2323 = vmul.f32 0.5, %v2322
  %v2324 = vsub.f32 1.5, %v2323
  %v2325 = vmul.f32 %v2320, %v2324
  %vm2326 = vweird.f32 %v2303
  %vm2327 = vweird.f32 %v2320
  %vm2328 = vmor %vm2326, %vm2327
  %v2329 = vsel %vm2328, %v2320, %v2325
  %v2330 = vrsqrt.pop %v2304
  %v2331 = vmul.f32 %v2330, %v2304
  %v2332 = vmul.f32 %v2331, %v2330
  %v2333 = vmul.f32 0.5, %v2332
  %v2334 = vsub.f32 1.5, %v2333
  %v2335 = vmul.f32 %v2330, %v2334
  %vm2336 = vweird.f32 %v2304
  %vm2337 = vweird.f32 %v2330
  %vm2338 = vmor %vm2336, %vm2337
  %v2339 = vsel %vm2338, %v2330, %v2335
  %v2340 = vrsqrt.pop %v2305
  %v2341 = vmul.f32 %v2340, %v2305
  %v2342 = vmul.f32 %v2341, %v2340
  %v2343 = vmul.f32 0.5, %v2342
  %v2344 = vsub.f32 1.5, %v2343
  %v2345 = vmul.f32 %v2340, %v2344
  %vm2346 = vweird.f32 %v2305
  %vm2347 = vweird.f32 %v2340
  %vm2348 = vmor %vm2346, %vm2347
  %v2349 = vsel %vm2348, %v2340, %v2345
  %v2350 = vrsqrt.pop %v2306
  %v2351 = vmul.f32 %v2350, %v2306
  %v2352 = vmul.f32 %v2351, %v2350
  %v2353 = vmul.f32 0.5, %v2352
  %v2354 = vsub.f32 1.5, %v2353
  %v2355 = vmul.f32 %v2350, %v2354
  %vm2356 = vweird.f32 %v2306
  %vm2357 = vweird.f32 %v2350
  %vm2358 = vmor %vm2356, %vm2357
  %v2359 = vsel %vm2358, %v2350, %v2355
  %v2360 = vrsqrt.pop %v2307
  %v2361 = vmul.f32 %v2360, %v2307
  %v2362 = vmul.f32 %v2361, %v2360
  %v2363 = vmul.f32 0.5, %v2362
  %v2364 = vsub.f32 1.5, %v2363
  %v2365 = vmul.f32 %v2360, %v2364
  %vm2366 = vweird.f32 %v2307
  %vm2367 = vweird.f32 %v2360
  %vm2368 = vmor %vm2366, %vm2367
  %v2369 = vsel %vm2368, %v2360, %v2365
  %v2370 = vrsqrt.pop %v2308
  %v2371 = vmul.f32 %v2370, %v2308
  %v2372 = vmul.f32 %v2371, %v2370
  %v2373 = vmul.f32 0.5, %v2372
  %v2374 = vsub.f32 1.5, %v2373
  %v2375 = vmul.f32 %v2370, %v2374
  %vm2376 = vweird.f32 %v2308
  %vm2377 = vweird.f32 %v2370
  %vm2378 = vmor %vm2376, %vm2377
  %v2379 = vsel %vm2378, %v2370, %v2375
  %v2380 = vrsqrt.pop %v2309
  %v2381 = vmul.f32 %v2380, %v2309
  %v2382 = vmul.f32 %v2381, %v2380
  %v2383 = vmul.f32 0.5, %v2382
  %v2384 = vsub.f32 1.5, %v2383
  %v2385 = vmul.f32 %v2380, %v2384
  %vm2386 = vweird.f32 %v2309
  %vm2387 = vweird.f32 %v2380
  %vm2388 = vmor %vm2386, %vm2387
  %v2389 = vsel %vm2388, %v2380, %v2385
  %v2390 = vmul.f32 %v2254, %v2319
  %v2391 = vmul.f32 %v2255, %v2329
  %v2392 = vmul.f32 %v2256, %v2339
  %v2393 = vmul.f32 %v2257, %v2349
  %v2394 = vmul.f32 %v2258, %v2359
  %v2395 = vmul.f32 %v2259, %v2369
  %v2396 = vmul.f32 %v2260, %v2379
  %v2397 = vmul.f32 %v2261, %v2389
  %v2398 = vld [vmem:[%s15] sm:$0xf]
  %v2399 = vld [vmem:[%s15 + $0x4] sm:$0xf]
  %v2400 = vld [vmem:[%s15 + $0x8] sm:$0xf]
  %v2401 = vld [vmem:[%s15 + $0xc] sm:$0xf]
  %v2402 = vpack.c.bf16 %v2391, %v2390
  %v2403 = vpack.c.bf16 %v2393, %v2392
  %v2404 = vpack.c.bf16 %v2395, %v2394
  %v2405 = vpack.c.bf16 %v2397, %v2396
  %v2410 = vunpack.c.l.b16 %v2398
  %v2411 = vunpack.c.l.b16 %v2399
  %v2412 = vunpack.c.l.b16 %v2400
  %v2413 = vunpack.c.l.b16 %v2401
  %v2414 = vpack.c.b16 %v2411, %v2410
  %v2415 = vpack.c.b16 %v2413, %v2412
  %v2419 = vsel %vm335, %v2402, 0
  %v2422 = vsel %vm335, %v2403, 0
  %v2425 = vsel %vm335, %v2404, 0
  %v2428 = vsel %vm335, %v2405, 0
  %2430 = vmatpush.bf16.msra.mxu0 0
  %2431 = vmatpush.bf16.msra.mxu0 0
  %2432 = vmatpush.bf16.msra.mxu0 0
  %2433 = vmatpush.bf16.msra.mxu0 0
  %2434 = vmatpush.bf16.msra.mxu0 0
  %2435 = vmatpush.bf16.msra.mxu0 0
  %2436 = vmatpush.bf16.msra.mxu0 %v2415
  %2437 = vmatpush.bf16.msra.mxu0 %v2414
  %2438 = vmatmul.bf16.gmra.mxu0 %v2419
  %v2439 = vpop.f32.mrf.mxu0
  %v2440 = vadd.f32 0.0, %v2439
  %v2441 = vpop.f32.mrf.mxu0
  %v2442 = vadd.f32 0.0, %v2441
  %2443 = vmatmul.bf16.gmra.mxu0 %v2422
  %v2444 = vpop.f32.mrf.mxu0
  %v2445 = vadd.f32 0.0, %v2444
  %v2446 = vpop.f32.mrf.mxu0
  %v2447 = vadd.f32 0.0, %v2446
  %2448 = vmatmul.bf16.gmra.mxu0 %v2425
  %v2449 = vpop.f32.mrf.mxu0
  %v2450 = vadd.f32 0.0, %v2449
  %v2451 = vpop.f32.mrf.mxu0
  %v2452 = vadd.f32 0.0, %v2451
  %2453 = vmatmul.bf16.gmra.mxu0 %v2428
  %v2454 = vpop.f32.mrf.mxu0
  %v2455 = vadd.f32 0.0, %v2454
  %v2456 = vpop.f32.mrf.mxu0
  %v2457 = vadd.f32 0.0, %v2456
  %2458 = vdwg.mxu0
  %v2459 = vmax.f32 %v2440, 0.0
  %v2460 = vmax.f32 %v2442, 0.0
  %v2461 = vmax.f32 %v2445, 0.0
  %v2462 = vmax.f32 %v2447, 0.0
  %v2463 = vmax.f32 %v2450, 0.0
  %v2464 = vmax.f32 %v2452, 0.0
  %v2465 = vmax.f32 %v2455, 0.0
  %v2466 = vmax.f32 %v2457, 0.0
  %v2467 = vld [vmem:[%s16] sm:$0xf]
  %v2468 = vld [vmem:[%s16 + $0x4] sm:$0xf]
  %v2469 = vld [vmem:[%s16 + $0x8] sm:$0xf]
  %v2470 = vld [vmem:[%s16 + $0xc] sm:$0xf]
  %v2471 = vld [vmem:[%s16 + $0x10] sm:$0xf]
  %v2472 = vld [vmem:[%s16 + $0x14] sm:$0xf]
  %v2473 = vld [vmem:[%s16 + $0x18] sm:$0xf]
  %v2474 = vld [vmem:[%s16 + $0x1c] sm:$0xf]
  %v2475 = vpack.c.bf16 %v2460, %v2459
  %v2476 = vpack.c.bf16 %v2462, %v2461
  %v2477 = vpack.c.bf16 %v2464, %v2463
  %v2478 = vpack.c.bf16 %v2466, %v2465
  %v2487 = vunpack.c.l.b16 %v2467
  %v2488 = vunpack.c.l.b16 %v2468
  %v2489 = vunpack.c.l.b16 %v2469
  %v2490 = vunpack.c.l.b16 %v2470
  %v2491 = vunpack.c.l.b16 %v2471
  %v2492 = vunpack.c.l.b16 %v2472
  %v2493 = vunpack.c.l.b16 %v2473
  %v2494 = vunpack.c.l.b16 %v2474
  %v2495 = vpack.c.b16 %v2488, %v2487
  %v2496 = vpack.c.b16 %v2490, %v2489
  %v2497 = vpack.c.b16 %v2492, %v2491
  %v2498 = vpack.c.b16 %v2494, %v2493
  %v2504 = vsel %vm259, %v2475, 0
  %v2507 = vsel %vm259, %v2476, 0
  %v2510 = vsel %vm259, %v2477, 0
  %v2513 = vsel %vm259, %v2478, 0
  %2515 = vmatpush.bf16.msra.mxu0 0
  %2516 = vmatpush.bf16.msra.mxu0 0
  %2517 = vmatpush.bf16.msra.mxu0 0
  %2518 = vmatpush.bf16.msra.mxu0 0
  %2519 = vmatpush.bf16.msra.mxu0 %v2498
  %2520 = vmatpush.bf16.msra.mxu0 %v2497
  %2521 = vmatpush.bf16.msra.mxu0 %v2496
  %2522 = vmatpush.bf16.msra.mxu0 %v2495
  %2523 = vmatmul.bf16.gmra.mxu0 %v2504
  %v2524 = vpop.f32.mrf.mxu0
  %v2525 = vadd.f32 0.0, %v2524
  %v2526 = vpop.f32.mrf.mxu0
  %v2527 = vadd.f32 0.0, %v2526
  %2528 = vmatmul.bf16.gmra.mxu0 %v2507
  %v2529 = vpop.f32.mrf.mxu0
  %v2530 = vadd.f32 0.0, %v2529
  %v2531 = vpop.f32.mrf.mxu0
  %v2532 = vadd.f32 0.0, %v2531
  %2533 = vmatmul.bf16.gmra.mxu0 %v2510
  %v2534 = vpop.f32.mrf.mxu0
  %v2535 = vadd.f32 0.0, %v2534
  %v2536 = vpop.f32.mrf.mxu0
  %v2537 = vadd.f32 0.0, %v2536
  %2538 = vmatmul.bf16.gmra.mxu0 %v2513
  %v2539 = vpop.f32.mrf.mxu0
  %v2540 = vadd.f32 0.0, %v2539
  %v2541 = vpop.f32.mrf.mxu0
  %v2542 = vadd.f32 0.0, %v2541
  %2543 = vdwg.mxu0
  %v2544 = vadd.f32 %v2390, %v2525
  %v2545 = vadd.f32 %v2391, %v2527
  %v2546 = vadd.f32 %v2392, %v2530
  %v2547 = vadd.f32 %v2393, %v2532
  %v2548 = vadd.f32 %v2394, %v2535
  %v2549 = vadd.f32 %v2395, %v2537
  %v2550 = vadd.f32 %v2396, %v2540
  %v2551 = vadd.f32 %v2397, %v2542
  %v2552 = vsel %vm335, %v2544, 0.0
  %2553 = vadd.xlane.f32.xlu0 %v2552
  %v2554 = vpop.xlane.xlu0 %2553
  %v2555 = vsel %vm335, %v2545, 0.0
  %2556 = vadd.xlane.f32.xlu0 %v2555
  %v2557 = vpop.xlane.xlu0 %2556
  %v2558 = vsel %vm335, %v2546, 0.0
  %2559 = vadd.xlane.f32.xlu0 %v2558
  %v2560 = vpop.xlane.xlu0 %2559
  %v2561 = vsel %vm335, %v2547, 0.0
  %2562 = vadd.xlane.f32.xlu0 %v2561
  %v2563 = vpop.xlane.xlu0 %2562
  %v2564 = vsel %vm335, %v2548, 0.0
  %2565 = vadd.xlane.f32.xlu0 %v2564
  %v2566 = vpop.xlane.xlu0 %2565
  %v2567 = vsel %vm335, %v2549, 0.0
  %2568 = vadd.xlane.f32.xlu0 %v2567
  %v2569 = vpop.xlane.xlu0 %2568
  %v2570 = vsel %vm335, %v2550, 0.0
  %2571 = vadd.xlane.f32.xlu0 %v2570
  %v2572 = vpop.xlane.xlu0 %2571
  %v2573 = vsel %vm335, %v2551, 0.0
  %2574 = vadd.xlane.f32.xlu0 %v2573
  %v2575 = vpop.xlane.xlu0 %2574
  %v2576 = vmul.f32 %v2554, %v587
  %v2577 = vmul.f32 %v2557, %v587
  %v2578 = vmul.f32 %v2560, %v587
  %v2579 = vmul.f32 %v2563, %v587
  %v2580 = vmul.f32 %v2566, %v587
  %v2581 = vmul.f32 %v2569, %v587
  %v2582 = vmul.f32 %v2572, %v587
  %v2583 = vmul.f32 %v2575, %v587
  %v2584 = vsub.f32 %v2544, %v2576
  %v2585 = vsub.f32 %v2545, %v2577
  %v2586 = vsub.f32 %v2546, %v2578
  %v2587 = vsub.f32 %v2547, %v2579
  %v2588 = vsub.f32 %v2548, %v2580
  %v2589 = vsub.f32 %v2549, %v2581
  %v2590 = vsub.f32 %v2550, %v2582
  %v2591 = vsub.f32 %v2551, %v2583
  %v2592 = vmul.f32 %v2584, %v2584
  %v2593 = vmul.f32 %v2585, %v2585
  %v2594 = vmul.f32 %v2586, %v2586
  %v2595 = vmul.f32 %v2587, %v2587
  %v2596 = vmul.f32 %v2588, %v2588
  %v2597 = vmul.f32 %v2589, %v2589
  %v2598 = vmul.f32 %v2590, %v2590
  %v2599 = vmul.f32 %v2591, %v2591
  %v2600 = vsel %vm335, %v2592, 0.0
  %2601 = vadd.xlane.f32.xlu0 %v2600
  %v2602 = vpop.xlane.xlu0 %2601
  %v2603 = vsel %vm335, %v2593, 0.0
  %2604 = vadd.xlane.f32.xlu0 %v2603
  %v2605 = vpop.xlane.xlu0 %2604
  %v2606 = vsel %vm335, %v2594, 0.0
  %2607 = vadd.xlane.f32.xlu0 %v2606
  %v2608 = vpop.xlane.xlu0 %2607
  %v2609 = vsel %vm335, %v2595, 0.0
  %2610 = vadd.xlane.f32.xlu0 %v2609
  %v2611 = vpop.xlane.xlu0 %2610
  %v2612 = vsel %vm335, %v2596, 0.0
  %2613 = vadd.xlane.f32.xlu0 %v2612
  %v2614 = vpop.xlane.xlu0 %2613
  %v2615 = vsel %vm335, %v2597, 0.0
  %2616 = vadd.xlane.f32.xlu0 %v2615
  %v2617 = vpop.xlane.xlu0 %2616
  %v2618 = vsel %vm335, %v2598, 0.0
  %2619 = vadd.xlane.f32.xlu0 %v2618
  %v2620 = vpop.xlane.xlu0 %2619
  %v2621 = vsel %vm335, %v2599, 0.0
  %2622 = vadd.xlane.f32.xlu0 %v2621
  %v2623 = vpop.xlane.xlu0 %2622
  %v2624 = vmul.f32 %v2602, %v587
  %v2625 = vmul.f32 %v2605, %v587
  %v2626 = vmul.f32 %v2608, %v587
  %v2627 = vmul.f32 %v2611, %v587
  %v2628 = vmul.f32 %v2614, %v587
  %v2629 = vmul.f32 %v2617, %v587
  %v2630 = vmul.f32 %v2620, %v587
  %v2631 = vmul.f32 %v2623, %v587
  %v2632 = vadd.f32 %v2624, 1e-05
  %v2633 = vadd.f32 %v2625, 1e-05
  %v2634 = vadd.f32 %v2626, 1e-05
  %v2635 = vadd.f32 %v2627, 1e-05
  %v2636 = vadd.f32 %v2628, 1e-05
  %v2637 = vadd.f32 %v2629, 1e-05
  %v2638 = vadd.f32 %v2630, 1e-05
  %v2639 = vadd.f32 %v2631, 1e-05
  %v2640 = vrsqrt.pop %v2632
  %v2641 = vmul.f32 %v2640, %v2632
  %v2642 = vmul.f32 %v2641, %v2640
  %v2643 = vmul.f32 0.5, %v2642
  %v2644 = vsub.f32 1.5, %v2643
  %v2645 = vmul.f32 %v2640, %v2644
  %vm2646 = vweird.f32 %v2632
  %vm2647 = vweird.f32 %v2640
  %vm2648 = vmor %vm2646, %vm2647
  %v2649 = vsel %vm2648, %v2640, %v2645
  %v2650 = vrsqrt.pop %v2633
  %v2651 = vmul.f32 %v2650, %v2633
  %v2652 = vmul.f32 %v2651, %v2650
  %v2653 = vmul.f32 0.5, %v2652
  %v2654 = vsub.f32 1.5, %v2653
  %v2655 = vmul.f32 %v2650, %v2654
  %vm2656 = vweird.f32 %v2633
  %vm2657 = vweird.f32 %v2650
  %vm2658 = vmor %vm2656, %vm2657
  %v2659 = vsel %vm2658, %v2650, %v2655
  %v2660 = vrsqrt.pop %v2634
  %v2661 = vmul.f32 %v2660, %v2634
  %v2662 = vmul.f32 %v2661, %v2660
  %v2663 = vmul.f32 0.5, %v2662
  %v2664 = vsub.f32 1.5, %v2663
  %v2665 = vmul.f32 %v2660, %v2664
  %vm2666 = vweird.f32 %v2634
  %vm2667 = vweird.f32 %v2660
  %vm2668 = vmor %vm2666, %vm2667
  %v2669 = vsel %vm2668, %v2660, %v2665
  %v2670 = vrsqrt.pop %v2635
  %v2671 = vmul.f32 %v2670, %v2635
  %v2672 = vmul.f32 %v2671, %v2670
  %v2673 = vmul.f32 0.5, %v2672
  %v2674 = vsub.f32 1.5, %v2673
  %v2675 = vmul.f32 %v2670, %v2674
  %vm2676 = vweird.f32 %v2635
  %vm2677 = vweird.f32 %v2670
  %vm2678 = vmor %vm2676, %vm2677
  %v2679 = vsel %vm2678, %v2670, %v2675
  %v2680 = vrsqrt.pop %v2636
  %v2681 = vmul.f32 %v2680, %v2636
  %v2682 = vmul.f32 %v2681, %v2680
  %v2683 = vmul.f32 0.5, %v2682
  %v2684 = vsub.f32 1.5, %v2683
  %v2685 = vmul.f32 %v2680, %v2684
  %vm2686 = vweird.f32 %v2636
  %vm2687 = vweird.f32 %v2680
  %vm2688 = vmor %vm2686, %vm2687
  %v2689 = vsel %vm2688, %v2680, %v2685
  %v2690 = vrsqrt.pop %v2637
  %v2691 = vmul.f32 %v2690, %v2637
  %v2692 = vmul.f32 %v2691, %v2690
  %v2693 = vmul.f32 0.5, %v2692
  %v2694 = vsub.f32 1.5, %v2693
  %v2695 = vmul.f32 %v2690, %v2694
  %vm2696 = vweird.f32 %v2637
  %vm2697 = vweird.f32 %v2690
  %vm2698 = vmor %vm2696, %vm2697
  %v2699 = vsel %vm2698, %v2690, %v2695
  %v2700 = vrsqrt.pop %v2638
  %v2701 = vmul.f32 %v2700, %v2638
  %v2702 = vmul.f32 %v2701, %v2700
  %v2703 = vmul.f32 0.5, %v2702
  %v2704 = vsub.f32 1.5, %v2703
  %v2705 = vmul.f32 %v2700, %v2704
  %vm2706 = vweird.f32 %v2638
  %vm2707 = vweird.f32 %v2700
  %vm2708 = vmor %vm2706, %vm2707
  %v2709 = vsel %vm2708, %v2700, %v2705
  %v2710 = vrsqrt.pop %v2639
  %v2711 = vmul.f32 %v2710, %v2639
  %v2712 = vmul.f32 %v2711, %v2710
  %v2713 = vmul.f32 0.5, %v2712
  %v2714 = vsub.f32 1.5, %v2713
  %v2715 = vmul.f32 %v2710, %v2714
  %vm2716 = vweird.f32 %v2639
  %vm2717 = vweird.f32 %v2710
  %vm2718 = vmor %vm2716, %vm2717
  %v2719 = vsel %vm2718, %v2710, %v2715
  %v2720 = vmul.f32 %v2584, %v2649
  %v2721 = vmul.f32 %v2585, %v2659
  %v2722 = vmul.f32 %v2586, %v2669
  %v2723 = vmul.f32 %v2587, %v2679
  %v2724 = vmul.f32 %v2588, %v2689
  %v2725 = vmul.f32 %v2589, %v2699
  %v2726 = vmul.f32 %v2590, %v2709
  %v2727 = vmul.f32 %v2591, %v2719
  %v2728 = vld [vmem:[%s17] sm:$0xf]
  %v2729 = vld [vmem:[%s17 + $0x4] sm:$0xf]
  %v2730 = vld [vmem:[%s17 + $0x8] sm:$0xf]
  %v2731 = vld [vmem:[%s17 + $0xc] sm:$0xf]
  %v2732 = vpack.c.bf16 %v2721, %v2720
  %v2733 = vpack.c.bf16 %v2723, %v2722
  %v2734 = vpack.c.bf16 %v2725, %v2724
  %v2735 = vpack.c.bf16 %v2727, %v2726
  %v2740 = vunpack.c.l.b16 %v2728
  %v2741 = vunpack.c.l.b16 %v2729
  %v2742 = vunpack.c.l.b16 %v2730
  %v2743 = vunpack.c.l.b16 %v2731
  %v2744 = vpack.c.b16 %v2741, %v2740
  %v2745 = vpack.c.b16 %v2743, %v2742
  %v2749 = vsel %vm335, %v2732, 0
  %v2752 = vsel %vm335, %v2733, 0
  %v2755 = vsel %vm335, %v2734, 0
  %v2758 = vsel %vm335, %v2735, 0
  %2760 = vmatpush.bf16.msra.mxu0 0
  %2761 = vmatpush.bf16.msra.mxu0 0
  %2762 = vmatpush.bf16.msra.mxu0 0
  %2763 = vmatpush.bf16.msra.mxu0 0
  %2764 = vmatpush.bf16.msra.mxu0 0
  %2765 = vmatpush.bf16.msra.mxu0 0
  %2766 = vmatpush.bf16.msra.mxu0 %v2745
  %2767 = vmatpush.bf16.msra.mxu0 %v2744
  %2768 = vmatmul.bf16.gmra.mxu0 %v2749
  %v2769 = vpop.f32.mrf.mxu0
  %v2770 = vadd.f32 0.0, %v2769
  %v2771 = vpop.f32.mrf.mxu0
  %v2772 = vadd.f32 0.0, %v2771
  %2773 = vmatmul.bf16.gmra.mxu0 %v2752
  %v2774 = vpop.f32.mrf.mxu0
  %v2775 = vadd.f32 0.0, %v2774
  %v2776 = vpop.f32.mrf.mxu0
  %v2777 = vadd.f32 0.0, %v2776
  %2778 = vmatmul.bf16.gmra.mxu0 %v2755
  %v2779 = vpop.f32.mrf.mxu0
  %v2780 = vadd.f32 0.0, %v2779
  %v2781 = vpop.f32.mrf.mxu0
  %v2782 = vadd.f32 0.0, %v2781
  %2783 = vmatmul.bf16.gmra.mxu0 %v2758
  %v2784 = vpop.f32.mrf.mxu0
  %v2785 = vadd.f32 0.0, %v2784
  %v2786 = vpop.f32.mrf.mxu0
  %v2787 = vadd.f32 0.0, %v2786
  %2788 = vdwg.mxu0
  %v2789 = vsel %vm259, %v2770, -inf
  %2790 = vmax.xlane.f32.xlu0 %v2789
  %v2791 = vpop.xlane.xlu0 %2790
  %v2792 = vsel %vm259, %v2772, -inf
  %2793 = vmax.xlane.f32.xlu0 %v2792
  %v2794 = vpop.xlane.xlu0 %2793
  %v2795 = vsel %vm259, %v2775, -inf
  %2796 = vmax.xlane.f32.xlu0 %v2795
  %v2797 = vpop.xlane.xlu0 %2796
  %v2798 = vsel %vm259, %v2777, -inf
  %2799 = vmax.xlane.f32.xlu0 %v2798
  %v2800 = vpop.xlane.xlu0 %2799
  %v2801 = vsel %vm259, %v2780, -inf
  %2802 = vmax.xlane.f32.xlu0 %v2801
  %v2803 = vpop.xlane.xlu0 %2802
  %v2804 = vsel %vm259, %v2782, -inf
  %2805 = vmax.xlane.f32.xlu0 %v2804
  %v2806 = vpop.xlane.xlu0 %2805
  %v2807 = vsel %vm259, %v2785, -inf
  %2808 = vmax.xlane.f32.xlu0 %v2807
  %v2809 = vpop.xlane.xlu0 %2808
  %v2810 = vsel %vm259, %v2787, -inf
  %2811 = vmax.xlane.f32.xlu0 %v2810
  %v2812 = vpop.xlane.xlu0 %2811
  %v2813 = vsub.f32 %v2770, %v2791
  %v2814 = vsub.f32 %v2772, %v2794
  %v2815 = vsub.f32 %v2775, %v2797
  %v2816 = vsub.f32 %v2777, %v2800
  %v2817 = vsub.f32 %v2780, %v2803
  %v2818 = vsub.f32 %v2782, %v2806
  %v2819 = vsub.f32 %v2785, %v2809
  %v2820 = vsub.f32 %v2787, %v2812
  %v2821 = vmul.f32 %v2813, 1.442695
  %v2822 = vpow.pop %v2821
  %v2823 = vmul.f32 %v2814, 1.442695
  %v2824 = vpow.pop %v2823
  %v2825 = vmul.f32 %v2815, 1.442695
  %v2826 = vpow.pop %v2825
  %v2827 = vmul.f32 %v2816, 1.442695
  %v2828 = vpow.pop %v2827
  %v2829 = vmul.f32 %v2817, 1.442695
  %v2830 = vpow.pop %v2829
  %v2831 = vmul.f32 %v2818, 1.442695
  %v2832 = vpow.pop %v2831
  %v2833 = vmul.f32 %v2819, 1.442695
  %v2834 = vpow.pop %v2833
  %v2835 = vmul.f32 %v2820, 1.442695
  %v2836 = vpow.pop %v2835
  %v2837 = vsel %vm259, %v2822, 0.0
  %2838 = vadd.xlane.f32.xlu0 %v2837
  %v2839 = vpop.xlane.xlu0 %2838
  %v2840 = vsel %vm259, %v2824, 0.0
  %2841 = vadd.xlane.f32.xlu0 %v2840
  %v2842 = vpop.xlane.xlu0 %2841
  %v2843 = vsel %vm259, %v2826, 0.0
  %2844 = vadd.xlane.f32.xlu0 %v2843
  %v2845 = vpop.xlane.xlu0 %2844
  %v2846 = vsel %vm259, %v2828, 0.0
  %2847 = vadd.xlane.f32.xlu0 %v2846
  %v2848 = vpop.xlane.xlu0 %2847
  %v2849 = vsel %vm259, %v2830, 0.0
  %2850 = vadd.xlane.f32.xlu0 %v2849
  %v2851 = vpop.xlane.xlu0 %2850
  %v2852 = vsel %vm259, %v2832, 0.0
  %2853 = vadd.xlane.f32.xlu0 %v2852
  %v2854 = vpop.xlane.xlu0 %2853
  %v2855 = vsel %vm259, %v2834, 0.0
  %2856 = vadd.xlane.f32.xlu0 %v2855
  %v2857 = vpop.xlane.xlu0 %2856
  %v2858 = vsel %vm259, %v2836, 0.0
  %2859 = vadd.xlane.f32.xlu0 %v2858
  %v2860 = vpop.xlane.xlu0 %2859
  %v2861 = vlog2.pop %v2839
  %v2862 = vmul.f32 %v2861, 0.6931472
  %v2863 = vlog2.pop %v2842
  %v2864 = vmul.f32 %v2863, 0.6931472
  %v2865 = vlog2.pop %v2845
  %v2866 = vmul.f32 %v2865, 0.6931472
  %v2867 = vlog2.pop %v2848
  %v2868 = vmul.f32 %v2867, 0.6931472
  %v2869 = vlog2.pop %v2851
  %v2870 = vmul.f32 %v2869, 0.6931472
  %v2871 = vlog2.pop %v2854
  %v2872 = vmul.f32 %v2871, 0.6931472
  %v2873 = vlog2.pop %v2857
  %v2874 = vmul.f32 %v2873, 0.6931472
  %v2875 = vlog2.pop %v2860
  %v2876 = vmul.f32 %v2875, 0.6931472
  %v2877 = vadd.f32 %v2862, %v2791
  %v2878 = vadd.f32 %v2864, %v2794
  %v2879 = vadd.f32 %v2866, %v2797
  %v2880 = vadd.f32 %v2868, %v2800
  %v2881 = vadd.f32 %v2870, %v2803
  %v2882 = vadd.f32 %v2872, %v2806
  %v2883 = vadd.f32 %v2874, %v2809
  %v2884 = vadd.f32 %v2876, %v2812
  %v2885 = vsub.f32 %v2770, %v2877
  %v2886 = vsub.f32 %v2772, %v2878
  %v2887 = vsub.f32 %v2775, %v2879
  %v2888 = vsub.f32 %v2777, %v2880
  %v2889 = vsub.f32 %v2780, %v2881
  %v2890 = vsub.f32 %v2782, %v2882
  %v2891 = vsub.f32 %v2785, %v2883
  %v2892 = vsub.f32 %v2787, %v2884
  %v2893 = vperm.slane %v862, 0
  %v2894 = vlaneseq
  %v2895 = vshrl.u32 %v2894, 7
  %2897 = vset.pattern.permute.xlu0 %v2895
  %2898 = vperm.xlu0 %2897, %v2893
  %v2899 = vpop.permute.xlu0 %2898
  %v2900 = vperm.slane %v862, 1
  %v2901 = vlaneseq
  %v2902 = vshrl.u32 %v2901, 7
  %2904 = vset.pattern.permute.xlu0 %v2902
  %2905 = vperm.xlu0 %2904, %v2900
  %v2906 = vpop.permute.xlu0 %2905
  %v2907 = vperm.slane %v862, 2
  %v2908 = vlaneseq
  %v2909 = vshrl.u32 %v2908, 7
  %2911 = vset.pattern.permute.xlu0 %v2909
  %2912 = vperm.xlu0 %2911, %v2907
  %v2913 = vpop.permute.xlu0 %2912
  %v2914 = vperm.slane %v862, 3
  %v2915 = vlaneseq
  %v2916 = vshrl.u32 %v2915, 7
  %2918 = vset.pattern.permute.xlu0 %v2916
  %2919 = vperm.xlu0 %2918, %v2914
  %v2920 = vpop.permute.xlu0 %2919
  %v2921 = vperm.slane %v862, 4
  %v2922 = vlaneseq
  %v2923 = vshrl.u32 %v2922, 7
  %2925 = vset.pattern.permute.xlu0 %v2923
  %2926 = vperm.xlu0 %2925, %v2921
  %v2927 = vpop.permute.xlu0 %2926
  %v2928 = vperm.slane %v862, 5
  %v2929 = vlaneseq
  %v2930 = vshrl.u32 %v2929, 7
  %2932 = vset.pattern.permute.xlu0 %v2930
  %2933 = vperm.xlu0 %2932, %v2928
  %v2934 = vpop.permute.xlu0 %2933
  %v2935 = vperm.slane %v862, 6
  %v2936 = vlaneseq
  %v2937 = vshrl.u32 %v2936, 7
  %2939 = vset.pattern.permute.xlu0 %v2937
  %2940 = vperm.xlu0 %2939, %v2935
  %v2941 = vpop.permute.xlu0 %2940
  %v2942 = vperm.slane %v862, 7
  %v2943 = vlaneseq
  %v2944 = vshrl.u32 %v2943, 7
  %2946 = vset.pattern.permute.xlu0 %v2944
  %2947 = vperm.xlu0 %2946, %v2942
  %v2948 = vpop.permute.xlu0 %2947
  %vm2949 = vcmp.eq.s32.totalorder %v2899, %v97
  %vm2950 = vcmp.eq.s32.totalorder %v2906, %v97
  %vm2951 = vcmp.eq.s32.totalorder %v2913, %v97
  %vm2952 = vcmp.eq.s32.totalorder %v2920, %v97
  %vm2953 = vcmp.eq.s32.totalorder %v2927, %v97
  %vm2954 = vcmp.eq.s32.totalorder %v2934, %v97
  %vm2955 = vcmp.eq.s32.totalorder %v2941, %v97
  %vm2956 = vcmp.eq.s32.totalorder %v2948, %v97
  %v2957 = vsel %vm2949, %v2885, 0.0
  %v2958 = vsel %vm2950, %v2886, 0.0
  %v2959 = vsel %vm2951, %v2887, 0.0
  %v2960 = vsel %vm2952, %v2888, 0.0
  %v2961 = vsel %vm2953, %v2889, 0.0
  %v2962 = vsel %vm2954, %v2890, 0.0
  %v2963 = vsel %vm2955, %v2891, 0.0
  %v2964 = vsel %vm2956, %v2892, 0.0
  %v2965 = vsel %vm259, %v2957, 0.0
  %2966 = vadd.xlane.f32.xlu0 %v2965
  %v2967 = vpop.xlane.xlu0 %2966
  %v2968 = vsel %vm259, %v2958, 0.0
  %2969 = vadd.xlane.f32.xlu0 %v2968
  %v2970 = vpop.xlane.xlu0 %2969
  %v2971 = vsel %vm259, %v2959, 0.0
  %2972 = vadd.xlane.f32.xlu0 %v2971
  %v2973 = vpop.xlane.xlu0 %2972
  %v2974 = vsel %vm259, %v2960, 0.0
  %2975 = vadd.xlane.f32.xlu0 %v2974
  %v2976 = vpop.xlane.xlu0 %2975
  %v2977 = vsel %vm259, %v2961, 0.0
  %2978 = vadd.xlane.f32.xlu0 %v2977
  %v2979 = vpop.xlane.xlu0 %2978
  %v2980 = vsel %vm259, %v2962, 0.0
  %2981 = vadd.xlane.f32.xlu0 %v2980
  %v2982 = vpop.xlane.xlu0 %2981
  %v2983 = vsel %vm259, %v2963, 0.0
  %2984 = vadd.xlane.f32.xlu0 %v2983
  %v2985 = vpop.xlane.xlu0 %2984
  %v2986 = vsel %vm259, %v2964, 0.0
  %2987 = vadd.xlane.f32.xlu0 %v2986
  %v2988 = vpop.xlane.xlu0 %2987
  %v2989 = vsub.f32 0.0, %v2967
  %v2990 = vsub.f32 0.0, %v2970
  %v2991 = vsub.f32 0.0, %v2973
  %v2992 = vsub.f32 0.0, %v2976
  %v2993 = vsub.f32 0.0, %v2979
  %v2994 = vsub.f32 0.0, %v2982
  %v2995 = vsub.f32 0.0, %v2985
  %v2996 = vsub.f32 0.0, %v2988
  %v3005 = vperm.slane %v2989, %v97
  %v3006 = vperm.slane %v2990, %v97
  %v3007 = vperm.slane %v2991, %v97
  %v3008 = vperm.slane %v2992, %v97
  %v3009 = vperm.slane %v2993, %v97
  %v3010 = vperm.slane %v2994, %v97
  %v3011 = vperm.slane %v2995, %v97
  %v3012 = vperm.slane %v2996, %v97
  %vm3013 = vcmask 1041409
  %v3014 = vsel %vm3013, %v3006, %v3005
  %v3015 = vsel %vm3013, %v3008, %v3007
  %v3016 = vsel %vm3013, %v3010, %v3009
  %v3017 = vsel %vm3013, %v3012, %v3011
  %vm3022 = vcmask 58368
  %v3023 = vsel %vm3022, %v3014, 0.0
  %3024 = vadd.xlane.f32.xlu0 %v3023
  %v3025 = vpop.xlane.xlu0 %3024
  %v3026 = vsel %vm3022, %v3015, 0.0
  %3027 = vadd.xlane.f32.xlu0 %v3026
  %v3028 = vpop.xlane.xlu0 %3027
  %v3029 = vsel %vm3022, %v3016, 0.0
  %3030 = vadd.xlane.f32.xlu0 %v3029
  %v3031 = vpop.xlane.xlu0 %3030
  %v3032 = vsel %vm3022, %v3017, 0.0
  %3033 = vadd.xlane.f32.xlu0 %v3032
  %v3034 = vpop.xlane.xlu0 %3033
  %v3035 = vrcp.pop 8.0
  %v3036 = vmul.f32 8.0, %v3035
  %v3037 = vsub.f32 1.0, %v3036
  %v3038 = vmul.f32 %v3035, %v3037
  %v3039 = vadd.f32 %v3035, %v3038
  %vm3040 = vweird.f32 %v3035
  %v3041 = vsel %vm3040, %v3035, %v3039
  %v3042 = vmul.f32 %v3025, %v3041
  %v3043 = vmul.f32 %v3028, %v3041
  %v3044 = vmul.f32 %v3031, %v3041
  %v3045 = vmul.f32 %v3034, %v3041
  %v3050 = vperm.slane %v3042, %v97
  %v3051 = vperm.slane %v3043, %v97
  %v3052 = vperm.slane %v3044, %v97
  %v3053 = vperm.slane %v3045, %v97
  %v3054 = vsel %vm3013, %v3051, %v3050
  %vm3055 = vcmask 1042434
  %v3056 = vsel %vm3055, %v3052, %v3054
  %vm3057 = vcmask 1043459
  %v3058 = vsel %vm3057, %v3053, %v3056
  %vm3060 = vcmask 11264
  %v3061 = vsel %vm3060, %v3058, 0.0
  %3062 = vadd.xlane.f32.xlu0 %v3061
  %v3063 = vpop.xlane.xlu0 %3062
  %v3064 = vrcp.pop 2.0
  %v3065 = vmul.f32 2.0, %v3064
  %v3066 = vsub.f32 1.0, %v3065
  %v3067 = vmul.f32 %v3064, %v3066
  %v3068 = vadd.f32 %v3064, %v3067
  %vm3069 = vweird.f32 %v3064
  %v3070 = vsel %vm3069, %v3064, %v3068
  %v3071 = vmul.f32 %v3063, %v3070
  %v3073 = vperm.slane %v3071, %v97
  %vm3075 = vcmask 24576
  %3076 = vst.msk [vmem:[%s18] sm:$0x1] %vm3075, %v3073
  // Predicated region
  $region74: #{mc_model_forward.1} parent=0 // pred_check
    _
  $region75: #{mc_model_forward.1} parent=0 // pred_check_branch
    %3078 = sbr.rel (0) target = $region77
  $region76: #{mc_model_forward.1} parent=0 // pred_region
    _
  $region77: #{mc_model_forward.1} parent=0 // pred_fallthru
    _
  // Predicated region
  $region78: #{mc_model_forward.1} parent=0 // pred_check
    _
  $region79: #{mc_model_forward.1} parent=0 // pred_check_branch
    %3080 = sbr.rel (0) target = $region81
  $region80: #{mc_model_forward.1} parent=0 // pred_region
    _
  $region81: #{mc_model_forward.1} parent=0 // pred_fallthru
    _

</llo_original>
